<compile_context>
chip_gen: v5e
topology: v5e:2x2
jax: 0.10.0
libtpu: 0.0.40
codegen_flags: <defaults>
</compile_context>

<pallas_src>
import functools

import jax
import jax.numpy as jnp
from jax.experimental import pallas as pl
from jax.experimental.pallas import tpu as pltpu

_LN_EPS = 1e-5


def _layernorm(y, g, b, eps):
    mu = jnp.mean(y, axis=-1, keepdims=True)
    var = jnp.mean((y - mu) ** 2, axis=-1, keepdims=True)
    return (y - mu) * jax.lax.rsqrt(var + eps) * g + b


# ---------------------------------------------------------------------------
# Single fused ensemble kernel
# ---------------------------------------------------------------------------
def _ensemble_kernel(*refs, num_members, num_heads, n_res, eps):
    mean_ref, std_ref = refs[-2], refs[-1]
    in_refs = refs[:-2]
    (x_ref, xt_ref, hm_ref, alg_ref, alb_ref,
     cc_ref, u_ref, bo_ref, ag_ref, ab_ref,
     w0_ref, b0_ref, g0_ref, be0_ref) = in_refs[:14]
    rest = in_refs[14:]
    res_refs = [rest[4 * r:4 * r + 4] for r in range(n_res)]
    wf_ref, bf_ref = rest[4 * n_res], rest[4 * n_res + 1]

    H = num_heads
    B, N = x_ref.shape
    x = x_ref[...]                       # (B, N)
    xt = xt_ref[...]                     # (N, B)
    inv_h = 1.0 / H

    preds = []
    for m in range(num_members):         # static unroll over ensemble members
        cc = cc_ref[m]                   # (H*N, 1)  per-head scaled constants
        u_m = u_ref[m]                   # (H, N)    fused V/output rows
        bo = bo_ref[m]                   # (1, N)
        ag = ag_ref[m]                   # (1, N)  add-LN gamma
        ab = ab_ref[m]                   # (1, N)  add-LN beta

        rows = []
        for b in range(B):               # static unroll over batch rows
            xr = x[b:b + 1, :]           # (1, N)
            xc = xt[:, b:b + 1]          # (N, 1)

            # heads stacked along sublanes: dots[h*N+i, j] = c_h * x_i * x_j
            outer = xc * xr                                     # (N, N)
            dots = jnp.concatenate([outer] * H, axis=0) * cc    # (H*N, N)
            mx = jnp.max(dots, axis=-1, keepdims=True)
            e = jnp.exp(dots - mx)
            s = jnp.sum(e, axis=-1, keepdims=True)
            attn = e * pl.reciprocal(s, approx=True)            # softmax per (h, i)

            heads = [attn[h * N:(h + 1) * N, :] for h in range(H)]

            # learned head mixing: mixed_g = sum_h attn_h * W[h, g]
            mixed = []
            for g in range(H):
                mg = heads[0] * hm_ref[m, g]
                for h in range(1, H):
                    mg = mg + heads[h] * hm_ref[m, h * H + g]
                mixed.append(mg)

            # LayerNorm over the head axis (biased variance)
            mu = mixed[0]
            for g in range(1, H):
                mu = mu + mixed[g]
            mu = mu * inv_h
            var = (mixed[0] - mu) ** 2
            for g in range(1, H):
                var = var + (mixed[g] - mu) ** 2
            var = var * inv_h
            inv = jax.lax.rsqrt(var + eps)

            # attention @ V -> output Linear -> token-sum, collapsed via the
            # rank-1 structure:  red = sum_h (1^T a_h x) * u_h + N * bout
            red = bo * float(N)
            for g in range(H):
                a_g = (mixed[g] - mu) * inv * alg_ref[m, g] + alb_ref[m, g]
                s_g = jnp.sum(a_g * xr, keepdims=True)          # (1, 1) scalar
                red = red + s_g * u_m[g:g + 1, :]
            normed = _layernorm(red, ag, ab, eps)
            rows.append(xr + normed)                            # residual add

        h_cur = jnp.concatenate(rows, axis=0)                   # (B, N)

        # MLP head: Linear -> ReLU -> LayerNorm, ResidualLinear blocks, final Linear
        y = jnp.dot(h_cur, w0_ref[m], preferred_element_type=jnp.float32) + b0_ref[m]
        h_cur = _layernorm(jnp.maximum(y, 0.0), g0_ref[m], be0_ref[m], eps)
        for (wr, br, gr, ber) in res_refs:
            y = jnp.dot(h_cur, wr[m], preferred_element_type=jnp.float32) + br[m]
            h_cur = h_cur + _layernorm(jnp.maximum(y, 0.0), gr[m], ber[m], eps)
        preds.append(jnp.dot(h_cur, wf_ref[m], preferred_element_type=jnp.float32)
                     + bf_ref[m])                               # (B, O)

    # ensemble mean / unbiased std (torch.std default, ddof=1) -- fused epilogue
    M = num_members
    mean = preds[0]
    for p in preds[1:]:
        mean = mean + p
    mean = mean * (1.0 / M)
    var = (preds[0] - mean) ** 2
    for p in preds[1:]:
        var = var + (p - mean) ** 2
    var = var * (1.0 / (M - 1))
    mean_ref[...] = mean.astype(mean_ref.dtype)
    std_ref[...] = jnp.sqrt(var).astype(std_ref.dtype)


# ---------------------------------------------------------------------------
# Wrapper: host-side parameter packing + single pallas_call
# ---------------------------------------------------------------------------
def ensemble_forward_pallas(x, members, *, num_heads, head_dim, eps=_LN_EPS):
    B, N = x.shape
    H, D = num_heads, head_dim
    hd = H * D
    M = len(members)
    assert M >= 2, "unbiased std needs at least 2 ensemble members"
    O = members[0]["out_w"].shape[1]
    n_res = len(members[0]["res"])

    def stack(fn):
        return jnp.stack([fn(p) for p in members], axis=0)

    def heads_of(p):
        w = p["wqkv"][0]
        return (w[:hd].reshape(H, D), w[hd:2 * hd].reshape(H, D),
                w[2 * hd:].reshape(H, D))

    # rank-1 QKV rewrite (host precompute):
    #   c_h  = (wq_h . wk_h) / sqrt(D), repeated N times along sublanes
    #   u_h  = wv_h @ Wout[h*D:(h+1)*D, :]
    cc = stack(lambda p: jnp.repeat(
        (heads_of(p)[0] * heads_of(p)[1]).sum(-1) * (D ** -0.5), N)[:, None])
    u = stack(lambda p: jnp.einsum("hd,hdf->hf", heads_of(p)[2],
                                   p["wout"].reshape(H, D, N)))
    hm = stack(lambda p: p["head_mix"].reshape(H * H))          # SMEM scalars
    alg = stack(lambda p: p["attn_ln_gamma"])                   # SMEM (M, H)
    alb = stack(lambda p: p["attn_ln_beta"])                    # SMEM (M, H)
    bo = stack(lambda p: p["bout"].reshape(1, N))
    ag = stack(lambda p: p["add_ln_gamma"].reshape(1, N))
    ab = stack(lambda p: p["add_ln_beta"].reshape(1, N))
    w0 = stack(lambda p: p["lin0_w"])
    b0 = stack(lambda p: p["lin0_bias"].reshape(1, -1))
    g0 = stack(lambda p: p["ln0_gamma"].reshape(1, -1))
    be0 = stack(lambda p: p["ln0_beta"].reshape(1, -1))
    res_stacked = []
    for r in range(n_res):
        res_stacked += [stack(lambda p, r=r: p["res"][r]["w"]),
                        stack(lambda p, r=r: p["res"][r]["bias"].reshape(1, -1)),
                        stack(lambda p, r=r: p["res"][r]["gamma"].reshape(1, -1)),
                        stack(lambda p, r=r: p["res"][r]["beta"].reshape(1, -1))]
    wf = stack(lambda p: p["out_w"])
    bf = stack(lambda p: p["out_bias"].reshape(1, -1))

    inputs = [x, x.T, hm, alg, alb, cc, u, bo, ag, ab,
              w0, b0, g0, be0] + res_stacked + [wf, bf]

    smem = pl.BlockSpec(memory_space=pltpu.MemorySpace.SMEM)
    vmem = pl.BlockSpec(memory_space=pltpu.MemorySpace.VMEM)
    in_specs = [vmem, vmem, smem, smem, smem] + [vmem] * (len(inputs) - 5)

    kernel = functools.partial(_ensemble_kernel, num_members=M, num_heads=H,
                               n_res=n_res, eps=eps)
    mean, std = pl.pallas_call(
        kernel,
        out_shape=(jax.ShapeDtypeStruct((B, O), jnp.float32),
                   jax.ShapeDtypeStruct((B, O), jnp.float32)),
        in_specs=in_specs,
        out_specs=(vmem, vmem),
    )(*inputs)
    return mean, std


# ---------------------------------------------------------------------------
# Pure-JAX reference (mirrors the PyTorch module math) for verification
# ---------------------------------------------------------------------------
def _layernorm_ref(x, gamma, beta, eps=_LN_EPS):
    mu = jnp.mean(x, axis=-1, keepdims=True)
    var = jnp.mean((x - mu) ** 2, axis=-1, keepdims=True)
    return (x - mu) * jax.lax.rsqrt(var + eps) * gamma + beta


def _attention_ref(x, p, num_heads, head_dim):
    b, n = x.shape
    hd = num_heads * head_dim
    xcol = x[..., None]
    qkv = xcol @ p["wqkv"]
    q, k, v = qkv[..., :hd], qkv[..., hd:2 * hd], qkv[..., 2 * hd:]

    def split_heads(t):
        return t.reshape(b, n, num_heads, head_dim).transpose(0, 2, 1, 3)

    q, k, v = split_heads(q), split_heads(k), split_heads(v)
    dots = jnp.einsum("bhid,bhjd->bhij", q, k) * (head_dim ** -0.5)
    attn = jax.nn.softmax(dots, axis=-1)
    mixed = jnp.einsum("bhij,hg->bgij", attn, p["head_mix"])
    t = mixed.transpose(0, 2, 3, 1)
    t = _layernorm_ref(t, p["attn_ln_gamma"], p["attn_ln_beta"])
    mixed = t.transpose(0, 3, 1, 2)
    out = jnp.einsum("bhij,bhjd->bhid", mixed, v)
    out = out.transpose(0, 2, 1, 3).reshape(b, n, hd)
    out = out @ p["wout"] + p["bout"]
    out = out.sum(axis=1)
    out = _layernorm_ref(out, p["add_ln_gamma"], p["add_ln_beta"])
    return x + out


def _member_forward_ref(x, p, num_heads, head_dim):
    h = _attention_ref(x, p, num_heads, head_dim)
    y = jnp.maximum(h @ p["lin0_w"] + p["lin0_bias"], 0.0)
    h = _layernorm_ref(y, p["ln0_gamma"], p["ln0_beta"])
    for blk in p["res"]:
        y = jnp.maximum(h @ blk["w"] + blk["bias"], 0.0)
        y = _layernorm_ref(y, blk["gamma"], blk["beta"])
        h = h + y
    return h @ p["out_w"] + p["out_bias"]


def ensemble_forward_ref(x, members, *, num_heads, head_dim):
    outs = [_member_forward_ref(x, p, num_heads, head_dim) for p in members]
    s = jnp.stack(outs, axis=0)
    return jnp.mean(s, axis=0), jnp.std(s, axis=0, ddof=1)


# ---------------------------------------------------------------------------
# Parameter initialisation (random, torch-like shapes)
# ---------------------------------------------------------------------------
def init_member_params(key, in_features, out_features, hidden, num_heads, head_dim):
    hd = num_heads * head_dim
    keys = iter(jax.random.split(key, 8 + 2 * len(hidden)))

    def w(k, shape, fan_in):
        return jax.random.normal(k, shape, jnp.float32) / (fan_in ** 0.5)

    p = {
        "wqkv": 0.5 * jax.random.normal(next(keys), (1, 3 * hd), jnp.float32),
        "head_mix": jax.random.normal(next(keys), (num_heads, num_heads), jnp.float32),
        "attn_ln_gamma": jnp.ones((num_heads,), jnp.float32),
        "attn_ln_beta": jnp.zeros((num_heads,), jnp.float32),
        "wout": w(next(keys), (hd, in_features), hd),
        "bout": 0.02 * jax.random.normal(next(keys), (in_features,), jnp.float32),
        "add_ln_gamma": jnp.ones((in_features,), jnp.float32),
        "add_ln_beta": jnp.zeros((in_features,), jnp.float32),
        "lin0_w": w(next(keys), (in_features, hidden[0]), in_features),
        "lin0_bias": 0.02 * jax.random.normal(next(keys), (hidden[0],), jnp.float32),
        "ln0_gamma": jnp.ones((hidden[0],), jnp.float32),
        "ln0_beta": jnp.zeros((hidden[0],), jnp.float32),
        "out_w": w(next(keys), (hidden[-1], out_features), hidden[-1]),
        "out_bias": 0.02 * jax.random.normal(next(keys), (out_features,), jnp.float32),
    }
    res = []
    for i in range(1, len(hidden)):
        res.append({
            "w": w(next(keys), (hidden[i - 1], hidden[i]), hidden[i - 1]),
            "bias": 0.02 * jax.random.normal(next(keys), (hidden[i],), jnp.float32),
            "gamma": jnp.ones((hidden[i],), jnp.float32),
            "beta": jnp.zeros((hidden[i],), jnp.float32),
        })
    p["res"] = res
    return p


# ---------------------------------------------------------------------------
if __name__ == "__main__":
    BATCH = 2
    IN_FEATURES = 16          # also the token count inside Attention (input_dim=1 path)
    OUT_FEATURES = 8
    HIDDEN = [32, 32]
    NUM_HEADS = 4
    HEAD_DIM = 32
    NUM_MEMBERS = 3           # all members "trained" -> eval regression (mean, std)

    root = jax.random.PRNGKey(0)
    kx, kp = jax.random.split(root)
    x = jax.random.normal(kx, (BATCH, IN_FEATURES), jnp.float32)
    members = [init_member_params(k, IN_FEATURES, OUT_FEATURES, HIDDEN,
                                  NUM_HEADS, HEAD_DIM)
               for k in jax.random.split(kp, NUM_MEMBERS)]

    mean, std = ensemble_forward_pallas(x, members, num_heads=NUM_HEADS,
                                        head_dim=HEAD_DIM)
    mean = jax.block_until_ready(mean)
    std = jax.block_until_ready(std)

    mean_ref, std_ref = ensemble_forward_ref(x, members, num_heads=NUM_HEADS,
                                             head_dim=HEAD_DIM)

    ok = True
    if mean.shape != (BATCH, OUT_FEATURES) or std.shape != (BATCH, OUT_FEATURES):
        ok = False
        print("SHAPE MISMATCH", mean.shape, std.shape)
    if not (bool(jnp.all(jnp.isfinite(mean))) and bool(jnp.all(jnp.isfinite(std)))):
        ok = False
        print("NON-FINITE OUTPUT")
    if not jnp.allclose(mean, mean_ref, atol=5e-3, rtol=5e-3):
        ok = False
        print("MEAN MISMATCH max_abs_err =",
              float(jnp.max(jnp.abs(mean - mean_ref))))
    if not jnp.allclose(std, std_ref, atol=5e-3, rtol=5e-3):
        ok = False
        print("STD MISMATCH max_abs_err =",
              float(jnp.max(jnp.abs(std - std_ref))))

    if ok:
        print("KERNEL_OK")
</pallas_src>

<mosaic_0001>
module attributes {stable_mosaic.version = 11 : i64} {
  func.func @_ensemble_kernel(%arg0: memref<2x16xf32, #tpu.memory_space<vmem>>, %arg1: memref<16x2xf32, #tpu.memory_space<vmem>>, %arg2: memref<3x16xf32, #tpu.memory_space<smem>>, %arg3: memref<3x4xf32, #tpu.memory_space<smem>>, %arg4: memref<3x4xf32, #tpu.memory_space<smem>>, %arg5: memref<3x64x1xf32, #tpu.memory_space<vmem>>, %arg6: memref<3x4x16xf32, #tpu.memory_space<vmem>>, %arg7: memref<3x1x16xf32, #tpu.memory_space<vmem>>, %arg8: memref<3x1x16xf32, #tpu.memory_space<vmem>>, %arg9: memref<3x1x16xf32, #tpu.memory_space<vmem>>, %arg10: memref<3x16x32xf32, #tpu.memory_space<vmem>>, %arg11: memref<3x1x32xf32, #tpu.memory_space<vmem>>, %arg12: memref<3x1x32xf32, #tpu.memory_space<vmem>>, %arg13: memref<3x1x32xf32, #tpu.memory_space<vmem>>, %arg14: memref<3x32x32xf32, #tpu.memory_space<vmem>>, %arg15: memref<3x1x32xf32, #tpu.memory_space<vmem>>, %arg16: memref<3x1x32xf32, #tpu.memory_space<vmem>>, %arg17: memref<3x1x32xf32, #tpu.memory_space<vmem>>, %arg18: memref<3x32x8xf32, #tpu.memory_space<vmem>>, %arg19: memref<3x1x8xf32, #tpu.memory_space<vmem>>, %arg20: memref<2x8xf32, #tpu.memory_space<vmem>>, %arg21: memref<2x8xf32, #tpu.memory_space<vmem>>) attributes {dimension_semantics = [], scalar_prefetch = 0 : i64, scratch_operands = 0 : i64, tpu.core_type = #tpu.core_type<tc>} {
    %c0 = arith.constant 0 : index
    %c0_0 = arith.constant 0 : index
    %0 = vector.load %arg0[%c0, %c0_0] : memref<2x16xf32, #tpu.memory_space<vmem>>, vector<2x16xf32>
    %c0_1 = arith.constant 0 : index
    %c0_2 = arith.constant 0 : index
    %1 = vector.load %arg1[%c0_1, %c0_2] : memref<16x2xf32, #tpu.memory_space<vmem>>, vector<16x2xf32>
    %c0_3 = arith.constant 0 : index
    %c0_4 = arith.constant 0 : index
    %c0_5 = arith.constant 0 : index
    %2 = vector.load %arg5[%c0_3, %c0_4, %c0_5] : memref<3x64x1xf32, #tpu.memory_space<vmem>>, vector<1x64x1xf32>
    %3 = vector.shape_cast %2 : vector<1x64x1xf32> to vector<64x1xf32>
    %c0_6 = arith.constant 0 : index
    %c0_7 = arith.constant 0 : index
    %c0_8 = arith.constant 0 : index
    %4 = vector.load %arg6[%c0_6, %c0_7, %c0_8] : memref<3x4x16xf32, #tpu.memory_space<vmem>>, vector<1x4x16xf32>
    %5 = vector.shape_cast %4 : vector<1x4x16xf32> to vector<4x16xf32>
    %c0_9 = arith.constant 0 : index
    %c0_10 = arith.constant 0 : index
    %c0_11 = arith.constant 0 : index
    %6 = vector.load %arg7[%c0_9, %c0_10, %c0_11] : memref<3x1x16xf32, #tpu.memory_space<vmem>>, vector<1x1x16xf32>
    %7 = vector.shape_cast %6 : vector<1x1x16xf32> to vector<1x16xf32>
    %c0_12 = arith.constant 0 : index
    %c0_13 = arith.constant 0 : index
    %c0_14 = arith.constant 0 : index
    %8 = vector.load %arg8[%c0_12, %c0_13, %c0_14] : memref<3x1x16xf32, #tpu.memory_space<vmem>>, vector<1x1x16xf32>
    %9 = vector.shape_cast %8 : vector<1x1x16xf32> to vector<1x16xf32>
    %c0_15 = arith.constant 0 : index
    %c0_16 = arith.constant 0 : index
    %c0_17 = arith.constant 0 : index
    %10 = vector.load %arg9[%c0_15, %c0_16, %c0_17] : memref<3x1x16xf32, #tpu.memory_space<vmem>>, vector<1x1x16xf32>
    %11 = vector.shape_cast %10 : vector<1x1x16xf32> to vector<1x16xf32>
    %12 = vector.extract_strided_slice %0 {offsets = [0, 0], sizes = [1, 16], strides = [1, 1]} : vector<2x16xf32> to vector<1x16xf32>
    %13 = vector.extract_strided_slice %1 {offsets = [0, 0], sizes = [16, 1], strides = [1, 1]} : vector<16x2xf32> to vector<16x1xf32>
    %14 = vector.broadcast %13 : vector<16x1xf32> to vector<16x16xf32>
    %15 = vector.broadcast %12 : vector<1x16xf32> to vector<16x16xf32>
    %16 = arith.mulf %14, %15 : vector<16x16xf32>
    %17 = tpu.concatenate %16, %16, %16, %16 in 0 : vector<16x16xf32>, vector<16x16xf32>, vector<16x16xf32>, vector<16x16xf32> -> vector<64x16xf32>
    %18 = vector.broadcast %3 : vector<64x1xf32> to vector<64x16xf32>
    %19 = arith.mulf %17, %18 : vector<64x16xf32>
    %cst = arith.constant dense<0xFF800000> : vector<64xf32>
    %20 = vector.multi_reduction <maximumf>, %19, %cst [1] : vector<64x16xf32> to vector<64xf32>
    %21 = vector.shape_cast %20 : vector<64xf32> to vector<64x1xf32>
    %22 = vector.broadcast %21 : vector<64x1xf32> to vector<64x16xf32>
    %23 = arith.subf %19, %22 : vector<64x16xf32>
    %24 = math.exp %23 : vector<64x16xf32>
    %cst_18 = arith.constant dense<0.000000e+00> : vector<64xf32>
    %25 = vector.multi_reduction <add>, %24, %cst_18 [1] : vector<64x16xf32> to vector<64xf32>
    %26 = vector.shape_cast %25 : vector<64xf32> to vector<64x1xf32>
    %27 = tpu.reciprocal %26 {approx = true} : vector<64x1xf32> -> vector<64x1xf32>
    %28 = vector.broadcast %27 : vector<64x1xf32> to vector<64x16xf32>
    %29 = arith.mulf %24, %28 : vector<64x16xf32>
    %30 = vector.extract_strided_slice %29 {offsets = [0, 0], sizes = [16, 16], strides = [1, 1]} : vector<64x16xf32> to vector<16x16xf32>
    %31 = vector.extract_strided_slice %29 {offsets = [16, 0], sizes = [16, 16], strides = [1, 1]} : vector<64x16xf32> to vector<16x16xf32>
    %32 = vector.extract_strided_slice %29 {offsets = [32, 0], sizes = [16, 16], strides = [1, 1]} : vector<64x16xf32> to vector<16x16xf32>
    %33 = vector.extract_strided_slice %29 {offsets = [48, 0], sizes = [16, 16], strides = [1, 1]} : vector<64x16xf32> to vector<16x16xf32>
    %c0_19 = arith.constant 0 : index
    %c0_20 = arith.constant 0 : index
    %34 = memref.load %arg2[%c0_19, %c0_20] : memref<3x16xf32, #tpu.memory_space<smem>>
    %35 = vector.broadcast %34 : f32 to vector<16x16xf32>
    %36 = arith.mulf %30, %35 : vector<16x16xf32>
    %c0_21 = arith.constant 0 : index
    %c4 = arith.constant 4 : index
    %37 = memref.load %arg2[%c0_21, %c4] : memref<3x16xf32, #tpu.memory_space<smem>>
    %38 = vector.broadcast %37 : f32 to vector<16x16xf32>
    %39 = arith.mulf %31, %38 : vector<16x16xf32>
    %40 = arith.addf %36, %39 : vector<16x16xf32>
    %c0_22 = arith.constant 0 : index
    %c8 = arith.constant 8 : index
    %41 = memref.load %arg2[%c0_22, %c8] : memref<3x16xf32, #tpu.memory_space<smem>>
    %42 = vector.broadcast %41 : f32 to vector<16x16xf32>
    %43 = arith.mulf %32, %42 : vector<16x16xf32>
    %44 = arith.addf %40, %43 : vector<16x16xf32>
    %c0_23 = arith.constant 0 : index
    %c12 = arith.constant 12 : index
    %45 = memref.load %arg2[%c0_23, %c12] : memref<3x16xf32, #tpu.memory_space<smem>>
    %46 = vector.broadcast %45 : f32 to vector<16x16xf32>
    %47 = arith.mulf %33, %46 : vector<16x16xf32>
    %48 = arith.addf %44, %47 : vector<16x16xf32>
    %c0_24 = arith.constant 0 : index
    %c1 = arith.constant 1 : index
    %49 = memref.load %arg2[%c0_24, %c1] : memref<3x16xf32, #tpu.memory_space<smem>>
    %50 = vector.broadcast %49 : f32 to vector<16x16xf32>
    %51 = arith.mulf %30, %50 : vector<16x16xf32>
    %c0_25 = arith.constant 0 : index
    %c5 = arith.constant 5 : index
    %52 = memref.load %arg2[%c0_25, %c5] : memref<3x16xf32, #tpu.memory_space<smem>>
    %53 = vector.broadcast %52 : f32 to vector<16x16xf32>
    %54 = arith.mulf %31, %53 : vector<16x16xf32>
    %55 = arith.addf %51, %54 : vector<16x16xf32>
    %c0_26 = arith.constant 0 : index
    %c9 = arith.constant 9 : index
    %56 = memref.load %arg2[%c0_26, %c9] : memref<3x16xf32, #tpu.memory_space<smem>>
    %57 = vector.broadcast %56 : f32 to vector<16x16xf32>
    %58 = arith.mulf %32, %57 : vector<16x16xf32>
    %59 = arith.addf %55, %58 : vector<16x16xf32>
    %c0_27 = arith.constant 0 : index
    %c13 = arith.constant 13 : index
    %60 = memref.load %arg2[%c0_27, %c13] : memref<3x16xf32, #tpu.memory_space<smem>>
    %61 = vector.broadcast %60 : f32 to vector<16x16xf32>
    %62 = arith.mulf %33, %61 : vector<16x16xf32>
    %63 = arith.addf %59, %62 : vector<16x16xf32>
    %c0_28 = arith.constant 0 : index
    %c2 = arith.constant 2 : index
    %64 = memref.load %arg2[%c0_28, %c2] : memref<3x16xf32, #tpu.memory_space<smem>>
    %65 = vector.broadcast %64 : f32 to vector<16x16xf32>
    %66 = arith.mulf %30, %65 : vector<16x16xf32>
    %c0_29 = arith.constant 0 : index
    %c6 = arith.constant 6 : index
    %67 = memref.load %arg2[%c0_29, %c6] : memref<3x16xf32, #tpu.memory_space<smem>>
    %68 = vector.broadcast %67 : f32 to vector<16x16xf32>
    %69 = arith.mulf %31, %68 : vector<16x16xf32>
    %70 = arith.addf %66, %69 : vector<16x16xf32>
    %c0_30 = arith.constant 0 : index
    %c10 = arith.constant 10 : index
    %71 = memref.load %arg2[%c0_30, %c10] : memref<3x16xf32, #tpu.memory_space<smem>>
    %72 = vector.broadcast %71 : f32 to vector<16x16xf32>
    %73 = arith.mulf %32, %72 : vector<16x16xf32>
    %74 = arith.addf %70, %73 : vector<16x16xf32>
    %c0_31 = arith.constant 0 : index
    %c14 = arith.constant 14 : index
    %75 = memref.load %arg2[%c0_31, %c14] : memref<3x16xf32, #tpu.memory_space<smem>>
    %76 = vector.broadcast %75 : f32 to vector<16x16xf32>
    %77 = arith.mulf %33, %76 : vector<16x16xf32>
    %78 = arith.addf %74, %77 : vector<16x16xf32>
    %c0_32 = arith.constant 0 : index
    %c3 = arith.constant 3 : index
    %79 = memref.load %arg2[%c0_32, %c3] : memref<3x16xf32, #tpu.memory_space<smem>>
    %80 = vector.broadcast %79 : f32 to vector<16x16xf32>
    %81 = arith.mulf %30, %80 : vector<16x16xf32>
    %c0_33 = arith.constant 0 : index
    %c7 = arith.constant 7 : index
    %82 = memref.load %arg2[%c0_33, %c7] : memref<3x16xf32, #tpu.memory_space<smem>>
    %83 = vector.broadcast %82 : f32 to vector<16x16xf32>
    %84 = arith.mulf %31, %83 : vector<16x16xf32>
    %85 = arith.addf %81, %84 : vector<16x16xf32>
    %c0_34 = arith.constant 0 : index
    %c11 = arith.constant 11 : index
    %86 = memref.load %arg2[%c0_34, %c11] : memref<3x16xf32, #tpu.memory_space<smem>>
    %87 = vector.broadcast %86 : f32 to vector<16x16xf32>
    %88 = arith.mulf %32, %87 : vector<16x16xf32>
    %89 = arith.addf %85, %88 : vector<16x16xf32>
    %c0_35 = arith.constant 0 : index
    %c15 = arith.constant 15 : index
    %90 = memref.load %arg2[%c0_35, %c15] : memref<3x16xf32, #tpu.memory_space<smem>>
    %91 = vector.broadcast %90 : f32 to vector<16x16xf32>
    %92 = arith.mulf %33, %91 : vector<16x16xf32>
    %93 = arith.addf %89, %92 : vector<16x16xf32>
    %94 = arith.addf %48, %63 : vector<16x16xf32>
    %95 = arith.addf %94, %78 : vector<16x16xf32>
    %96 = arith.addf %95, %93 : vector<16x16xf32>
    %cst_36 = arith.constant 2.500000e-01 : f32
    %97 = vector.broadcast %cst_36 : f32 to vector<16x16xf32>
    %98 = arith.mulf %96, %97 : vector<16x16xf32>
    %99 = arith.subf %48, %98 : vector<16x16xf32>
    %100 = arith.mulf %99, %99 : vector<16x16xf32>
    %101 = arith.subf %63, %98 : vector<16x16xf32>
    %102 = arith.mulf %101, %101 : vector<16x16xf32>
    %103 = arith.addf %100, %102 : vector<16x16xf32>
    %104 = arith.subf %78, %98 : vector<16x16xf32>
    %105 = arith.mulf %104, %104 : vector<16x16xf32>
    %106 = arith.addf %103, %105 : vector<16x16xf32>
    %107 = arith.subf %93, %98 : vector<16x16xf32>
    %108 = arith.mulf %107, %107 : vector<16x16xf32>
    %109 = arith.addf %106, %108 : vector<16x16xf32>
    %cst_37 = arith.constant 2.500000e-01 : f32
    %110 = vector.broadcast %cst_37 : f32 to vector<16x16xf32>
    %111 = arith.mulf %109, %110 : vector<16x16xf32>
    %cst_38 = arith.constant 9.99999974E-6 : f32
    %112 = vector.broadcast %cst_38 : f32 to vector<16x16xf32>
    %113 = arith.addf %111, %112 : vector<16x16xf32>
    %114 = math.rsqrt %113 : vector<16x16xf32>
    %cst_39 = arith.constant 1.600000e+01 : f32
    %115 = vector.broadcast %cst_39 : f32 to vector<1x16xf32>
    %116 = arith.mulf %7, %115 : vector<1x16xf32>
    %117 = arith.subf %48, %98 : vector<16x16xf32>
    %118 = arith.mulf %117, %114 : vector<16x16xf32>
    %c0_40 = arith.constant 0 : index
    %c0_41 = arith.constant 0 : index
    %119 = memref.load %arg3[%c0_40, %c0_41] : memref<3x4xf32, #tpu.memory_space<smem>>
    %120 = vector.broadcast %119 : f32 to vector<16x16xf32>
    %121 = arith.mulf %118, %120 : vector<16x16xf32>
    %c0_42 = arith.constant 0 : index
    %c0_43 = arith.constant 0 : index
    %122 = memref.load %arg4[%c0_42, %c0_43] : memref<3x4xf32, #tpu.memory_space<smem>>
    %123 = vector.broadcast %122 : f32 to vector<16x16xf32>
    %124 = arith.addf %121, %123 : vector<16x16xf32>
    %125 = vector.broadcast %12 : vector<1x16xf32> to vector<16x16xf32>
    %126 = arith.mulf %124, %125 : vector<16x16xf32>
    %127 = vector.shape_cast %126 : vector<16x16xf32> to vector<1x16x16xf32>
    %cst_44 = arith.constant dense<0.000000e+00> : vector<1xf32>
    %128 = vector.multi_reduction <add>, %127, %cst_44 [1, 2] : vector<1x16x16xf32> to vector<1xf32>
    %129 = vector.shape_cast %128 : vector<1xf32> to vector<1x1x1xf32>
    %130 = vector.extract %129[0, 0, 0] : f32 from vector<1x1x1xf32>
    %131 = vector.broadcast %130 : f32 to vector<1x1xf32>
    %132 = vector.extract_strided_slice %5 {offsets = [0, 0], sizes = [1, 16], strides = [1, 1]} : vector<4x16xf32> to vector<1x16xf32>
    %133 = vector.broadcast %131 : vector<1x1xf32> to vector<1x16xf32>
    %134 = arith.mulf %133, %132 : vector<1x16xf32>
    %135 = arith.addf %116, %134 : vector<1x16xf32>
    %136 = arith.subf %63, %98 : vector<16x16xf32>
    %137 = arith.mulf %136, %114 : vector<16x16xf32>
    %c0_45 = arith.constant 0 : index
    %c1_46 = arith.constant 1 : index
    %138 = memref.load %arg3[%c0_45, %c1_46] : memref<3x4xf32, #tpu.memory_space<smem>>
    %139 = vector.broadcast %138 : f32 to vector<16x16xf32>
    %140 = arith.mulf %137, %139 : vector<16x16xf32>
    %c0_47 = arith.constant 0 : index
    %c1_48 = arith.constant 1 : index
    %141 = memref.load %arg4[%c0_47, %c1_48] : memref<3x4xf32, #tpu.memory_space<smem>>
    %142 = vector.broadcast %141 : f32 to vector<16x16xf32>
    %143 = arith.addf %140, %142 : vector<16x16xf32>
    %144 = vector.broadcast %12 : vector<1x16xf32> to vector<16x16xf32>
    %145 = arith.mulf %143, %144 : vector<16x16xf32>
    %146 = vector.shape_cast %145 : vector<16x16xf32> to vector<1x16x16xf32>
    %cst_49 = arith.constant dense<0.000000e+00> : vector<1xf32>
    %147 = vector.multi_reduction <add>, %146, %cst_49 [1, 2] : vector<1x16x16xf32> to vector<1xf32>
    %148 = vector.shape_cast %147 : vector<1xf32> to vector<1x1x1xf32>
    %149 = vector.extract %148[0, 0, 0] : f32 from vector<1x1x1xf32>
    %150 = vector.broadcast %149 : f32 to vector<1x1xf32>
    %151 = vector.extract_strided_slice %5 {offsets = [1, 0], sizes = [1, 16], strides = [1, 1]} : vector<4x16xf32> to vector<1x16xf32>
    %152 = vector.broadcast %150 : vector<1x1xf32> to vector<1x16xf32>
    %153 = arith.mulf %152, %151 : vector<1x16xf32>
    %154 = arith.addf %135, %153 : vector<1x16xf32>
    %155 = arith.subf %78, %98 : vector<16x16xf32>
    %156 = arith.mulf %155, %114 : vector<16x16xf32>
    %c0_50 = arith.constant 0 : index
    %c2_51 = arith.constant 2 : index
    %157 = memref.load %arg3[%c0_50, %c2_51] : memref<3x4xf32, #tpu.memory_space<smem>>
    %158 = vector.broadcast %157 : f32 to vector<16x16xf32>
    %159 = arith.mulf %156, %158 : vector<16x16xf32>
    %c0_52 = arith.constant 0 : index
    %c2_53 = arith.constant 2 : index
    %160 = memref.load %arg4[%c0_52, %c2_53] : memref<3x4xf32, #tpu.memory_space<smem>>
    %161 = vector.broadcast %160 : f32 to vector<16x16xf32>
    %162 = arith.addf %159, %161 : vector<16x16xf32>
    %163 = vector.broadcast %12 : vector<1x16xf32> to vector<16x16xf32>
    %164 = arith.mulf %162, %163 : vector<16x16xf32>
    %165 = vector.shape_cast %164 : vector<16x16xf32> to vector<1x16x16xf32>
    %cst_54 = arith.constant dense<0.000000e+00> : vector<1xf32>
    %166 = vector.multi_reduction <add>, %165, %cst_54 [1, 2] : vector<1x16x16xf32> to vector<1xf32>
    %167 = vector.shape_cast %166 : vector<1xf32> to vector<1x1x1xf32>
    %168 = vector.extract %167[0, 0, 0] : f32 from vector<1x1x1xf32>
    %169 = vector.broadcast %168 : f32 to vector<1x1xf32>
    %170 = vector.extract_strided_slice %5 {offsets = [2, 0], sizes = [1, 16], strides = [1, 1]} : vector<4x16xf32> to vector<1x16xf32>
    %171 = vector.broadcast %169 : vector<1x1xf32> to vector<1x16xf32>
    %172 = arith.mulf %171, %170 : vector<1x16xf32>
    %173 = arith.addf %154, %172 : vector<1x16xf32>
    %174 = arith.subf %93, %98 : vector<16x16xf32>
    %175 = arith.mulf %174, %114 : vector<16x16xf32>
    %c0_55 = arith.constant 0 : index
    %c3_56 = arith.constant 3 : index
    %176 = memref.load %arg3[%c0_55, %c3_56] : memref<3x4xf32, #tpu.memory_space<smem>>
    %177 = vector.broadcast %176 : f32 to vector<16x16xf32>
    %178 = arith.mulf %175, %177 : vector<16x16xf32>
    %c0_57 = arith.constant 0 : index
    %c3_58 = arith.constant 3 : index
    %179 = memref.load %arg4[%c0_57, %c3_58] : memref<3x4xf32, #tpu.memory_space<smem>>
    %180 = vector.broadcast %179 : f32 to vector<16x16xf32>
    %181 = arith.addf %178, %180 : vector<16x16xf32>
    %182 = vector.broadcast %12 : vector<1x16xf32> to vector<16x16xf32>
    %183 = arith.mulf %181, %182 : vector<16x16xf32>
    %184 = vector.shape_cast %183 : vector<16x16xf32> to vector<1x16x16xf32>
    %cst_59 = arith.constant dense<0.000000e+00> : vector<1xf32>
    %185 = vector.multi_reduction <add>, %184, %cst_59 [1, 2] : vector<1x16x16xf32> to vector<1xf32>
    %186 = vector.shape_cast %185 : vector<1xf32> to vector<1x1x1xf32>
    %187 = vector.extract %186[0, 0, 0] : f32 from vector<1x1x1xf32>
    %188 = vector.broadcast %187 : f32 to vector<1x1xf32>
    %189 = vector.extract_strided_slice %5 {offsets = [3, 0], sizes = [1, 16], strides = [1, 1]} : vector<4x16xf32> to vector<1x16xf32>
    %190 = vector.broadcast %188 : vector<1x1xf32> to vector<1x16xf32>
    %191 = arith.mulf %190, %189 : vector<1x16xf32>
    %192 = arith.addf %173, %191 : vector<1x16xf32>
    %cst_60 = arith.constant dense<0.000000e+00> : vector<1xf32>
    %193 = vector.multi_reduction <add>, %192, %cst_60 [1] : vector<1x16xf32> to vector<1xf32>
    %194 = vector.shape_cast %193 : vector<1xf32> to vector<1x1xf32>
    %cst_61 = arith.constant 1.600000e+01 : f32
    %195 = vector.broadcast %cst_61 : f32 to vector<1x1xf32>
    %196 = arith.divf %194, %195 : vector<1x1xf32>
    %197 = vector.broadcast %196 : vector<1x1xf32> to vector<1x16xf32>
    %198 = arith.subf %192, %197 : vector<1x16xf32>
    %199 = arith.mulf %198, %198 : vector<1x16xf32>
    %cst_62 = arith.constant dense<0.000000e+00> : vector<1xf32>
    %200 = vector.multi_reduction <add>, %199, %cst_62 [1] : vector<1x16xf32> to vector<1xf32>
    %201 = vector.shape_cast %200 : vector<1xf32> to vector<1x1xf32>
    %cst_63 = arith.constant 1.600000e+01 : f32
    %202 = vector.broadcast %cst_63 : f32 to vector<1x1xf32>
    %203 = arith.divf %201, %202 : vector<1x1xf32>
    %204 = vector.broadcast %196 : vector<1x1xf32> to vector<1x16xf32>
    %205 = arith.subf %192, %204 : vector<1x16xf32>
    %cst_64 = arith.constant 9.99999974E-6 : f32
    %206 = vector.broadcast %cst_64 : f32 to vector<1x1xf32>
    %207 = arith.addf %203, %206 : vector<1x1xf32>
    %208 = math.rsqrt %207 : vector<1x1xf32>
    %209 = vector.broadcast %208 : vector<1x1xf32> to vector<1x16xf32>
    %210 = arith.mulf %205, %209 : vector<1x16xf32>
    %211 = arith.mulf %210, %9 : vector<1x16xf32>
    %212 = arith.addf %211, %11 : vector<1x16xf32>
    %213 = arith.addf %12, %212 : vector<1x16xf32>
    %214 = vector.extract_strided_slice %0 {offsets = [1, 0], sizes = [1, 16], strides = [1, 1]} : vector<2x16xf32> to vector<1x16xf32>
    %215 = vector.extract_strided_slice %1 {offsets = [0, 1], sizes = [16, 1], strides = [1, 1]} : vector<16x2xf32> to vector<16x1xf32>
    %216 = vector.broadcast %215 : vector<16x1xf32> to vector<16x16xf32>
    %217 = vector.broadcast %214 : vector<1x16xf32> to vector<16x16xf32>
    %218 = arith.mulf %216, %217 : vector<16x16xf32>
    %219 = tpu.concatenate %218, %218, %218, %218 in 0 : vector<16x16xf32>, vector<16x16xf32>, vector<16x16xf32>, vector<16x16xf32> -> vector<64x16xf32>
    %220 = vector.broadcast %3 : vector<64x1xf32> to vector<64x16xf32>
    %221 = arith.mulf %219, %220 : vector<64x16xf32>
    %cst_65 = arith.constant dense<0xFF800000> : vector<64xf32>
    %222 = vector.multi_reduction <maximumf>, %221, %cst_65 [1] : vector<64x16xf32> to vector<64xf32>
    %223 = vector.shape_cast %222 : vector<64xf32> to vector<64x1xf32>
    %224 = vector.broadcast %223 : vector<64x1xf32> to vector<64x16xf32>
    %225 = arith.subf %221, %224 : vector<64x16xf32>
    %226 = math.exp %225 : vector<64x16xf32>
    %cst_66 = arith.constant dense<0.000000e+00> : vector<64xf32>
    %227 = vector.multi_reduction <add>, %226, %cst_66 [1] : vector<64x16xf32> to vector<64xf32>
    %228 = vector.shape_cast %227 : vector<64xf32> to vector<64x1xf32>
    %229 = tpu.reciprocal %228 {approx = true} : vector<64x1xf32> -> vector<64x1xf32>
    %230 = vector.broadcast %229 : vector<64x1xf32> to vector<64x16xf32>
    %231 = arith.mulf %226, %230 : vector<64x16xf32>
    %232 = vector.extract_strided_slice %231 {offsets = [0, 0], sizes = [16, 16], strides = [1, 1]} : vector<64x16xf32> to vector<16x16xf32>
    %233 = vector.extract_strided_slice %231 {offsets = [16, 0], sizes = [16, 16], strides = [1, 1]} : vector<64x16xf32> to vector<16x16xf32>
    %234 = vector.extract_strided_slice %231 {offsets = [32, 0], sizes = [16, 16], strides = [1, 1]} : vector<64x16xf32> to vector<16x16xf32>
    %235 = vector.extract_strided_slice %231 {offsets = [48, 0], sizes = [16, 16], strides = [1, 1]} : vector<64x16xf32> to vector<16x16xf32>
    %c0_67 = arith.constant 0 : index
    %c0_68 = arith.constant 0 : index
    %236 = memref.load %arg2[%c0_67, %c0_68] : memref<3x16xf32, #tpu.memory_space<smem>>
    %237 = vector.broadcast %236 : f32 to vector<16x16xf32>
    %238 = arith.mulf %232, %237 : vector<16x16xf32>
    %c0_69 = arith.constant 0 : index
    %c4_70 = arith.constant 4 : index
    %239 = memref.load %arg2[%c0_69, %c4_70] : memref<3x16xf32, #tpu.memory_space<smem>>
    %240 = vector.broadcast %239 : f32 to vector<16x16xf32>
    %241 = arith.mulf %233, %240 : vector<16x16xf32>
    %242 = arith.addf %238, %241 : vector<16x16xf32>
    %c0_71 = arith.constant 0 : index
    %c8_72 = arith.constant 8 : index
    %243 = memref.load %arg2[%c0_71, %c8_72] : memref<3x16xf32, #tpu.memory_space<smem>>
    %244 = vector.broadcast %243 : f32 to vector<16x16xf32>
    %245 = arith.mulf %234, %244 : vector<16x16xf32>
    %246 = arith.addf %242, %245 : vector<16x16xf32>
    %c0_73 = arith.constant 0 : index
    %c12_74 = arith.constant 12 : index
    %247 = memref.load %arg2[%c0_73, %c12_74] : memref<3x16xf32, #tpu.memory_space<smem>>
    %248 = vector.broadcast %247 : f32 to vector<16x16xf32>
    %249 = arith.mulf %235, %248 : vector<16x16xf32>
    %250 = arith.addf %246, %249 : vector<16x16xf32>
    %c0_75 = arith.constant 0 : index
    %c1_76 = arith.constant 1 : index
    %251 = memref.load %arg2[%c0_75, %c1_76] : memref<3x16xf32, #tpu.memory_space<smem>>
    %252 = vector.broadcast %251 : f32 to vector<16x16xf32>
    %253 = arith.mulf %232, %252 : vector<16x16xf32>
    %c0_77 = arith.constant 0 : index
    %c5_78 = arith.constant 5 : index
    %254 = memref.load %arg2[%c0_77, %c5_78] : memref<3x16xf32, #tpu.memory_space<smem>>
    %255 = vector.broadcast %254 : f32 to vector<16x16xf32>
    %256 = arith.mulf %233, %255 : vector<16x16xf32>
    %257 = arith.addf %253, %256 : vector<16x16xf32>
    %c0_79 = arith.constant 0 : index
    %c9_80 = arith.constant 9 : index
    %258 = memref.load %arg2[%c0_79, %c9_80] : memref<3x16xf32, #tpu.memory_space<smem>>
    %259 = vector.broadcast %258 : f32 to vector<16x16xf32>
    %260 = arith.mulf %234, %259 : vector<16x16xf32>
    %261 = arith.addf %257, %260 : vector<16x16xf32>
    %c0_81 = arith.constant 0 : index
    %c13_82 = arith.constant 13 : index
    %262 = memref.load %arg2[%c0_81, %c13_82] : memref<3x16xf32, #tpu.memory_space<smem>>
    %263 = vector.broadcast %262 : f32 to vector<16x16xf32>
    %264 = arith.mulf %235, %263 : vector<16x16xf32>
    %265 = arith.addf %261, %264 : vector<16x16xf32>
    %c0_83 = arith.constant 0 : index
    %c2_84 = arith.constant 2 : index
    %266 = memref.load %arg2[%c0_83, %c2_84] : memref<3x16xf32, #tpu.memory_space<smem>>
    %267 = vector.broadcast %266 : f32 to vector<16x16xf32>
    %268 = arith.mulf %232, %267 : vector<16x16xf32>
    %c0_85 = arith.constant 0 : index
    %c6_86 = arith.constant 6 : index
    %269 = memref.load %arg2[%c0_85, %c6_86] : memref<3x16xf32, #tpu.memory_space<smem>>
    %270 = vector.broadcast %269 : f32 to vector<16x16xf32>
    %271 = arith.mulf %233, %270 : vector<16x16xf32>
    %272 = arith.addf %268, %271 : vector<16x16xf32>
    %c0_87 = arith.constant 0 : index
    %c10_88 = arith.constant 10 : index
    %273 = memref.load %arg2[%c0_87, %c10_88] : memref<3x16xf32, #tpu.memory_space<smem>>
    %274 = vector.broadcast %273 : f32 to vector<16x16xf32>
    %275 = arith.mulf %234, %274 : vector<16x16xf32>
    %276 = arith.addf %272, %275 : vector<16x16xf32>
    %c0_89 = arith.constant 0 : index
    %c14_90 = arith.constant 14 : index
    %277 = memref.load %arg2[%c0_89, %c14_90] : memref<3x16xf32, #tpu.memory_space<smem>>
    %278 = vector.broadcast %277 : f32 to vector<16x16xf32>
    %279 = arith.mulf %235, %278 : vector<16x16xf32>
    %280 = arith.addf %276, %279 : vector<16x16xf32>
    %c0_91 = arith.constant 0 : index
    %c3_92 = arith.constant 3 : index
    %281 = memref.load %arg2[%c0_91, %c3_92] : memref<3x16xf32, #tpu.memory_space<smem>>
    %282 = vector.broadcast %281 : f32 to vector<16x16xf32>
    %283 = arith.mulf %232, %282 : vector<16x16xf32>
    %c0_93 = arith.constant 0 : index
    %c7_94 = arith.constant 7 : index
    %284 = memref.load %arg2[%c0_93, %c7_94] : memref<3x16xf32, #tpu.memory_space<smem>>
    %285 = vector.broadcast %284 : f32 to vector<16x16xf32>
    %286 = arith.mulf %233, %285 : vector<16x16xf32>
    %287 = arith.addf %283, %286 : vector<16x16xf32>
    %c0_95 = arith.constant 0 : index
    %c11_96 = arith.constant 11 : index
    %288 = memref.load %arg2[%c0_95, %c11_96] : memref<3x16xf32, #tpu.memory_space<smem>>
    %289 = vector.broadcast %288 : f32 to vector<16x16xf32>
    %290 = arith.mulf %234, %289 : vector<16x16xf32>
    %291 = arith.addf %287, %290 : vector<16x16xf32>
    %c0_97 = arith.constant 0 : index
    %c15_98 = arith.constant 15 : index
    %292 = memref.load %arg2[%c0_97, %c15_98] : memref<3x16xf32, #tpu.memory_space<smem>>
    %293 = vector.broadcast %292 : f32 to vector<16x16xf32>
    %294 = arith.mulf %235, %293 : vector<16x16xf32>
    %295 = arith.addf %291, %294 : vector<16x16xf32>
    %296 = arith.addf %250, %265 : vector<16x16xf32>
    %297 = arith.addf %296, %280 : vector<16x16xf32>
    %298 = arith.addf %297, %295 : vector<16x16xf32>
    %cst_99 = arith.constant 2.500000e-01 : f32
    %299 = vector.broadcast %cst_99 : f32 to vector<16x16xf32>
    %300 = arith.mulf %298, %299 : vector<16x16xf32>
    %301 = arith.subf %250, %300 : vector<16x16xf32>
    %302 = arith.mulf %301, %301 : vector<16x16xf32>
    %303 = arith.subf %265, %300 : vector<16x16xf32>
    %304 = arith.mulf %303, %303 : vector<16x16xf32>
    %305 = arith.addf %302, %304 : vector<16x16xf32>
    %306 = arith.subf %280, %300 : vector<16x16xf32>
    %307 = arith.mulf %306, %306 : vector<16x16xf32>
    %308 = arith.addf %305, %307 : vector<16x16xf32>
    %309 = arith.subf %295, %300 : vector<16x16xf32>
    %310 = arith.mulf %309, %309 : vector<16x16xf32>
    %311 = arith.addf %308, %310 : vector<16x16xf32>
    %cst_100 = arith.constant 2.500000e-01 : f32
    %312 = vector.broadcast %cst_100 : f32 to vector<16x16xf32>
    %313 = arith.mulf %311, %312 : vector<16x16xf32>
    %cst_101 = arith.constant 9.99999974E-6 : f32
    %314 = vector.broadcast %cst_101 : f32 to vector<16x16xf32>
    %315 = arith.addf %313, %314 : vector<16x16xf32>
    %316 = math.rsqrt %315 : vector<16x16xf32>
    %cst_102 = arith.constant 1.600000e+01 : f32
    %317 = vector.broadcast %cst_102 : f32 to vector<1x16xf32>
    %318 = arith.mulf %7, %317 : vector<1x16xf32>
    %319 = arith.subf %250, %300 : vector<16x16xf32>
    %320 = arith.mulf %319, %316 : vector<16x16xf32>
    %c0_103 = arith.constant 0 : index
    %c0_104 = arith.constant 0 : index
    %321 = memref.load %arg3[%c0_103, %c0_104] : memref<3x4xf32, #tpu.memory_space<smem>>
    %322 = vector.broadcast %321 : f32 to vector<16x16xf32>
    %323 = arith.mulf %320, %322 : vector<16x16xf32>
    %c0_105 = arith.constant 0 : index
    %c0_106 = arith.constant 0 : index
    %324 = memref.load %arg4[%c0_105, %c0_106] : memref<3x4xf32, #tpu.memory_space<smem>>
    %325 = vector.broadcast %324 : f32 to vector<16x16xf32>
    %326 = arith.addf %323, %325 : vector<16x16xf32>
    %327 = vector.broadcast %214 : vector<1x16xf32> to vector<16x16xf32>
    %328 = arith.mulf %326, %327 : vector<16x16xf32>
    %329 = vector.shape_cast %328 : vector<16x16xf32> to vector<1x16x16xf32>
    %cst_107 = arith.constant dense<0.000000e+00> : vector<1xf32>
    %330 = vector.multi_reduction <add>, %329, %cst_107 [1, 2] : vector<1x16x16xf32> to vector<1xf32>
    %331 = vector.shape_cast %330 : vector<1xf32> to vector<1x1x1xf32>
    %332 = vector.extract %331[0, 0, 0] : f32 from vector<1x1x1xf32>
    %333 = vector.broadcast %332 : f32 to vector<1x1xf32>
    %334 = vector.extract_strided_slice %5 {offsets = [0, 0], sizes = [1, 16], strides = [1, 1]} : vector<4x16xf32> to vector<1x16xf32>
    %335 = vector.broadcast %333 : vector<1x1xf32> to vector<1x16xf32>
    %336 = arith.mulf %335, %334 : vector<1x16xf32>
    %337 = arith.addf %318, %336 : vector<1x16xf32>
    %338 = arith.subf %265, %300 : vector<16x16xf32>
    %339 = arith.mulf %338, %316 : vector<16x16xf32>
    %c0_108 = arith.constant 0 : index
    %c1_109 = arith.constant 1 : index
    %340 = memref.load %arg3[%c0_108, %c1_109] : memref<3x4xf32, #tpu.memory_space<smem>>
    %341 = vector.broadcast %340 : f32 to vector<16x16xf32>
    %342 = arith.mulf %339, %341 : vector<16x16xf32>
    %c0_110 = arith.constant 0 : index
    %c1_111 = arith.constant 1 : index
    %343 = memref.load %arg4[%c0_110, %c1_111] : memref<3x4xf32, #tpu.memory_space<smem>>
    %344 = vector.broadcast %343 : f32 to vector<16x16xf32>
    %345 = arith.addf %342, %344 : vector<16x16xf32>
    %346 = vector.broadcast %214 : vector<1x16xf32> to vector<16x16xf32>
    %347 = arith.mulf %345, %346 : vector<16x16xf32>
    %348 = vector.shape_cast %347 : vector<16x16xf32> to vector<1x16x16xf32>
    %cst_112 = arith.constant dense<0.000000e+00> : vector<1xf32>
    %349 = vector.multi_reduction <add>, %348, %cst_112 [1, 2] : vector<1x16x16xf32> to vector<1xf32>
    %350 = vector.shape_cast %349 : vector<1xf32> to vector<1x1x1xf32>
    %351 = vector.extract %350[0, 0, 0] : f32 from vector<1x1x1xf32>
    %352 = vector.broadcast %351 : f32 to vector<1x1xf32>
    %353 = vector.extract_strided_slice %5 {offsets = [1, 0], sizes = [1, 16], strides = [1, 1]} : vector<4x16xf32> to vector<1x16xf32>
    %354 = vector.broadcast %352 : vector<1x1xf32> to vector<1x16xf32>
    %355 = arith.mulf %354, %353 : vector<1x16xf32>
    %356 = arith.addf %337, %355 : vector<1x16xf32>
    %357 = arith.subf %280, %300 : vector<16x16xf32>
    %358 = arith.mulf %357, %316 : vector<16x16xf32>
    %c0_113 = arith.constant 0 : index
    %c2_114 = arith.constant 2 : index
    %359 = memref.load %arg3[%c0_113, %c2_114] : memref<3x4xf32, #tpu.memory_space<smem>>
    %360 = vector.broadcast %359 : f32 to vector<16x16xf32>
    %361 = arith.mulf %358, %360 : vector<16x16xf32>
    %c0_115 = arith.constant 0 : index
    %c2_116 = arith.constant 2 : index
    %362 = memref.load %arg4[%c0_115, %c2_116] : memref<3x4xf32, #tpu.memory_space<smem>>
    %363 = vector.broadcast %362 : f32 to vector<16x16xf32>
    %364 = arith.addf %361, %363 : vector<16x16xf32>
    %365 = vector.broadcast %214 : vector<1x16xf32> to vector<16x16xf32>
    %366 = arith.mulf %364, %365 : vector<16x16xf32>
    %367 = vector.shape_cast %366 : vector<16x16xf32> to vector<1x16x16xf32>
    %cst_117 = arith.constant dense<0.000000e+00> : vector<1xf32>
    %368 = vector.multi_reduction <add>, %367, %cst_117 [1, 2] : vector<1x16x16xf32> to vector<1xf32>
    %369 = vector.shape_cast %368 : vector<1xf32> to vector<1x1x1xf32>
    %370 = vector.extract %369[0, 0, 0] : f32 from vector<1x1x1xf32>
    %371 = vector.broadcast %370 : f32 to vector<1x1xf32>
    %372 = vector.extract_strided_slice %5 {offsets = [2, 0], sizes = [1, 16], strides = [1, 1]} : vector<4x16xf32> to vector<1x16xf32>
    %373 = vector.broadcast %371 : vector<1x1xf32> to vector<1x16xf32>
    %374 = arith.mulf %373, %372 : vector<1x16xf32>
    %375 = arith.addf %356, %374 : vector<1x16xf32>
    %376 = arith.subf %295, %300 : vector<16x16xf32>
    %377 = arith.mulf %376, %316 : vector<16x16xf32>
    %c0_118 = arith.constant 0 : index
    %c3_119 = arith.constant 3 : index
    %378 = memref.load %arg3[%c0_118, %c3_119] : memref<3x4xf32, #tpu.memory_space<smem>>
    %379 = vector.broadcast %378 : f32 to vector<16x16xf32>
    %380 = arith.mulf %377, %379 : vector<16x16xf32>
    %c0_120 = arith.constant 0 : index
    %c3_121 = arith.constant 3 : index
    %381 = memref.load %arg4[%c0_120, %c3_121] : memref<3x4xf32, #tpu.memory_space<smem>>
    %382 = vector.broadcast %381 : f32 to vector<16x16xf32>
    %383 = arith.addf %380, %382 : vector<16x16xf32>
    %384 = vector.broadcast %214 : vector<1x16xf32> to vector<16x16xf32>
    %385 = arith.mulf %383, %384 : vector<16x16xf32>
    %386 = vector.shape_cast %385 : vector<16x16xf32> to vector<1x16x16xf32>
    %cst_122 = arith.constant dense<0.000000e+00> : vector<1xf32>
    %387 = vector.multi_reduction <add>, %386, %cst_122 [1, 2] : vector<1x16x16xf32> to vector<1xf32>
    %388 = vector.shape_cast %387 : vector<1xf32> to vector<1x1x1xf32>
    %389 = vector.extract %388[0, 0, 0] : f32 from vector<1x1x1xf32>
    %390 = vector.broadcast %389 : f32 to vector<1x1xf32>
    %391 = vector.extract_strided_slice %5 {offsets = [3, 0], sizes = [1, 16], strides = [1, 1]} : vector<4x16xf32> to vector<1x16xf32>
    %392 = vector.broadcast %390 : vector<1x1xf32> to vector<1x16xf32>
    %393 = arith.mulf %392, %391 : vector<1x16xf32>
    %394 = arith.addf %375, %393 : vector<1x16xf32>
    %cst_123 = arith.constant dense<0.000000e+00> : vector<1xf32>
    %395 = vector.multi_reduction <add>, %394, %cst_123 [1] : vector<1x16xf32> to vector<1xf32>
    %396 = vector.shape_cast %395 : vector<1xf32> to vector<1x1xf32>
    %cst_124 = arith.constant 1.600000e+01 : f32
    %397 = vector.broadcast %cst_124 : f32 to vector<1x1xf32>
    %398 = arith.divf %396, %397 : vector<1x1xf32>
    %399 = vector.broadcast %398 : vector<1x1xf32> to vector<1x16xf32>
    %400 = arith.subf %394, %399 : vector<1x16xf32>
    %401 = arith.mulf %400, %400 : vector<1x16xf32>
    %cst_125 = arith.constant dense<0.000000e+00> : vector<1xf32>
    %402 = vector.multi_reduction <add>, %401, %cst_125 [1] : vector<1x16xf32> to vector<1xf32>
    %403 = vector.shape_cast %402 : vector<1xf32> to vector<1x1xf32>
    %cst_126 = arith.constant 1.600000e+01 : f32
    %404 = vector.broadcast %cst_126 : f32 to vector<1x1xf32>
    %405 = arith.divf %403, %404 : vector<1x1xf32>
    %406 = vector.broadcast %398 : vector<1x1xf32> to vector<1x16xf32>
    %407 = arith.subf %394, %406 : vector<1x16xf32>
    %cst_127 = arith.constant 9.99999974E-6 : f32
    %408 = vector.broadcast %cst_127 : f32 to vector<1x1xf32>
    %409 = arith.addf %405, %408 : vector<1x1xf32>
    %410 = math.rsqrt %409 : vector<1x1xf32>
    %411 = vector.broadcast %410 : vector<1x1xf32> to vector<1x16xf32>
    %412 = arith.mulf %407, %411 : vector<1x16xf32>
    %413 = arith.mulf %412, %9 : vector<1x16xf32>
    %414 = arith.addf %413, %11 : vector<1x16xf32>
    %415 = arith.addf %214, %414 : vector<1x16xf32>
    %416 = tpu.concatenate %213, %415 in 0 : vector<1x16xf32>, vector<1x16xf32> -> vector<2x16xf32>
    %c0_128 = arith.constant 0 : index
    %c0_129 = arith.constant 0 : index
    %c0_130 = arith.constant 0 : index
    %417 = vector.load %arg10[%c0_128, %c0_129, %c0_130] : memref<3x16x32xf32, #tpu.memory_space<vmem>>, vector<1x16x32xf32>
    %418 = vector.shape_cast %417 : vector<1x16x32xf32> to vector<16x32xf32>
    %cst_131 = arith.constant dense<0.000000e+00> : vector<2x32xf32>
    %419 = tpu.matmul %416, %418, %cst_131 {dimension_numbers = #tpu.dot_dimension_numbers<[1], [0], [0], [1], [0, 0, 1, 1], [], []>} : vector<2x16xf32>, vector<16x32xf32>, vector<2x32xf32> -> vector<2x32xf32>
    %c0_132 = arith.constant 0 : index
    %c0_133 = arith.constant 0 : index
    %c0_134 = arith.constant 0 : index
    %420 = vector.load %arg11[%c0_132, %c0_133, %c0_134] : memref<3x1x32xf32, #tpu.memory_space<vmem>>, vector<1x1x32xf32>
    %421 = vector.shape_cast %420 : vector<1x1x32xf32> to vector<1x32xf32>
    %422 = vector.broadcast %421 : vector<1x32xf32> to vector<2x32xf32>
    %423 = arith.addf %419, %422 : vector<2x32xf32>
    %cst_135 = arith.constant 0.000000e+00 : f32
    %424 = vector.broadcast %cst_135 : f32 to vector<2x32xf32>
    %425 = arith.maximumf %423, %424 : vector<2x32xf32>
    %c0_136 = arith.constant 0 : index
    %c0_137 = arith.constant 0 : index
    %c0_138 = arith.constant 0 : index
    %426 = vector.load %arg12[%c0_136, %c0_137, %c0_138] : memref<3x1x32xf32, #tpu.memory_space<vmem>>, vector<1x1x32xf32>
    %427 = vector.shape_cast %426 : vector<1x1x32xf32> to vector<1x32xf32>
    %c0_139 = arith.constant 0 : index
    %c0_140 = arith.constant 0 : index
    %c0_141 = arith.constant 0 : index
    %428 = vector.load %arg13[%c0_139, %c0_140, %c0_141] : memref<3x1x32xf32, #tpu.memory_space<vmem>>, vector<1x1x32xf32>
    %429 = vector.shape_cast %428 : vector<1x1x32xf32> to vector<1x32xf32>
    %cst_142 = arith.constant dense<0.000000e+00> : vector<2xf32>
    %430 = vector.multi_reduction <add>, %425, %cst_142 [1] : vector<2x32xf32> to vector<2xf32>
    %431 = vector.shape_cast %430 : vector<2xf32> to vector<2x1xf32>
    %cst_143 = arith.constant 3.200000e+01 : f32
    %432 = vector.broadcast %cst_143 : f32 to vector<2x1xf32>
    %433 = arith.divf %431, %432 : vector<2x1xf32>
    %434 = vector.broadcast %433 : vector<2x1xf32> to vector<2x32xf32>
    %435 = arith.subf %425, %434 : vector<2x32xf32>
    %436 = arith.mulf %435, %435 : vector<2x32xf32>
    %cst_144 = arith.constant dense<0.000000e+00> : vector<2xf32>
    %437 = vector.multi_reduction <add>, %436, %cst_144 [1] : vector<2x32xf32> to vector<2xf32>
    %438 = vector.shape_cast %437 : vector<2xf32> to vector<2x1xf32>
    %cst_145 = arith.constant 3.200000e+01 : f32
    %439 = vector.broadcast %cst_145 : f32 to vector<2x1xf32>
    %440 = arith.divf %438, %439 : vector<2x1xf32>
    %441 = vector.broadcast %433 : vector<2x1xf32> to vector<2x32xf32>
    %442 = arith.subf %425, %441 : vector<2x32xf32>
    %cst_146 = arith.constant 9.99999974E-6 : f32
    %443 = vector.broadcast %cst_146 : f32 to vector<2x1xf32>
    %444 = arith.addf %440, %443 : vector<2x1xf32>
    %445 = math.rsqrt %444 : vector<2x1xf32>
    %446 = vector.broadcast %445 : vector<2x1xf32> to vector<2x32xf32>
    %447 = arith.mulf %442, %446 : vector<2x32xf32>
    %448 = vector.broadcast %427 : vector<1x32xf32> to vector<2x32xf32>
    %449 = arith.mulf %447, %448 : vector<2x32xf32>
    %450 = vector.broadcast %429 : vector<1x32xf32> to vector<2x32xf32>
    %451 = arith.addf %449, %450 : vector<2x32xf32>
    %c0_147 = arith.constant 0 : index
    %c0_148 = arith.constant 0 : index
    %c0_149 = arith.constant 0 : index
    %452 = vector.load %arg14[%c0_147, %c0_148, %c0_149] : memref<3x32x32xf32, #tpu.memory_space<vmem>>, vector<1x32x32xf32>
    %453 = vector.shape_cast %452 : vector<1x32x32xf32> to vector<32x32xf32>
    %cst_150 = arith.constant dense<0.000000e+00> : vector<2x32xf32>
    %454 = tpu.matmul %451, %453, %cst_150 {dimension_numbers = #tpu.dot_dimension_numbers<[1], [0], [0], [1], [0, 0, 1, 1], [], []>} : vector<2x32xf32>, vector<32x32xf32>, vector<2x32xf32> -> vector<2x32xf32>
    %c0_151 = arith.constant 0 : index
    %c0_152 = arith.constant 0 : index
    %c0_153 = arith.constant 0 : index
    %455 = vector.load %arg15[%c0_151, %c0_152, %c0_153] : memref<3x1x32xf32, #tpu.memory_space<vmem>>, vector<1x1x32xf32>
    %456 = vector.shape_cast %455 : vector<1x1x32xf32> to vector<1x32xf32>
    %457 = vector.broadcast %456 : vector<1x32xf32> to vector<2x32xf32>
    %458 = arith.addf %454, %457 : vector<2x32xf32>
    %cst_154 = arith.constant 0.000000e+00 : f32
    %459 = vector.broadcast %cst_154 : f32 to vector<2x32xf32>
    %460 = arith.maximumf %458, %459 : vector<2x32xf32>
    %c0_155 = arith.constant 0 : index
    %c0_156 = arith.constant 0 : index
    %c0_157 = arith.constant 0 : index
    %461 = vector.load %arg16[%c0_155, %c0_156, %c0_157] : memref<3x1x32xf32, #tpu.memory_space<vmem>>, vector<1x1x32xf32>
    %462 = vector.shape_cast %461 : vector<1x1x32xf32> to vector<1x32xf32>
    %c0_158 = arith.constant 0 : index
    %c0_159 = arith.constant 0 : index
    %c0_160 = arith.constant 0 : index
    %463 = vector.load %arg17[%c0_158, %c0_159, %c0_160] : memref<3x1x32xf32, #tpu.memory_space<vmem>>, vector<1x1x32xf32>
    %464 = vector.shape_cast %463 : vector<1x1x32xf32> to vector<1x32xf32>
    %cst_161 = arith.constant dense<0.000000e+00> : vector<2xf32>
    %465 = vector.multi_reduction <add>, %460, %cst_161 [1] : vector<2x32xf32> to vector<2xf32>
    %466 = vector.shape_cast %465 : vector<2xf32> to vector<2x1xf32>
    %cst_162 = arith.constant 3.200000e+01 : f32
    %467 = vector.broadcast %cst_162 : f32 to vector<2x1xf32>
    %468 = arith.divf %466, %467 : vector<2x1xf32>
    %469 = vector.broadcast %468 : vector<2x1xf32> to vector<2x32xf32>
    %470 = arith.subf %460, %469 : vector<2x32xf32>
    %471 = arith.mulf %470, %470 : vector<2x32xf32>
    %cst_163 = arith.constant dense<0.000000e+00> : vector<2xf32>
    %472 = vector.multi_reduction <add>, %471, %cst_163 [1] : vector<2x32xf32> to vector<2xf32>
    %473 = vector.shape_cast %472 : vector<2xf32> to vector<2x1xf32>
    %cst_164 = arith.constant 3.200000e+01 : f32
    %474 = vector.broadcast %cst_164 : f32 to vector<2x1xf32>
    %475 = arith.divf %473, %474 : vector<2x1xf32>
    %476 = vector.broadcast %468 : vector<2x1xf32> to vector<2x32xf32>
    %477 = arith.subf %460, %476 : vector<2x32xf32>
    %cst_165 = arith.constant 9.99999974E-6 : f32
    %478 = vector.broadcast %cst_165 : f32 to vector<2x1xf32>
    %479 = arith.addf %475, %478 : vector<2x1xf32>
    %480 = math.rsqrt %479 : vector<2x1xf32>
    %481 = vector.broadcast %480 : vector<2x1xf32> to vector<2x32xf32>
    %482 = arith.mulf %477, %481 : vector<2x32xf32>
    %483 = vector.broadcast %462 : vector<1x32xf32> to vector<2x32xf32>
    %484 = arith.mulf %482, %483 : vector<2x32xf32>
    %485 = vector.broadcast %464 : vector<1x32xf32> to vector<2x32xf32>
    %486 = arith.addf %484, %485 : vector<2x32xf32>
    %487 = arith.addf %451, %486 : vector<2x32xf32>
    %c0_166 = arith.constant 0 : index
    %c0_167 = arith.constant 0 : index
    %c0_168 = arith.constant 0 : index
    %488 = vector.load %arg18[%c0_166, %c0_167, %c0_168] : memref<3x32x8xf32, #tpu.memory_space<vmem>>, vector<1x32x8xf32>
    %489 = vector.shape_cast %488 : vector<1x32x8xf32> to vector<32x8xf32>
    %cst_169 = arith.constant dense<0.000000e+00> : vector<2x8xf32>
    %490 = tpu.matmul %487, %489, %cst_169 {dimension_numbers = #tpu.dot_dimension_numbers<[1], [0], [0], [1], [0, 0, 1, 1], [], []>} : vector<2x32xf32>, vector<32x8xf32>, vector<2x8xf32> -> vector<2x8xf32>
    %c0_170 = arith.constant 0 : index
    %c0_171 = arith.constant 0 : index
    %c0_172 = arith.constant 0 : index
    %491 = vector.load %arg19[%c0_170, %c0_171, %c0_172] : memref<3x1x8xf32, #tpu.memory_space<vmem>>, vector<1x1x8xf32>
    %492 = vector.shape_cast %491 : vector<1x1x8xf32> to vector<1x8xf32>
    %493 = vector.broadcast %492 : vector<1x8xf32> to vector<2x8xf32>
    %494 = arith.addf %490, %493 : vector<2x8xf32>
    %c1_173 = arith.constant 1 : index
    %c0_174 = arith.constant 0 : index
    %c0_175 = arith.constant 0 : index
    %495 = vector.load %arg5[%c1_173, %c0_174, %c0_175] : memref<3x64x1xf32, #tpu.memory_space<vmem>>, vector<1x64x1xf32>
    %496 = vector.shape_cast %495 : vector<1x64x1xf32> to vector<64x1xf32>
    %c1_176 = arith.constant 1 : index
    %c0_177 = arith.constant 0 : index
    %c0_178 = arith.constant 0 : index
    %497 = vector.load %arg6[%c1_176, %c0_177, %c0_178] : memref<3x4x16xf32, #tpu.memory_space<vmem>>, vector<1x4x16xf32>
    %498 = vector.shape_cast %497 : vector<1x4x16xf32> to vector<4x16xf32>
    %c1_179 = arith.constant 1 : index
    %c0_180 = arith.constant 0 : index
    %c0_181 = arith.constant 0 : index
    %499 = vector.load %arg7[%c1_179, %c0_180, %c0_181] : memref<3x1x16xf32, #tpu.memory_space<vmem>>, vector<1x1x16xf32>
    %500 = vector.shape_cast %499 : vector<1x1x16xf32> to vector<1x16xf32>
    %c1_182 = arith.constant 1 : index
    %c0_183 = arith.constant 0 : index
    %c0_184 = arith.constant 0 : index
    %501 = vector.load %arg8[%c1_182, %c0_183, %c0_184] : memref<3x1x16xf32, #tpu.memory_space<vmem>>, vector<1x1x16xf32>
    %502 = vector.shape_cast %501 : vector<1x1x16xf32> to vector<1x16xf32>
    %c1_185 = arith.constant 1 : index
    %c0_186 = arith.constant 0 : index
    %c0_187 = arith.constant 0 : index
    %503 = vector.load %arg9[%c1_185, %c0_186, %c0_187] : memref<3x1x16xf32, #tpu.memory_space<vmem>>, vector<1x1x16xf32>
    %504 = vector.shape_cast %503 : vector<1x1x16xf32> to vector<1x16xf32>
    %505 = vector.extract_strided_slice %0 {offsets = [0, 0], sizes = [1, 16], strides = [1, 1]} : vector<2x16xf32> to vector<1x16xf32>
    %506 = vector.extract_strided_slice %1 {offsets = [0, 0], sizes = [16, 1], strides = [1, 1]} : vector<16x2xf32> to vector<16x1xf32>
    %507 = vector.broadcast %506 : vector<16x1xf32> to vector<16x16xf32>
    %508 = vector.broadcast %505 : vector<1x16xf32> to vector<16x16xf32>
    %509 = arith.mulf %507, %508 : vector<16x16xf32>
    %510 = tpu.concatenate %509, %509, %509, %509 in 0 : vector<16x16xf32>, vector<16x16xf32>, vector<16x16xf32>, vector<16x16xf32> -> vector<64x16xf32>
    %511 = vector.broadcast %496 : vector<64x1xf32> to vector<64x16xf32>
    %512 = arith.mulf %510, %511 : vector<64x16xf32>
    %cst_188 = arith.constant dense<0xFF800000> : vector<64xf32>
    %513 = vector.multi_reduction <maximumf>, %512, %cst_188 [1] : vector<64x16xf32> to vector<64xf32>
    %514 = vector.shape_cast %513 : vector<64xf32> to vector<64x1xf32>
    %515 = vector.broadcast %514 : vector<64x1xf32> to vector<64x16xf32>
    %516 = arith.subf %512, %515 : vector<64x16xf32>
    %517 = math.exp %516 : vector<64x16xf32>
    %cst_189 = arith.constant dense<0.000000e+00> : vector<64xf32>
    %518 = vector.multi_reduction <add>, %517, %cst_189 [1] : vector<64x16xf32> to vector<64xf32>
    %519 = vector.shape_cast %518 : vector<64xf32> to vector<64x1xf32>
    %520 = tpu.reciprocal %519 {approx = true} : vector<64x1xf32> -> vector<64x1xf32>
    %521 = vector.broadcast %520 : vector<64x1xf32> to vector<64x16xf32>
    %522 = arith.mulf %517, %521 : vector<64x16xf32>
    %523 = vector.extract_strided_slice %522 {offsets = [0, 0], sizes = [16, 16], strides = [1, 1]} : vector<64x16xf32> to vector<16x16xf32>
    %524 = vector.extract_strided_slice %522 {offsets = [16, 0], sizes = [16, 16], strides = [1, 1]} : vector<64x16xf32> to vector<16x16xf32>
    %525 = vector.extract_strided_slice %522 {offsets = [32, 0], sizes = [16, 16], strides = [1, 1]} : vector<64x16xf32> to vector<16x16xf32>
    %526 = vector.extract_strided_slice %522 {offsets = [48, 0], sizes = [16, 16], strides = [1, 1]} : vector<64x16xf32> to vector<16x16xf32>
    %c1_190 = arith.constant 1 : index
    %c0_191 = arith.constant 0 : index
    %527 = memref.load %arg2[%c1_190, %c0_191] : memref<3x16xf32, #tpu.memory_space<smem>>
    %528 = vector.broadcast %527 : f32 to vector<16x16xf32>
    %529 = arith.mulf %523, %528 : vector<16x16xf32>
    %c1_192 = arith.constant 1 : index
    %c4_193 = arith.constant 4 : index
    %530 = memref.load %arg2[%c1_192, %c4_193] : memref<3x16xf32, #tpu.memory_space<smem>>
    %531 = vector.broadcast %530 : f32 to vector<16x16xf32>
    %532 = arith.mulf %524, %531 : vector<16x16xf32>
    %533 = arith.addf %529, %532 : vector<16x16xf32>
    %c1_194 = arith.constant 1 : index
    %c8_195 = arith.constant 8 : index
    %534 = memref.load %arg2[%c1_194, %c8_195] : memref<3x16xf32, #tpu.memory_space<smem>>
    %535 = vector.broadcast %534 : f32 to vector<16x16xf32>
    %536 = arith.mulf %525, %535 : vector<16x16xf32>
    %537 = arith.addf %533, %536 : vector<16x16xf32>
    %c1_196 = arith.constant 1 : index
    %c12_197 = arith.constant 12 : index
    %538 = memref.load %arg2[%c1_196, %c12_197] : memref<3x16xf32, #tpu.memory_space<smem>>
    %539 = vector.broadcast %538 : f32 to vector<16x16xf32>
    %540 = arith.mulf %526, %539 : vector<16x16xf32>
    %541 = arith.addf %537, %540 : vector<16x16xf32>
    %c1_198 = arith.constant 1 : index
    %c1_199 = arith.constant 1 : index
    %542 = memref.load %arg2[%c1_198, %c1_199] : memref<3x16xf32, #tpu.memory_space<smem>>
    %543 = vector.broadcast %542 : f32 to vector<16x16xf32>
    %544 = arith.mulf %523, %543 : vector<16x16xf32>
    %c1_200 = arith.constant 1 : index
    %c5_201 = arith.constant 5 : index
    %545 = memref.load %arg2[%c1_200, %c5_201] : memref<3x16xf32, #tpu.memory_space<smem>>
    %546 = vector.broadcast %545 : f32 to vector<16x16xf32>
    %547 = arith.mulf %524, %546 : vector<16x16xf32>
    %548 = arith.addf %544, %547 : vector<16x16xf32>
    %c1_202 = arith.constant 1 : index
    %c9_203 = arith.constant 9 : index
    %549 = memref.load %arg2[%c1_202, %c9_203] : memref<3x16xf32, #tpu.memory_space<smem>>
    %550 = vector.broadcast %549 : f32 to vector<16x16xf32>
    %551 = arith.mulf %525, %550 : vector<16x16xf32>
    %552 = arith.addf %548, %551 : vector<16x16xf32>
    %c1_204 = arith.constant 1 : index
    %c13_205 = arith.constant 13 : index
    %553 = memref.load %arg2[%c1_204, %c13_205] : memref<3x16xf32, #tpu.memory_space<smem>>
    %554 = vector.broadcast %553 : f32 to vector<16x16xf32>
    %555 = arith.mulf %526, %554 : vector<16x16xf32>
    %556 = arith.addf %552, %555 : vector<16x16xf32>
    %c1_206 = arith.constant 1 : index
    %c2_207 = arith.constant 2 : index
    %557 = memref.load %arg2[%c1_206, %c2_207] : memref<3x16xf32, #tpu.memory_space<smem>>
    %558 = vector.broadcast %557 : f32 to vector<16x16xf32>
    %559 = arith.mulf %523, %558 : vector<16x16xf32>
    %c1_208 = arith.constant 1 : index
    %c6_209 = arith.constant 6 : index
    %560 = memref.load %arg2[%c1_208, %c6_209] : memref<3x16xf32, #tpu.memory_space<smem>>
    %561 = vector.broadcast %560 : f32 to vector<16x16xf32>
    %562 = arith.mulf %524, %561 : vector<16x16xf32>
    %563 = arith.addf %559, %562 : vector<16x16xf32>
    %c1_210 = arith.constant 1 : index
    %c10_211 = arith.constant 10 : index
    %564 = memref.load %arg2[%c1_210, %c10_211] : memref<3x16xf32, #tpu.memory_space<smem>>
    %565 = vector.broadcast %564 : f32 to vector<16x16xf32>
    %566 = arith.mulf %525, %565 : vector<16x16xf32>
    %567 = arith.addf %563, %566 : vector<16x16xf32>
    %c1_212 = arith.constant 1 : index
    %c14_213 = arith.constant 14 : index
    %568 = memref.load %arg2[%c1_212, %c14_213] : memref<3x16xf32, #tpu.memory_space<smem>>
    %569 = vector.broadcast %568 : f32 to vector<16x16xf32>
    %570 = arith.mulf %526, %569 : vector<16x16xf32>
    %571 = arith.addf %567, %570 : vector<16x16xf32>
    %c1_214 = arith.constant 1 : index
    %c3_215 = arith.constant 3 : index
    %572 = memref.load %arg2[%c1_214, %c3_215] : memref<3x16xf32, #tpu.memory_space<smem>>
    %573 = vector.broadcast %572 : f32 to vector<16x16xf32>
    %574 = arith.mulf %523, %573 : vector<16x16xf32>
    %c1_216 = arith.constant 1 : index
    %c7_217 = arith.constant 7 : index
    %575 = memref.load %arg2[%c1_216, %c7_217] : memref<3x16xf32, #tpu.memory_space<smem>>
    %576 = vector.broadcast %575 : f32 to vector<16x16xf32>
    %577 = arith.mulf %524, %576 : vector<16x16xf32>
    %578 = arith.addf %574, %577 : vector<16x16xf32>
    %c1_218 = arith.constant 1 : index
    %c11_219 = arith.constant 11 : index
    %579 = memref.load %arg2[%c1_218, %c11_219] : memref<3x16xf32, #tpu.memory_space<smem>>
    %580 = vector.broadcast %579 : f32 to vector<16x16xf32>
    %581 = arith.mulf %525, %580 : vector<16x16xf32>
    %582 = arith.addf %578, %581 : vector<16x16xf32>
    %c1_220 = arith.constant 1 : index
    %c15_221 = arith.constant 15 : index
    %583 = memref.load %arg2[%c1_220, %c15_221] : memref<3x16xf32, #tpu.memory_space<smem>>
    %584 = vector.broadcast %583 : f32 to vector<16x16xf32>
    %585 = arith.mulf %526, %584 : vector<16x16xf32>
    %586 = arith.addf %582, %585 : vector<16x16xf32>
    %587 = arith.addf %541, %556 : vector<16x16xf32>
    %588 = arith.addf %587, %571 : vector<16x16xf32>
    %589 = arith.addf %588, %586 : vector<16x16xf32>
    %cst_222 = arith.constant 2.500000e-01 : f32
    %590 = vector.broadcast %cst_222 : f32 to vector<16x16xf32>
    %591 = arith.mulf %589, %590 : vector<16x16xf32>
    %592 = arith.subf %541, %591 : vector<16x16xf32>
    %593 = arith.mulf %592, %592 : vector<16x16xf32>
    %594 = arith.subf %556, %591 : vector<16x16xf32>
    %595 = arith.mulf %594, %594 : vector<16x16xf32>
    %596 = arith.addf %593, %595 : vector<16x16xf32>
    %597 = arith.subf %571, %591 : vector<16x16xf32>
    %598 = arith.mulf %597, %597 : vector<16x16xf32>
    %599 = arith.addf %596, %598 : vector<16x16xf32>
    %600 = arith.subf %586, %591 : vector<16x16xf32>
    %601 = arith.mulf %600, %600 : vector<16x16xf32>
    %602 = arith.addf %599, %601 : vector<16x16xf32>
    %cst_223 = arith.constant 2.500000e-01 : f32
    %603 = vector.broadcast %cst_223 : f32 to vector<16x16xf32>
    %604 = arith.mulf %602, %603 : vector<16x16xf32>
    %cst_224 = arith.constant 9.99999974E-6 : f32
    %605 = vector.broadcast %cst_224 : f32 to vector<16x16xf32>
    %606 = arith.addf %604, %605 : vector<16x16xf32>
    %607 = math.rsqrt %606 : vector<16x16xf32>
    %cst_225 = arith.constant 1.600000e+01 : f32
    %608 = vector.broadcast %cst_225 : f32 to vector<1x16xf32>
    %609 = arith.mulf %500, %608 : vector<1x16xf32>
    %610 = arith.subf %541, %591 : vector<16x16xf32>
    %611 = arith.mulf %610, %607 : vector<16x16xf32>
    %c1_226 = arith.constant 1 : index
    %c0_227 = arith.constant 0 : index
    %612 = memref.load %arg3[%c1_226, %c0_227] : memref<3x4xf32, #tpu.memory_space<smem>>
    %613 = vector.broadcast %612 : f32 to vector<16x16xf32>
    %614 = arith.mulf %611, %613 : vector<16x16xf32>
    %c1_228 = arith.constant 1 : index
    %c0_229 = arith.constant 0 : index
    %615 = memref.load %arg4[%c1_228, %c0_229] : memref<3x4xf32, #tpu.memory_space<smem>>
    %616 = vector.broadcast %615 : f32 to vector<16x16xf32>
    %617 = arith.addf %614, %616 : vector<16x16xf32>
    %618 = vector.broadcast %505 : vector<1x16xf32> to vector<16x16xf32>
    %619 = arith.mulf %617, %618 : vector<16x16xf32>
    %620 = vector.shape_cast %619 : vector<16x16xf32> to vector<1x16x16xf32>
    %cst_230 = arith.constant dense<0.000000e+00> : vector<1xf32>
    %621 = vector.multi_reduction <add>, %620, %cst_230 [1, 2] : vector<1x16x16xf32> to vector<1xf32>
    %622 = vector.shape_cast %621 : vector<1xf32> to vector<1x1x1xf32>
    %623 = vector.extract %622[0, 0, 0] : f32 from vector<1x1x1xf32>
    %624 = vector.broadcast %623 : f32 to vector<1x1xf32>
    %625 = vector.extract_strided_slice %498 {offsets = [0, 0], sizes = [1, 16], strides = [1, 1]} : vector<4x16xf32> to vector<1x16xf32>
    %626 = vector.broadcast %624 : vector<1x1xf32> to vector<1x16xf32>
    %627 = arith.mulf %626, %625 : vector<1x16xf32>
    %628 = arith.addf %609, %627 : vector<1x16xf32>
    %629 = arith.subf %556, %591 : vector<16x16xf32>
    %630 = arith.mulf %629, %607 : vector<16x16xf32>
    %c1_231 = arith.constant 1 : index
    %c1_232 = arith.constant 1 : index
    %631 = memref.load %arg3[%c1_231, %c1_232] : memref<3x4xf32, #tpu.memory_space<smem>>
    %632 = vector.broadcast %631 : f32 to vector<16x16xf32>
    %633 = arith.mulf %630, %632 : vector<16x16xf32>
    %c1_233 = arith.constant 1 : index
    %c1_234 = arith.constant 1 : index
    %634 = memref.load %arg4[%c1_233, %c1_234] : memref<3x4xf32, #tpu.memory_space<smem>>
    %635 = vector.broadcast %634 : f32 to vector<16x16xf32>
    %636 = arith.addf %633, %635 : vector<16x16xf32>
    %637 = vector.broadcast %505 : vector<1x16xf32> to vector<16x16xf32>
    %638 = arith.mulf %636, %637 : vector<16x16xf32>
    %639 = vector.shape_cast %638 : vector<16x16xf32> to vector<1x16x16xf32>
    %cst_235 = arith.constant dense<0.000000e+00> : vector<1xf32>
    %640 = vector.multi_reduction <add>, %639, %cst_235 [1, 2] : vector<1x16x16xf32> to vector<1xf32>
    %641 = vector.shape_cast %640 : vector<1xf32> to vector<1x1x1xf32>
    %642 = vector.extract %641[0, 0, 0] : f32 from vector<1x1x1xf32>
    %643 = vector.broadcast %642 : f32 to vector<1x1xf32>
    %644 = vector.extract_strided_slice %498 {offsets = [1, 0], sizes = [1, 16], strides = [1, 1]} : vector<4x16xf32> to vector<1x16xf32>
    %645 = vector.broadcast %643 : vector<1x1xf32> to vector<1x16xf32>
    %646 = arith.mulf %645, %644 : vector<1x16xf32>
    %647 = arith.addf %628, %646 : vector<1x16xf32>
    %648 = arith.subf %571, %591 : vector<16x16xf32>
    %649 = arith.mulf %648, %607 : vector<16x16xf32>
    %c1_236 = arith.constant 1 : index
    %c2_237 = arith.constant 2 : index
    %650 = memref.load %arg3[%c1_236, %c2_237] : memref<3x4xf32, #tpu.memory_space<smem>>
    %651 = vector.broadcast %650 : f32 to vector<16x16xf32>
    %652 = arith.mulf %649, %651 : vector<16x16xf32>
    %c1_238 = arith.constant 1 : index
    %c2_239 = arith.constant 2 : index
    %653 = memref.load %arg4[%c1_238, %c2_239] : memref<3x4xf32, #tpu.memory_space<smem>>
    %654 = vector.broadcast %653 : f32 to vector<16x16xf32>
    %655 = arith.addf %652, %654 : vector<16x16xf32>
    %656 = vector.broadcast %505 : vector<1x16xf32> to vector<16x16xf32>
    %657 = arith.mulf %655, %656 : vector<16x16xf32>
    %658 = vector.shape_cast %657 : vector<16x16xf32> to vector<1x16x16xf32>
    %cst_240 = arith.constant dense<0.000000e+00> : vector<1xf32>
    %659 = vector.multi_reduction <add>, %658, %cst_240 [1, 2] : vector<1x16x16xf32> to vector<1xf32>
    %660 = vector.shape_cast %659 : vector<1xf32> to vector<1x1x1xf32>
    %661 = vector.extract %660[0, 0, 0] : f32 from vector<1x1x1xf32>
    %662 = vector.broadcast %661 : f32 to vector<1x1xf32>
    %663 = vector.extract_strided_slice %498 {offsets = [2, 0], sizes = [1, 16], strides = [1, 1]} : vector<4x16xf32> to vector<1x16xf32>
    %664 = vector.broadcast %662 : vector<1x1xf32> to vector<1x16xf32>
    %665 = arith.mulf %664, %663 : vector<1x16xf32>
    %666 = arith.addf %647, %665 : vector<1x16xf32>
    %667 = arith.subf %586, %591 : vector<16x16xf32>
    %668 = arith.mulf %667, %607 : vector<16x16xf32>
    %c1_241 = arith.constant 1 : index
    %c3_242 = arith.constant 3 : index
    %669 = memref.load %arg3[%c1_241, %c3_242] : memref<3x4xf32, #tpu.memory_space<smem>>
    %670 = vector.broadcast %669 : f32 to vector<16x16xf32>
    %671 = arith.mulf %668, %670 : vector<16x16xf32>
    %c1_243 = arith.constant 1 : index
    %c3_244 = arith.constant 3 : index
    %672 = memref.load %arg4[%c1_243, %c3_244] : memref<3x4xf32, #tpu.memory_space<smem>>
    %673 = vector.broadcast %672 : f32 to vector<16x16xf32>
    %674 = arith.addf %671, %673 : vector<16x16xf32>
    %675 = vector.broadcast %505 : vector<1x16xf32> to vector<16x16xf32>
    %676 = arith.mulf %674, %675 : vector<16x16xf32>
    %677 = vector.shape_cast %676 : vector<16x16xf32> to vector<1x16x16xf32>
    %cst_245 = arith.constant dense<0.000000e+00> : vector<1xf32>
    %678 = vector.multi_reduction <add>, %677, %cst_245 [1, 2] : vector<1x16x16xf32> to vector<1xf32>
    %679 = vector.shape_cast %678 : vector<1xf32> to vector<1x1x1xf32>
    %680 = vector.extract %679[0, 0, 0] : f32 from vector<1x1x1xf32>
    %681 = vector.broadcast %680 : f32 to vector<1x1xf32>
    %682 = vector.extract_strided_slice %498 {offsets = [3, 0], sizes = [1, 16], strides = [1, 1]} : vector<4x16xf32> to vector<1x16xf32>
    %683 = vector.broadcast %681 : vector<1x1xf32> to vector<1x16xf32>
    %684 = arith.mulf %683, %682 : vector<1x16xf32>
    %685 = arith.addf %666, %684 : vector<1x16xf32>
    %cst_246 = arith.constant dense<0.000000e+00> : vector<1xf32>
    %686 = vector.multi_reduction <add>, %685, %cst_246 [1] : vector<1x16xf32> to vector<1xf32>
    %687 = vector.shape_cast %686 : vector<1xf32> to vector<1x1xf32>
    %cst_247 = arith.constant 1.600000e+01 : f32
    %688 = vector.broadcast %cst_247 : f32 to vector<1x1xf32>
    %689 = arith.divf %687, %688 : vector<1x1xf32>
    %690 = vector.broadcast %689 : vector<1x1xf32> to vector<1x16xf32>
    %691 = arith.subf %685, %690 : vector<1x16xf32>
    %692 = arith.mulf %691, %691 : vector<1x16xf32>
    %cst_248 = arith.constant dense<0.000000e+00> : vector<1xf32>
    %693 = vector.multi_reduction <add>, %692, %cst_248 [1] : vector<1x16xf32> to vector<1xf32>
    %694 = vector.shape_cast %693 : vector<1xf32> to vector<1x1xf32>
    %cst_249 = arith.constant 1.600000e+01 : f32
    %695 = vector.broadcast %cst_249 : f32 to vector<1x1xf32>
    %696 = arith.divf %694, %695 : vector<1x1xf32>
    %697 = vector.broadcast %689 : vector<1x1xf32> to vector<1x16xf32>
    %698 = arith.subf %685, %697 : vector<1x16xf32>
    %cst_250 = arith.constant 9.99999974E-6 : f32
    %699 = vector.broadcast %cst_250 : f32 to vector<1x1xf32>
    %700 = arith.addf %696, %699 : vector<1x1xf32>
    %701 = math.rsqrt %700 : vector<1x1xf32>
    %702 = vector.broadcast %701 : vector<1x1xf32> to vector<1x16xf32>
    %703 = arith.mulf %698, %702 : vector<1x16xf32>
    %704 = arith.mulf %703, %502 : vector<1x16xf32>
    %705 = arith.addf %704, %504 : vector<1x16xf32>
    %706 = arith.addf %505, %705 : vector<1x16xf32>
    %707 = vector.extract_strided_slice %0 {offsets = [1, 0], sizes = [1, 16], strides = [1, 1]} : vector<2x16xf32> to vector<1x16xf32>
    %708 = vector.extract_strided_slice %1 {offsets = [0, 1], sizes = [16, 1], strides = [1, 1]} : vector<16x2xf32> to vector<16x1xf32>
    %709 = vector.broadcast %708 : vector<16x1xf32> to vector<16x16xf32>
    %710 = vector.broadcast %707 : vector<1x16xf32> to vector<16x16xf32>
    %711 = arith.mulf %709, %710 : vector<16x16xf32>
    %712 = tpu.concatenate %711, %711, %711, %711 in 0 : vector<16x16xf32>, vector<16x16xf32>, vector<16x16xf32>, vector<16x16xf32> -> vector<64x16xf32>
    %713 = vector.broadcast %496 : vector<64x1xf32> to vector<64x16xf32>
    %714 = arith.mulf %712, %713 : vector<64x16xf32>
    %cst_251 = arith.constant dense<0xFF800000> : vector<64xf32>
    %715 = vector.multi_reduction <maximumf>, %714, %cst_251 [1] : vector<64x16xf32> to vector<64xf32>
    %716 = vector.shape_cast %715 : vector<64xf32> to vector<64x1xf32>
    %717 = vector.broadcast %716 : vector<64x1xf32> to vector<64x16xf32>
    %718 = arith.subf %714, %717 : vector<64x16xf32>
    %719 = math.exp %718 : vector<64x16xf32>
    %cst_252 = arith.constant dense<0.000000e+00> : vector<64xf32>
    %720 = vector.multi_reduction <add>, %719, %cst_252 [1] : vector<64x16xf32> to vector<64xf32>
    %721 = vector.shape_cast %720 : vector<64xf32> to vector<64x1xf32>
    %722 = tpu.reciprocal %721 {approx = true} : vector<64x1xf32> -> vector<64x1xf32>
    %723 = vector.broadcast %722 : vector<64x1xf32> to vector<64x16xf32>
    %724 = arith.mulf %719, %723 : vector<64x16xf32>
    %725 = vector.extract_strided_slice %724 {offsets = [0, 0], sizes = [16, 16], strides = [1, 1]} : vector<64x16xf32> to vector<16x16xf32>
    %726 = vector.extract_strided_slice %724 {offsets = [16, 0], sizes = [16, 16], strides = [1, 1]} : vector<64x16xf32> to vector<16x16xf32>
    %727 = vector.extract_strided_slice %724 {offsets = [32, 0], sizes = [16, 16], strides = [1, 1]} : vector<64x16xf32> to vector<16x16xf32>
    %728 = vector.extract_strided_slice %724 {offsets = [48, 0], sizes = [16, 16], strides = [1, 1]} : vector<64x16xf32> to vector<16x16xf32>
    %c1_253 = arith.constant 1 : index
    %c0_254 = arith.constant 0 : index
    %729 = memref.load %arg2[%c1_253, %c0_254] : memref<3x16xf32, #tpu.memory_space<smem>>
    %730 = vector.broadcast %729 : f32 to vector<16x16xf32>
    %731 = arith.mulf %725, %730 : vector<16x16xf32>
    %c1_255 = arith.constant 1 : index
    %c4_256 = arith.constant 4 : index
    %732 = memref.load %arg2[%c1_255, %c4_256] : memref<3x16xf32, #tpu.memory_space<smem>>
    %733 = vector.broadcast %732 : f32 to vector<16x16xf32>
    %734 = arith.mulf %726, %733 : vector<16x16xf32>
    %735 = arith.addf %731, %734 : vector<16x16xf32>
    %c1_257 = arith.constant 1 : index
    %c8_258 = arith.constant 8 : index
    %736 = memref.load %arg2[%c1_257, %c8_258] : memref<3x16xf32, #tpu.memory_space<smem>>
    %737 = vector.broadcast %736 : f32 to vector<16x16xf32>
    %738 = arith.mulf %727, %737 : vector<16x16xf32>
    %739 = arith.addf %735, %738 : vector<16x16xf32>
    %c1_259 = arith.constant 1 : index
    %c12_260 = arith.constant 12 : index
    %740 = memref.load %arg2[%c1_259, %c12_260] : memref<3x16xf32, #tpu.memory_space<smem>>
    %741 = vector.broadcast %740 : f32 to vector<16x16xf32>
    %742 = arith.mulf %728, %741 : vector<16x16xf32>
    %743 = arith.addf %739, %742 : vector<16x16xf32>
    %c1_261 = arith.constant 1 : index
    %c1_262 = arith.constant 1 : index
    %744 = memref.load %arg2[%c1_261, %c1_262] : memref<3x16xf32, #tpu.memory_space<smem>>
    %745 = vector.broadcast %744 : f32 to vector<16x16xf32>
    %746 = arith.mulf %725, %745 : vector<16x16xf32>
    %c1_263 = arith.constant 1 : index
    %c5_264 = arith.constant 5 : index
    %747 = memref.load %arg2[%c1_263, %c5_264] : memref<3x16xf32, #tpu.memory_space<smem>>
    %748 = vector.broadcast %747 : f32 to vector<16x16xf32>
    %749 = arith.mulf %726, %748 : vector<16x16xf32>
    %750 = arith.addf %746, %749 : vector<16x16xf32>
    %c1_265 = arith.constant 1 : index
    %c9_266 = arith.constant 9 : index
    %751 = memref.load %arg2[%c1_265, %c9_266] : memref<3x16xf32, #tpu.memory_space<smem>>
    %752 = vector.broadcast %751 : f32 to vector<16x16xf32>
    %753 = arith.mulf %727, %752 : vector<16x16xf32>
    %754 = arith.addf %750, %753 : vector<16x16xf32>
    %c1_267 = arith.constant 1 : index
    %c13_268 = arith.constant 13 : index
    %755 = memref.load %arg2[%c1_267, %c13_268] : memref<3x16xf32, #tpu.memory_space<smem>>
    %756 = vector.broadcast %755 : f32 to vector<16x16xf32>
    %757 = arith.mulf %728, %756 : vector<16x16xf32>
    %758 = arith.addf %754, %757 : vector<16x16xf32>
    %c1_269 = arith.constant 1 : index
    %c2_270 = arith.constant 2 : index
    %759 = memref.load %arg2[%c1_269, %c2_270] : memref<3x16xf32, #tpu.memory_space<smem>>
    %760 = vector.broadcast %759 : f32 to vector<16x16xf32>
    %761 = arith.mulf %725, %760 : vector<16x16xf32>
    %c1_271 = arith.constant 1 : index
    %c6_272 = arith.constant 6 : index
    %762 = memref.load %arg2[%c1_271, %c6_272] : memref<3x16xf32, #tpu.memory_space<smem>>
    %763 = vector.broadcast %762 : f32 to vector<16x16xf32>
    %764 = arith.mulf %726, %763 : vector<16x16xf32>
    %765 = arith.addf %761, %764 : vector<16x16xf32>
    %c1_273 = arith.constant 1 : index
    %c10_274 = arith.constant 10 : index
    %766 = memref.load %arg2[%c1_273, %c10_274] : memref<3x16xf32, #tpu.memory_space<smem>>
    %767 = vector.broadcast %766 : f32 to vector<16x16xf32>
    %768 = arith.mulf %727, %767 : vector<16x16xf32>
    %769 = arith.addf %765, %768 : vector<16x16xf32>
    %c1_275 = arith.constant 1 : index
    %c14_276 = arith.constant 14 : index
    %770 = memref.load %arg2[%c1_275, %c14_276] : memref<3x16xf32, #tpu.memory_space<smem>>
    %771 = vector.broadcast %770 : f32 to vector<16x16xf32>
    %772 = arith.mulf %728, %771 : vector<16x16xf32>
    %773 = arith.addf %769, %772 : vector<16x16xf32>
    %c1_277 = arith.constant 1 : index
    %c3_278 = arith.constant 3 : index
    %774 = memref.load %arg2[%c1_277, %c3_278] : memref<3x16xf32, #tpu.memory_space<smem>>
    %775 = vector.broadcast %774 : f32 to vector<16x16xf32>
    %776 = arith.mulf %725, %775 : vector<16x16xf32>
    %c1_279 = arith.constant 1 : index
    %c7_280 = arith.constant 7 : index
    %777 = memref.load %arg2[%c1_279, %c7_280] : memref<3x16xf32, #tpu.memory_space<smem>>
    %778 = vector.broadcast %777 : f32 to vector<16x16xf32>
    %779 = arith.mulf %726, %778 : vector<16x16xf32>
    %780 = arith.addf %776, %779 : vector<16x16xf32>
    %c1_281 = arith.constant 1 : index
    %c11_282 = arith.constant 11 : index
    %781 = memref.load %arg2[%c1_281, %c11_282] : memref<3x16xf32, #tpu.memory_space<smem>>
    %782 = vector.broadcast %781 : f32 to vector<16x16xf32>
    %783 = arith.mulf %727, %782 : vector<16x16xf32>
    %784 = arith.addf %780, %783 : vector<16x16xf32>
    %c1_283 = arith.constant 1 : index
    %c15_284 = arith.constant 15 : index
    %785 = memref.load %arg2[%c1_283, %c15_284] : memref<3x16xf32, #tpu.memory_space<smem>>
    %786 = vector.broadcast %785 : f32 to vector<16x16xf32>
    %787 = arith.mulf %728, %786 : vector<16x16xf32>
    %788 = arith.addf %784, %787 : vector<16x16xf32>
    %789 = arith.addf %743, %758 : vector<16x16xf32>
    %790 = arith.addf %789, %773 : vector<16x16xf32>
    %791 = arith.addf %790, %788 : vector<16x16xf32>
    %cst_285 = arith.constant 2.500000e-01 : f32
    %792 = vector.broadcast %cst_285 : f32 to vector<16x16xf32>
    %793 = arith.mulf %791, %792 : vector<16x16xf32>
    %794 = arith.subf %743, %793 : vector<16x16xf32>
    %795 = arith.mulf %794, %794 : vector<16x16xf32>
    %796 = arith.subf %758, %793 : vector<16x16xf32>
    %797 = arith.mulf %796, %796 : vector<16x16xf32>
    %798 = arith.addf %795, %797 : vector<16x16xf32>
    %799 = arith.subf %773, %793 : vector<16x16xf32>
    %800 = arith.mulf %799, %799 : vector<16x16xf32>
    %801 = arith.addf %798, %800 : vector<16x16xf32>
    %802 = arith.subf %788, %793 : vector<16x16xf32>
    %803 = arith.mulf %802, %802 : vector<16x16xf32>
    %804 = arith.addf %801, %803 : vector<16x16xf32>
    %cst_286 = arith.constant 2.500000e-01 : f32
    %805 = vector.broadcast %cst_286 : f32 to vector<16x16xf32>
    %806 = arith.mulf %804, %805 : vector<16x16xf32>
    %cst_287 = arith.constant 9.99999974E-6 : f32
    %807 = vector.broadcast %cst_287 : f32 to vector<16x16xf32>
    %808 = arith.addf %806, %807 : vector<16x16xf32>
    %809 = math.rsqrt %808 : vector<16x16xf32>
    %cst_288 = arith.constant 1.600000e+01 : f32
    %810 = vector.broadcast %cst_288 : f32 to vector<1x16xf32>
    %811 = arith.mulf %500, %810 : vector<1x16xf32>
    %812 = arith.subf %743, %793 : vector<16x16xf32>
    %813 = arith.mulf %812, %809 : vector<16x16xf32>
    %c1_289 = arith.constant 1 : index
    %c0_290 = arith.constant 0 : index
    %814 = memref.load %arg3[%c1_289, %c0_290] : memref<3x4xf32, #tpu.memory_space<smem>>
    %815 = vector.broadcast %814 : f32 to vector<16x16xf32>
    %816 = arith.mulf %813, %815 : vector<16x16xf32>
    %c1_291 = arith.constant 1 : index
    %c0_292 = arith.constant 0 : index
    %817 = memref.load %arg4[%c1_291, %c0_292] : memref<3x4xf32, #tpu.memory_space<smem>>
    %818 = vector.broadcast %817 : f32 to vector<16x16xf32>
    %819 = arith.addf %816, %818 : vector<16x16xf32>
    %820 = vector.broadcast %707 : vector<1x16xf32> to vector<16x16xf32>
    %821 = arith.mulf %819, %820 : vector<16x16xf32>
    %822 = vector.shape_cast %821 : vector<16x16xf32> to vector<1x16x16xf32>
    %cst_293 = arith.constant dense<0.000000e+00> : vector<1xf32>
    %823 = vector.multi_reduction <add>, %822, %cst_293 [1, 2] : vector<1x16x16xf32> to vector<1xf32>
    %824 = vector.shape_cast %823 : vector<1xf32> to vector<1x1x1xf32>
    %825 = vector.extract %824[0, 0, 0] : f32 from vector<1x1x1xf32>
    %826 = vector.broadcast %825 : f32 to vector<1x1xf32>
    %827 = vector.extract_strided_slice %498 {offsets = [0, 0], sizes = [1, 16], strides = [1, 1]} : vector<4x16xf32> to vector<1x16xf32>
    %828 = vector.broadcast %826 : vector<1x1xf32> to vector<1x16xf32>
    %829 = arith.mulf %828, %827 : vector<1x16xf32>
    %830 = arith.addf %811, %829 : vector<1x16xf32>
    %831 = arith.subf %758, %793 : vector<16x16xf32>
    %832 = arith.mulf %831, %809 : vector<16x16xf32>
    %c1_294 = arith.constant 1 : index
    %c1_295 = arith.constant 1 : index
    %833 = memref.load %arg3[%c1_294, %c1_295] : memref<3x4xf32, #tpu.memory_space<smem>>
    %834 = vector.broadcast %833 : f32 to vector<16x16xf32>
    %835 = arith.mulf %832, %834 : vector<16x16xf32>
    %c1_296 = arith.constant 1 : index
    %c1_297 = arith.constant 1 : index
    %836 = memref.load %arg4[%c1_296, %c1_297] : memref<3x4xf32, #tpu.memory_space<smem>>
    %837 = vector.broadcast %836 : f32 to vector<16x16xf32>
    %838 = arith.addf %835, %837 : vector<16x16xf32>
    %839 = vector.broadcast %707 : vector<1x16xf32> to vector<16x16xf32>
    %840 = arith.mulf %838, %839 : vector<16x16xf32>
    %841 = vector.shape_cast %840 : vector<16x16xf32> to vector<1x16x16xf32>
    %cst_298 = arith.constant dense<0.000000e+00> : vector<1xf32>
    %842 = vector.multi_reduction <add>, %841, %cst_298 [1, 2] : vector<1x16x16xf32> to vector<1xf32>
    %843 = vector.shape_cast %842 : vector<1xf32> to vector<1x1x1xf32>
    %844 = vector.extract %843[0, 0, 0] : f32 from vector<1x1x1xf32>
    %845 = vector.broadcast %844 : f32 to vector<1x1xf32>
    %846 = vector.extract_strided_slice %498 {offsets = [1, 0], sizes = [1, 16], strides = [1, 1]} : vector<4x16xf32> to vector<1x16xf32>
    %847 = vector.broadcast %845 : vector<1x1xf32> to vector<1x16xf32>
    %848 = arith.mulf %847, %846 : vector<1x16xf32>
    %849 = arith.addf %830, %848 : vector<1x16xf32>
    %850 = arith.subf %773, %793 : vector<16x16xf32>
    %851 = arith.mulf %850, %809 : vector<16x16xf32>
    %c1_299 = arith.constant 1 : index
    %c2_300 = arith.constant 2 : index
    %852 = memref.load %arg3[%c1_299, %c2_300] : memref<3x4xf32, #tpu.memory_space<smem>>
    %853 = vector.broadcast %852 : f32 to vector<16x16xf32>
    %854 = arith.mulf %851, %853 : vector<16x16xf32>
    %c1_301 = arith.constant 1 : index
    %c2_302 = arith.constant 2 : index
    %855 = memref.load %arg4[%c1_301, %c2_302] : memref<3x4xf32, #tpu.memory_space<smem>>
    %856 = vector.broadcast %855 : f32 to vector<16x16xf32>
    %857 = arith.addf %854, %856 : vector<16x16xf32>
    %858 = vector.broadcast %707 : vector<1x16xf32> to vector<16x16xf32>
    %859 = arith.mulf %857, %858 : vector<16x16xf32>
    %860 = vector.shape_cast %859 : vector<16x16xf32> to vector<1x16x16xf32>
    %cst_303 = arith.constant dense<0.000000e+00> : vector<1xf32>
    %861 = vector.multi_reduction <add>, %860, %cst_303 [1, 2] : vector<1x16x16xf32> to vector<1xf32>
    %862 = vector.shape_cast %861 : vector<1xf32> to vector<1x1x1xf32>
    %863 = vector.extract %862[0, 0, 0] : f32 from vector<1x1x1xf32>
    %864 = vector.broadcast %863 : f32 to vector<1x1xf32>
    %865 = vector.extract_strided_slice %498 {offsets = [2, 0], sizes = [1, 16], strides = [1, 1]} : vector<4x16xf32> to vector<1x16xf32>
    %866 = vector.broadcast %864 : vector<1x1xf32> to vector<1x16xf32>
    %867 = arith.mulf %866, %865 : vector<1x16xf32>
    %868 = arith.addf %849, %867 : vector<1x16xf32>
    %869 = arith.subf %788, %793 : vector<16x16xf32>
    %870 = arith.mulf %869, %809 : vector<16x16xf32>
    %c1_304 = arith.constant 1 : index
    %c3_305 = arith.constant 3 : index
    %871 = memref.load %arg3[%c1_304, %c3_305] : memref<3x4xf32, #tpu.memory_space<smem>>
    %872 = vector.broadcast %871 : f32 to vector<16x16xf32>
    %873 = arith.mulf %870, %872 : vector<16x16xf32>
    %c1_306 = arith.constant 1 : index
    %c3_307 = arith.constant 3 : index
    %874 = memref.load %arg4[%c1_306, %c3_307] : memref<3x4xf32, #tpu.memory_space<smem>>
    %875 = vector.broadcast %874 : f32 to vector<16x16xf32>
    %876 = arith.addf %873, %875 : vector<16x16xf32>
    %877 = vector.broadcast %707 : vector<1x16xf32> to vector<16x16xf32>
    %878 = arith.mulf %876, %877 : vector<16x16xf32>
    %879 = vector.shape_cast %878 : vector<16x16xf32> to vector<1x16x16xf32>
    %cst_308 = arith.constant dense<0.000000e+00> : vector<1xf32>
    %880 = vector.multi_reduction <add>, %879, %cst_308 [1, 2] : vector<1x16x16xf32> to vector<1xf32>
    %881 = vector.shape_cast %880 : vector<1xf32> to vector<1x1x1xf32>
    %882 = vector.extract %881[0, 0, 0] : f32 from vector<1x1x1xf32>
    %883 = vector.broadcast %882 : f32 to vector<1x1xf32>
    %884 = vector.extract_strided_slice %498 {offsets = [3, 0], sizes = [1, 16], strides = [1, 1]} : vector<4x16xf32> to vector<1x16xf32>
    %885 = vector.broadcast %883 : vector<1x1xf32> to vector<1x16xf32>
    %886 = arith.mulf %885, %884 : vector<1x16xf32>
    %887 = arith.addf %868, %886 : vector<1x16xf32>
    %cst_309 = arith.constant dense<0.000000e+00> : vector<1xf32>
    %888 = vector.multi_reduction <add>, %887, %cst_309 [1] : vector<1x16xf32> to vector<1xf32>
    %889 = vector.shape_cast %888 : vector<1xf32> to vector<1x1xf32>
    %cst_310 = arith.constant 1.600000e+01 : f32
    %890 = vector.broadcast %cst_310 : f32 to vector<1x1xf32>
    %891 = arith.divf %889, %890 : vector<1x1xf32>
    %892 = vector.broadcast %891 : vector<1x1xf32> to vector<1x16xf32>
    %893 = arith.subf %887, %892 : vector<1x16xf32>
    %894 = arith.mulf %893, %893 : vector<1x16xf32>
    %cst_311 = arith.constant dense<0.000000e+00> : vector<1xf32>
    %895 = vector.multi_reduction <add>, %894, %cst_311 [1] : vector<1x16xf32> to vector<1xf32>
    %896 = vector.shape_cast %895 : vector<1xf32> to vector<1x1xf32>
    %cst_312 = arith.constant 1.600000e+01 : f32
    %897 = vector.broadcast %cst_312 : f32 to vector<1x1xf32>
    %898 = arith.divf %896, %897 : vector<1x1xf32>
    %899 = vector.broadcast %891 : vector<1x1xf32> to vector<1x16xf32>
    %900 = arith.subf %887, %899 : vector<1x16xf32>
    %cst_313 = arith.constant 9.99999974E-6 : f32
    %901 = vector.broadcast %cst_313 : f32 to vector<1x1xf32>
    %902 = arith.addf %898, %901 : vector<1x1xf32>
    %903 = math.rsqrt %902 : vector<1x1xf32>
    %904 = vector.broadcast %903 : vector<1x1xf32> to vector<1x16xf32>
    %905 = arith.mulf %900, %904 : vector<1x16xf32>
    %906 = arith.mulf %905, %502 : vector<1x16xf32>
    %907 = arith.addf %906, %504 : vector<1x16xf32>
    %908 = arith.addf %707, %907 : vector<1x16xf32>
    %909 = tpu.concatenate %706, %908 in 0 : vector<1x16xf32>, vector<1x16xf32> -> vector<2x16xf32>
    %c1_314 = arith.constant 1 : index
    %c0_315 = arith.constant 0 : index
    %c0_316 = arith.constant 0 : index
    %910 = vector.load %arg10[%c1_314, %c0_315, %c0_316] : memref<3x16x32xf32, #tpu.memory_space<vmem>>, vector<1x16x32xf32>
    %911 = vector.shape_cast %910 : vector<1x16x32xf32> to vector<16x32xf32>
    %cst_317 = arith.constant dense<0.000000e+00> : vector<2x32xf32>
    %912 = tpu.matmul %909, %911, %cst_317 {dimension_numbers = #tpu.dot_dimension_numbers<[1], [0], [0], [1], [0, 0, 1, 1], [], []>} : vector<2x16xf32>, vector<16x32xf32>, vector<2x32xf32> -> vector<2x32xf32>
    %c1_318 = arith.constant 1 : index
    %c0_319 = arith.constant 0 : index
    %c0_320 = arith.constant 0 : index
    %913 = vector.load %arg11[%c1_318, %c0_319, %c0_320] : memref<3x1x32xf32, #tpu.memory_space<vmem>>, vector<1x1x32xf32>
    %914 = vector.shape_cast %913 : vector<1x1x32xf32> to vector<1x32xf32>
    %915 = vector.broadcast %914 : vector<1x32xf32> to vector<2x32xf32>
    %916 = arith.addf %912, %915 : vector<2x32xf32>
    %cst_321 = arith.constant 0.000000e+00 : f32
    %917 = vector.broadcast %cst_321 : f32 to vector<2x32xf32>
    %918 = arith.maximumf %916, %917 : vector<2x32xf32>
    %c1_322 = arith.constant 1 : index
    %c0_323 = arith.constant 0 : index
    %c0_324 = arith.constant 0 : index
    %919 = vector.load %arg12[%c1_322, %c0_323, %c0_324] : memref<3x1x32xf32, #tpu.memory_space<vmem>>, vector<1x1x32xf32>
    %920 = vector.shape_cast %919 : vector<1x1x32xf32> to vector<1x32xf32>
    %c1_325 = arith.constant 1 : index
    %c0_326 = arith.constant 0 : index
    %c0_327 = arith.constant 0 : index
    %921 = vector.load %arg13[%c1_325, %c0_326, %c0_327] : memref<3x1x32xf32, #tpu.memory_space<vmem>>, vector<1x1x32xf32>
    %922 = vector.shape_cast %921 : vector<1x1x32xf32> to vector<1x32xf32>
    %cst_328 = arith.constant dense<0.000000e+00> : vector<2xf32>
    %923 = vector.multi_reduction <add>, %918, %cst_328 [1] : vector<2x32xf32> to vector<2xf32>
    %924 = vector.shape_cast %923 : vector<2xf32> to vector<2x1xf32>
    %cst_329 = arith.constant 3.200000e+01 : f32
    %925 = vector.broadcast %cst_329 : f32 to vector<2x1xf32>
    %926 = arith.divf %924, %925 : vector<2x1xf32>
    %927 = vector.broadcast %926 : vector<2x1xf32> to vector<2x32xf32>
    %928 = arith.subf %918, %927 : vector<2x32xf32>
    %929 = arith.mulf %928, %928 : vector<2x32xf32>
    %cst_330 = arith.constant dense<0.000000e+00> : vector<2xf32>
    %930 = vector.multi_reduction <add>, %929, %cst_330 [1] : vector<2x32xf32> to vector<2xf32>
    %931 = vector.shape_cast %930 : vector<2xf32> to vector<2x1xf32>
    %cst_331 = arith.constant 3.200000e+01 : f32
    %932 = vector.broadcast %cst_331 : f32 to vector<2x1xf32>
    %933 = arith.divf %931, %932 : vector<2x1xf32>
    %934 = vector.broadcast %926 : vector<2x1xf32> to vector<2x32xf32>
    %935 = arith.subf %918, %934 : vector<2x32xf32>
    %cst_332 = arith.constant 9.99999974E-6 : f32
    %936 = vector.broadcast %cst_332 : f32 to vector<2x1xf32>
    %937 = arith.addf %933, %936 : vector<2x1xf32>
    %938 = math.rsqrt %937 : vector<2x1xf32>
    %939 = vector.broadcast %938 : vector<2x1xf32> to vector<2x32xf32>
    %940 = arith.mulf %935, %939 : vector<2x32xf32>
    %941 = vector.broadcast %920 : vector<1x32xf32> to vector<2x32xf32>
    %942 = arith.mulf %940, %941 : vector<2x32xf32>
    %943 = vector.broadcast %922 : vector<1x32xf32> to vector<2x32xf32>
    %944 = arith.addf %942, %943 : vector<2x32xf32>
    %c1_333 = arith.constant 1 : index
    %c0_334 = arith.constant 0 : index
    %c0_335 = arith.constant 0 : index
    %945 = vector.load %arg14[%c1_333, %c0_334, %c0_335] : memref<3x32x32xf32, #tpu.memory_space<vmem>>, vector<1x32x32xf32>
    %946 = vector.shape_cast %945 : vector<1x32x32xf32> to vector<32x32xf32>
    %cst_336 = arith.constant dense<0.000000e+00> : vector<2x32xf32>
    %947 = tpu.matmul %944, %946, %cst_336 {dimension_numbers = #tpu.dot_dimension_numbers<[1], [0], [0], [1], [0, 0, 1, 1], [], []>} : vector<2x32xf32>, vector<32x32xf32>, vector<2x32xf32> -> vector<2x32xf32>
    %c1_337 = arith.constant 1 : index
    %c0_338 = arith.constant 0 : index
    %c0_339 = arith.constant 0 : index
    %948 = vector.load %arg15[%c1_337, %c0_338, %c0_339] : memref<3x1x32xf32, #tpu.memory_space<vmem>>, vector<1x1x32xf32>
    %949 = vector.shape_cast %948 : vector<1x1x32xf32> to vector<1x32xf32>
    %950 = vector.broadcast %949 : vector<1x32xf32> to vector<2x32xf32>
    %951 = arith.addf %947, %950 : vector<2x32xf32>
    %cst_340 = arith.constant 0.000000e+00 : f32
    %952 = vector.broadcast %cst_340 : f32 to vector<2x32xf32>
    %953 = arith.maximumf %951, %952 : vector<2x32xf32>
    %c1_341 = arith.constant 1 : index
    %c0_342 = arith.constant 0 : index
    %c0_343 = arith.constant 0 : index
    %954 = vector.load %arg16[%c1_341, %c0_342, %c0_343] : memref<3x1x32xf32, #tpu.memory_space<vmem>>, vector<1x1x32xf32>
    %955 = vector.shape_cast %954 : vector<1x1x32xf32> to vector<1x32xf32>
    %c1_344 = arith.constant 1 : index
    %c0_345 = arith.constant 0 : index
    %c0_346 = arith.constant 0 : index
    %956 = vector.load %arg17[%c1_344, %c0_345, %c0_346] : memref<3x1x32xf32, #tpu.memory_space<vmem>>, vector<1x1x32xf32>
    %957 = vector.shape_cast %956 : vector<1x1x32xf32> to vector<1x32xf32>
    %cst_347 = arith.constant dense<0.000000e+00> : vector<2xf32>
    %958 = vector.multi_reduction <add>, %953, %cst_347 [1] : vector<2x32xf32> to vector<2xf32>
    %959 = vector.shape_cast %958 : vector<2xf32> to vector<2x1xf32>
    %cst_348 = arith.constant 3.200000e+01 : f32
    %960 = vector.broadcast %cst_348 : f32 to vector<2x1xf32>
    %961 = arith.divf %959, %960 : vector<2x1xf32>
    %962 = vector.broadcast %961 : vector<2x1xf32> to vector<2x32xf32>
    %963 = arith.subf %953, %962 : vector<2x32xf32>
    %964 = arith.mulf %963, %963 : vector<2x32xf32>
    %cst_349 = arith.constant dense<0.000000e+00> : vector<2xf32>
    %965 = vector.multi_reduction <add>, %964, %cst_349 [1] : vector<2x32xf32> to vector<2xf32>
    %966 = vector.shape_cast %965 : vector<2xf32> to vector<2x1xf32>
    %cst_350 = arith.constant 3.200000e+01 : f32
    %967 = vector.broadcast %cst_350 : f32 to vector<2x1xf32>
    %968 = arith.divf %966, %967 : vector<2x1xf32>
    %969 = vector.broadcast %961 : vector<2x1xf32> to vector<2x32xf32>
    %970 = arith.subf %953, %969 : vector<2x32xf32>
    %cst_351 = arith.constant 9.99999974E-6 : f32
    %971 = vector.broadcast %cst_351 : f32 to vector<2x1xf32>
    %972 = arith.addf %968, %971 : vector<2x1xf32>
    %973 = math.rsqrt %972 : vector<2x1xf32>
    %974 = vector.broadcast %973 : vector<2x1xf32> to vector<2x32xf32>
    %975 = arith.mulf %970, %974 : vector<2x32xf32>
    %976 = vector.broadcast %955 : vector<1x32xf32> to vector<2x32xf32>
    %977 = arith.mulf %975, %976 : vector<2x32xf32>
    %978 = vector.broadcast %957 : vector<1x32xf32> to vector<2x32xf32>
    %979 = arith.addf %977, %978 : vector<2x32xf32>
    %980 = arith.addf %944, %979 : vector<2x32xf32>
    %c1_352 = arith.constant 1 : index
    %c0_353 = arith.constant 0 : index
    %c0_354 = arith.constant 0 : index
    %981 = vector.load %arg18[%c1_352, %c0_353, %c0_354] : memref<3x32x8xf32, #tpu.memory_space<vmem>>, vector<1x32x8xf32>
    %982 = vector.shape_cast %981 : vector<1x32x8xf32> to vector<32x8xf32>
    %cst_355 = arith.constant dense<0.000000e+00> : vector<2x8xf32>
    %983 = tpu.matmul %980, %982, %cst_355 {dimension_numbers = #tpu.dot_dimension_numbers<[1], [0], [0], [1], [0, 0, 1, 1], [], []>} : vector<2x32xf32>, vector<32x8xf32>, vector<2x8xf32> -> vector<2x8xf32>
    %c1_356 = arith.constant 1 : index
    %c0_357 = arith.constant 0 : index
    %c0_358 = arith.constant 0 : index
    %984 = vector.load %arg19[%c1_356, %c0_357, %c0_358] : memref<3x1x8xf32, #tpu.memory_space<vmem>>, vector<1x1x8xf32>
    %985 = vector.shape_cast %984 : vector<1x1x8xf32> to vector<1x8xf32>
    %986 = vector.broadcast %985 : vector<1x8xf32> to vector<2x8xf32>
    %987 = arith.addf %983, %986 : vector<2x8xf32>
    %c2_359 = arith.constant 2 : index
    %c0_360 = arith.constant 0 : index
    %c0_361 = arith.constant 0 : index
    %988 = vector.load %arg5[%c2_359, %c0_360, %c0_361] : memref<3x64x1xf32, #tpu.memory_space<vmem>>, vector<1x64x1xf32>
    %989 = vector.shape_cast %988 : vector<1x64x1xf32> to vector<64x1xf32>
    %c2_362 = arith.constant 2 : index
    %c0_363 = arith.constant 0 : index
    %c0_364 = arith.constant 0 : index
    %990 = vector.load %arg6[%c2_362, %c0_363, %c0_364] : memref<3x4x16xf32, #tpu.memory_space<vmem>>, vector<1x4x16xf32>
    %991 = vector.shape_cast %990 : vector<1x4x16xf32> to vector<4x16xf32>
    %c2_365 = arith.constant 2 : index
    %c0_366 = arith.constant 0 : index
    %c0_367 = arith.constant 0 : index
    %992 = vector.load %arg7[%c2_365, %c0_366, %c0_367] : memref<3x1x16xf32, #tpu.memory_space<vmem>>, vector<1x1x16xf32>
    %993 = vector.shape_cast %992 : vector<1x1x16xf32> to vector<1x16xf32>
    %c2_368 = arith.constant 2 : index
    %c0_369 = arith.constant 0 : index
    %c0_370 = arith.constant 0 : index
    %994 = vector.load %arg8[%c2_368, %c0_369, %c0_370] : memref<3x1x16xf32, #tpu.memory_space<vmem>>, vector<1x1x16xf32>
    %995 = vector.shape_cast %994 : vector<1x1x16xf32> to vector<1x16xf32>
    %c2_371 = arith.constant 2 : index
    %c0_372 = arith.constant 0 : index
    %c0_373 = arith.constant 0 : index
    %996 = vector.load %arg9[%c2_371, %c0_372, %c0_373] : memref<3x1x16xf32, #tpu.memory_space<vmem>>, vector<1x1x16xf32>
    %997 = vector.shape_cast %996 : vector<1x1x16xf32> to vector<1x16xf32>
    %998 = vector.extract_strided_slice %0 {offsets = [0, 0], sizes = [1, 16], strides = [1, 1]} : vector<2x16xf32> to vector<1x16xf32>
    %999 = vector.extract_strided_slice %1 {offsets = [0, 0], sizes = [16, 1], strides = [1, 1]} : vector<16x2xf32> to vector<16x1xf32>
    %1000 = vector.broadcast %999 : vector<16x1xf32> to vector<16x16xf32>
    %1001 = vector.broadcast %998 : vector<1x16xf32> to vector<16x16xf32>
    %1002 = arith.mulf %1000, %1001 : vector<16x16xf32>
    %1003 = tpu.concatenate %1002, %1002, %1002, %1002 in 0 : vector<16x16xf32>, vector<16x16xf32>, vector<16x16xf32>, vector<16x16xf32> -> vector<64x16xf32>
    %1004 = vector.broadcast %989 : vector<64x1xf32> to vector<64x16xf32>
    %1005 = arith.mulf %1003, %1004 : vector<64x16xf32>
    %cst_374 = arith.constant dense<0xFF800000> : vector<64xf32>
    %1006 = vector.multi_reduction <maximumf>, %1005, %cst_374 [1] : vector<64x16xf32> to vector<64xf32>
    %1007 = vector.shape_cast %1006 : vector<64xf32> to vector<64x1xf32>
    %1008 = vector.broadcast %1007 : vector<64x1xf32> to vector<64x16xf32>
    %1009 = arith.subf %1005, %1008 : vector<64x16xf32>
    %1010 = math.exp %1009 : vector<64x16xf32>
    %cst_375 = arith.constant dense<0.000000e+00> : vector<64xf32>
    %1011 = vector.multi_reduction <add>, %1010, %cst_375 [1] : vector<64x16xf32> to vector<64xf32>
    %1012 = vector.shape_cast %1011 : vector<64xf32> to vector<64x1xf32>
    %1013 = tpu.reciprocal %1012 {approx = true} : vector<64x1xf32> -> vector<64x1xf32>
    %1014 = vector.broadcast %1013 : vector<64x1xf32> to vector<64x16xf32>
    %1015 = arith.mulf %1010, %1014 : vector<64x16xf32>
    %1016 = vector.extract_strided_slice %1015 {offsets = [0, 0], sizes = [16, 16], strides = [1, 1]} : vector<64x16xf32> to vector<16x16xf32>
    %1017 = vector.extract_strided_slice %1015 {offsets = [16, 0], sizes = [16, 16], strides = [1, 1]} : vector<64x16xf32> to vector<16x16xf32>
    %1018 = vector.extract_strided_slice %1015 {offsets = [32, 0], sizes = [16, 16], strides = [1, 1]} : vector<64x16xf32> to vector<16x16xf32>
    %1019 = vector.extract_strided_slice %1015 {offsets = [48, 0], sizes = [16, 16], strides = [1, 1]} : vector<64x16xf32> to vector<16x16xf32>
    %c2_376 = arith.constant 2 : index
    %c0_377 = arith.constant 0 : index
    %1020 = memref.load %arg2[%c2_376, %c0_377] : memref<3x16xf32, #tpu.memory_space<smem>>
    %1021 = vector.broadcast %1020 : f32 to vector<16x16xf32>
    %1022 = arith.mulf %1016, %1021 : vector<16x16xf32>
    %c2_378 = arith.constant 2 : index
    %c4_379 = arith.constant 4 : index
    %1023 = memref.load %arg2[%c2_378, %c4_379] : memref<3x16xf32, #tpu.memory_space<smem>>
    %1024 = vector.broadcast %1023 : f32 to vector<16x16xf32>
    %1025 = arith.mulf %1017, %1024 : vector<16x16xf32>
    %1026 = arith.addf %1022, %1025 : vector<16x16xf32>
    %c2_380 = arith.constant 2 : index
    %c8_381 = arith.constant 8 : index
    %1027 = memref.load %arg2[%c2_380, %c8_381] : memref<3x16xf32, #tpu.memory_space<smem>>
    %1028 = vector.broadcast %1027 : f32 to vector<16x16xf32>
    %1029 = arith.mulf %1018, %1028 : vector<16x16xf32>
    %1030 = arith.addf %1026, %1029 : vector<16x16xf32>
    %c2_382 = arith.constant 2 : index
    %c12_383 = arith.constant 12 : index
    %1031 = memref.load %arg2[%c2_382, %c12_383] : memref<3x16xf32, #tpu.memory_space<smem>>
    %1032 = vector.broadcast %1031 : f32 to vector<16x16xf32>
    %1033 = arith.mulf %1019, %1032 : vector<16x16xf32>
    %1034 = arith.addf %1030, %1033 : vector<16x16xf32>
    %c2_384 = arith.constant 2 : index
    %c1_385 = arith.constant 1 : index
    %1035 = memref.load %arg2[%c2_384, %c1_385] : memref<3x16xf32, #tpu.memory_space<smem>>
    %1036 = vector.broadcast %1035 : f32 to vector<16x16xf32>
    %1037 = arith.mulf %1016, %1036 : vector<16x16xf32>
    %c2_386 = arith.constant 2 : index
    %c5_387 = arith.constant 5 : index
    %1038 = memref.load %arg2[%c2_386, %c5_387] : memref<3x16xf32, #tpu.memory_space<smem>>
    %1039 = vector.broadcast %1038 : f32 to vector<16x16xf32>
    %1040 = arith.mulf %1017, %1039 : vector<16x16xf32>
    %1041 = arith.addf %1037, %1040 : vector<16x16xf32>
    %c2_388 = arith.constant 2 : index
    %c9_389 = arith.constant 9 : index
    %1042 = memref.load %arg2[%c2_388, %c9_389] : memref<3x16xf32, #tpu.memory_space<smem>>
    %1043 = vector.broadcast %1042 : f32 to vector<16x16xf32>
    %1044 = arith.mulf %1018, %1043 : vector<16x16xf32>
    %1045 = arith.addf %1041, %1044 : vector<16x16xf32>
    %c2_390 = arith.constant 2 : index
    %c13_391 = arith.constant 13 : index
    %1046 = memref.load %arg2[%c2_390, %c13_391] : memref<3x16xf32, #tpu.memory_space<smem>>
    %1047 = vector.broadcast %1046 : f32 to vector<16x16xf32>
    %1048 = arith.mulf %1019, %1047 : vector<16x16xf32>
    %1049 = arith.addf %1045, %1048 : vector<16x16xf32>
    %c2_392 = arith.constant 2 : index
    %c2_393 = arith.constant 2 : index
    %1050 = memref.load %arg2[%c2_392, %c2_393] : memref<3x16xf32, #tpu.memory_space<smem>>
    %1051 = vector.broadcast %1050 : f32 to vector<16x16xf32>
    %1052 = arith.mulf %1016, %1051 : vector<16x16xf32>
    %c2_394 = arith.constant 2 : index
    %c6_395 = arith.constant 6 : index
    %1053 = memref.load %arg2[%c2_394, %c6_395] : memref<3x16xf32, #tpu.memory_space<smem>>
    %1054 = vector.broadcast %1053 : f32 to vector<16x16xf32>
    %1055 = arith.mulf %1017, %1054 : vector<16x16xf32>
    %1056 = arith.addf %1052, %1055 : vector<16x16xf32>
    %c2_396 = arith.constant 2 : index
    %c10_397 = arith.constant 10 : index
    %1057 = memref.load %arg2[%c2_396, %c10_397] : memref<3x16xf32, #tpu.memory_space<smem>>
    %1058 = vector.broadcast %1057 : f32 to vector<16x16xf32>
    %1059 = arith.mulf %1018, %1058 : vector<16x16xf32>
    %1060 = arith.addf %1056, %1059 : vector<16x16xf32>
    %c2_398 = arith.constant 2 : index
    %c14_399 = arith.constant 14 : index
    %1061 = memref.load %arg2[%c2_398, %c14_399] : memref<3x16xf32, #tpu.memory_space<smem>>
    %1062 = vector.broadcast %1061 : f32 to vector<16x16xf32>
    %1063 = arith.mulf %1019, %1062 : vector<16x16xf32>
    %1064 = arith.addf %1060, %1063 : vector<16x16xf32>
    %c2_400 = arith.constant 2 : index
    %c3_401 = arith.constant 3 : index
    %1065 = memref.load %arg2[%c2_400, %c3_401] : memref<3x16xf32, #tpu.memory_space<smem>>
    %1066 = vector.broadcast %1065 : f32 to vector<16x16xf32>
    %1067 = arith.mulf %1016, %1066 : vector<16x16xf32>
    %c2_402 = arith.constant 2 : index
    %c7_403 = arith.constant 7 : index
    %1068 = memref.load %arg2[%c2_402, %c7_403] : memref<3x16xf32, #tpu.memory_space<smem>>
    %1069 = vector.broadcast %1068 : f32 to vector<16x16xf32>
    %1070 = arith.mulf %1017, %1069 : vector<16x16xf32>
    %1071 = arith.addf %1067, %1070 : vector<16x16xf32>
    %c2_404 = arith.constant 2 : index
    %c11_405 = arith.constant 11 : index
    %1072 = memref.load %arg2[%c2_404, %c11_405] : memref<3x16xf32, #tpu.memory_space<smem>>
    %1073 = vector.broadcast %1072 : f32 to vector<16x16xf32>
    %1074 = arith.mulf %1018, %1073 : vector<16x16xf32>
    %1075 = arith.addf %1071, %1074 : vector<16x16xf32>
    %c2_406 = arith.constant 2 : index
    %c15_407 = arith.constant 15 : index
    %1076 = memref.load %arg2[%c2_406, %c15_407] : memref<3x16xf32, #tpu.memory_space<smem>>
    %1077 = vector.broadcast %1076 : f32 to vector<16x16xf32>
    %1078 = arith.mulf %1019, %1077 : vector<16x16xf32>
    %1079 = arith.addf %1075, %1078 : vector<16x16xf32>
    %1080 = arith.addf %1034, %1049 : vector<16x16xf32>
    %1081 = arith.addf %1080, %1064 : vector<16x16xf32>
    %1082 = arith.addf %1081, %1079 : vector<16x16xf32>
    %cst_408 = arith.constant 2.500000e-01 : f32
    %1083 = vector.broadcast %cst_408 : f32 to vector<16x16xf32>
    %1084 = arith.mulf %1082, %1083 : vector<16x16xf32>
    %1085 = arith.subf %1034, %1084 : vector<16x16xf32>
    %1086 = arith.mulf %1085, %1085 : vector<16x16xf32>
    %1087 = arith.subf %1049, %1084 : vector<16x16xf32>
    %1088 = arith.mulf %1087, %1087 : vector<16x16xf32>
    %1089 = arith.addf %1086, %1088 : vector<16x16xf32>
    %1090 = arith.subf %1064, %1084 : vector<16x16xf32>
    %1091 = arith.mulf %1090, %1090 : vector<16x16xf32>
    %1092 = arith.addf %1089, %1091 : vector<16x16xf32>
    %1093 = arith.subf %1079, %1084 : vector<16x16xf32>
    %1094 = arith.mulf %1093, %1093 : vector<16x16xf32>
    %1095 = arith.addf %1092, %1094 : vector<16x16xf32>
    %cst_409 = arith.constant 2.500000e-01 : f32
    %1096 = vector.broadcast %cst_409 : f32 to vector<16x16xf32>
    %1097 = arith.mulf %1095, %1096 : vector<16x16xf32>
    %cst_410 = arith.constant 9.99999974E-6 : f32
    %1098 = vector.broadcast %cst_410 : f32 to vector<16x16xf32>
    %1099 = arith.addf %1097, %1098 : vector<16x16xf32>
    %1100 = math.rsqrt %1099 : vector<16x16xf32>
    %cst_411 = arith.constant 1.600000e+01 : f32
    %1101 = vector.broadcast %cst_411 : f32 to vector<1x16xf32>
    %1102 = arith.mulf %993, %1101 : vector<1x16xf32>
    %1103 = arith.subf %1034, %1084 : vector<16x16xf32>
    %1104 = arith.mulf %1103, %1100 : vector<16x16xf32>
    %c2_412 = arith.constant 2 : index
    %c0_413 = arith.constant 0 : index
    %1105 = memref.load %arg3[%c2_412, %c0_413] : memref<3x4xf32, #tpu.memory_space<smem>>
    %1106 = vector.broadcast %1105 : f32 to vector<16x16xf32>
    %1107 = arith.mulf %1104, %1106 : vector<16x16xf32>
    %c2_414 = arith.constant 2 : index
    %c0_415 = arith.constant 0 : index
    %1108 = memref.load %arg4[%c2_414, %c0_415] : memref<3x4xf32, #tpu.memory_space<smem>>
    %1109 = vector.broadcast %1108 : f32 to vector<16x16xf32>
    %1110 = arith.addf %1107, %1109 : vector<16x16xf32>
    %1111 = vector.broadcast %998 : vector<1x16xf32> to vector<16x16xf32>
    %1112 = arith.mulf %1110, %1111 : vector<16x16xf32>
    %1113 = vector.shape_cast %1112 : vector<16x16xf32> to vector<1x16x16xf32>
    %cst_416 = arith.constant dense<0.000000e+00> : vector<1xf32>
    %1114 = vector.multi_reduction <add>, %1113, %cst_416 [1, 2] : vector<1x16x16xf32> to vector<1xf32>
    %1115 = vector.shape_cast %1114 : vector<1xf32> to vector<1x1x1xf32>
    %1116 = vector.extract %1115[0, 0, 0] : f32 from vector<1x1x1xf32>
    %1117 = vector.broadcast %1116 : f32 to vector<1x1xf32>
    %1118 = vector.extract_strided_slice %991 {offsets = [0, 0], sizes = [1, 16], strides = [1, 1]} : vector<4x16xf32> to vector<1x16xf32>
    %1119 = vector.broadcast %1117 : vector<1x1xf32> to vector<1x16xf32>
    %1120 = arith.mulf %1119, %1118 : vector<1x16xf32>
    %1121 = arith.addf %1102, %1120 : vector<1x16xf32>
    %1122 = arith.subf %1049, %1084 : vector<16x16xf32>
    %1123 = arith.mulf %1122, %1100 : vector<16x16xf32>
    %c2_417 = arith.constant 2 : index
    %c1_418 = arith.constant 1 : index
    %1124 = memref.load %arg3[%c2_417, %c1_418] : memref<3x4xf32, #tpu.memory_space<smem>>
    %1125 = vector.broadcast %1124 : f32 to vector<16x16xf32>
    %1126 = arith.mulf %1123, %1125 : vector<16x16xf32>
    %c2_419 = arith.constant 2 : index
    %c1_420 = arith.constant 1 : index
    %1127 = memref.load %arg4[%c2_419, %c1_420] : memref<3x4xf32, #tpu.memory_space<smem>>
    %1128 = vector.broadcast %1127 : f32 to vector<16x16xf32>
    %1129 = arith.addf %1126, %1128 : vector<16x16xf32>
    %1130 = vector.broadcast %998 : vector<1x16xf32> to vector<16x16xf32>
    %1131 = arith.mulf %1129, %1130 : vector<16x16xf32>
    %1132 = vector.shape_cast %1131 : vector<16x16xf32> to vector<1x16x16xf32>
    %cst_421 = arith.constant dense<0.000000e+00> : vector<1xf32>
    %1133 = vector.multi_reduction <add>, %1132, %cst_421 [1, 2] : vector<1x16x16xf32> to vector<1xf32>
    %1134 = vector.shape_cast %1133 : vector<1xf32> to vector<1x1x1xf32>
    %1135 = vector.extract %1134[0, 0, 0] : f32 from vector<1x1x1xf32>
    %1136 = vector.broadcast %1135 : f32 to vector<1x1xf32>
    %1137 = vector.extract_strided_slice %991 {offsets = [1, 0], sizes = [1, 16], strides = [1, 1]} : vector<4x16xf32> to vector<1x16xf32>
    %1138 = vector.broadcast %1136 : vector<1x1xf32> to vector<1x16xf32>
    %1139 = arith.mulf %1138, %1137 : vector<1x16xf32>
    %1140 = arith.addf %1121, %1139 : vector<1x16xf32>
    %1141 = arith.subf %1064, %1084 : vector<16x16xf32>
    %1142 = arith.mulf %1141, %1100 : vector<16x16xf32>
    %c2_422 = arith.constant 2 : index
    %c2_423 = arith.constant 2 : index
    %1143 = memref.load %arg3[%c2_422, %c2_423] : memref<3x4xf32, #tpu.memory_space<smem>>
    %1144 = vector.broadcast %1143 : f32 to vector<16x16xf32>
    %1145 = arith.mulf %1142, %1144 : vector<16x16xf32>
    %c2_424 = arith.constant 2 : index
    %c2_425 = arith.constant 2 : index
    %1146 = memref.load %arg4[%c2_424, %c2_425] : memref<3x4xf32, #tpu.memory_space<smem>>
    %1147 = vector.broadcast %1146 : f32 to vector<16x16xf32>
    %1148 = arith.addf %1145, %1147 : vector<16x16xf32>
    %1149 = vector.broadcast %998 : vector<1x16xf32> to vector<16x16xf32>
    %1150 = arith.mulf %1148, %1149 : vector<16x16xf32>
    %1151 = vector.shape_cast %1150 : vector<16x16xf32> to vector<1x16x16xf32>
    %cst_426 = arith.constant dense<0.000000e+00> : vector<1xf32>
    %1152 = vector.multi_reduction <add>, %1151, %cst_426 [1, 2] : vector<1x16x16xf32> to vector<1xf32>
    %1153 = vector.shape_cast %1152 : vector<1xf32> to vector<1x1x1xf32>
    %1154 = vector.extract %1153[0, 0, 0] : f32 from vector<1x1x1xf32>
    %1155 = vector.broadcast %1154 : f32 to vector<1x1xf32>
    %1156 = vector.extract_strided_slice %991 {offsets = [2, 0], sizes = [1, 16], strides = [1, 1]} : vector<4x16xf32> to vector<1x16xf32>
    %1157 = vector.broadcast %1155 : vector<1x1xf32> to vector<1x16xf32>
    %1158 = arith.mulf %1157, %1156 : vector<1x16xf32>
    %1159 = arith.addf %1140, %1158 : vector<1x16xf32>
    %1160 = arith.subf %1079, %1084 : vector<16x16xf32>
    %1161 = arith.mulf %1160, %1100 : vector<16x16xf32>
    %c2_427 = arith.constant 2 : index
    %c3_428 = arith.constant 3 : index
    %1162 = memref.load %arg3[%c2_427, %c3_428] : memref<3x4xf32, #tpu.memory_space<smem>>
    %1163 = vector.broadcast %1162 : f32 to vector<16x16xf32>
    %1164 = arith.mulf %1161, %1163 : vector<16x16xf32>
    %c2_429 = arith.constant 2 : index
    %c3_430 = arith.constant 3 : index
    %1165 = memref.load %arg4[%c2_429, %c3_430] : memref<3x4xf32, #tpu.memory_space<smem>>
    %1166 = vector.broadcast %1165 : f32 to vector<16x16xf32>
    %1167 = arith.addf %1164, %1166 : vector<16x16xf32>
    %1168 = vector.broadcast %998 : vector<1x16xf32> to vector<16x16xf32>
    %1169 = arith.mulf %1167, %1168 : vector<16x16xf32>
    %1170 = vector.shape_cast %1169 : vector<16x16xf32> to vector<1x16x16xf32>
    %cst_431 = arith.constant dense<0.000000e+00> : vector<1xf32>
    %1171 = vector.multi_reduction <add>, %1170, %cst_431 [1, 2] : vector<1x16x16xf32> to vector<1xf32>
    %1172 = vector.shape_cast %1171 : vector<1xf32> to vector<1x1x1xf32>
    %1173 = vector.extract %1172[0, 0, 0] : f32 from vector<1x1x1xf32>
    %1174 = vector.broadcast %1173 : f32 to vector<1x1xf32>
    %1175 = vector.extract_strided_slice %991 {offsets = [3, 0], sizes = [1, 16], strides = [1, 1]} : vector<4x16xf32> to vector<1x16xf32>
    %1176 = vector.broadcast %1174 : vector<1x1xf32> to vector<1x16xf32>
    %1177 = arith.mulf %1176, %1175 : vector<1x16xf32>
    %1178 = arith.addf %1159, %1177 : vector<1x16xf32>
    %cst_432 = arith.constant dense<0.000000e+00> : vector<1xf32>
    %1179 = vector.multi_reduction <add>, %1178, %cst_432 [1] : vector<1x16xf32> to vector<1xf32>
    %1180 = vector.shape_cast %1179 : vector<1xf32> to vector<1x1xf32>
    %cst_433 = arith.constant 1.600000e+01 : f32
    %1181 = vector.broadcast %cst_433 : f32 to vector<1x1xf32>
    %1182 = arith.divf %1180, %1181 : vector<1x1xf32>
    %1183 = vector.broadcast %1182 : vector<1x1xf32> to vector<1x16xf32>
    %1184 = arith.subf %1178, %1183 : vector<1x16xf32>
    %1185 = arith.mulf %1184, %1184 : vector<1x16xf32>
    %cst_434 = arith.constant dense<0.000000e+00> : vector<1xf32>
    %1186 = vector.multi_reduction <add>, %1185, %cst_434 [1] : vector<1x16xf32> to vector<1xf32>
    %1187 = vector.shape_cast %1186 : vector<1xf32> to vector<1x1xf32>
    %cst_435 = arith.constant 1.600000e+01 : f32
    %1188 = vector.broadcast %cst_435 : f32 to vector<1x1xf32>
    %1189 = arith.divf %1187, %1188 : vector<1x1xf32>
    %1190 = vector.broadcast %1182 : vector<1x1xf32> to vector<1x16xf32>
    %1191 = arith.subf %1178, %1190 : vector<1x16xf32>
    %cst_436 = arith.constant 9.99999974E-6 : f32
    %1192 = vector.broadcast %cst_436 : f32 to vector<1x1xf32>
    %1193 = arith.addf %1189, %1192 : vector<1x1xf32>
    %1194 = math.rsqrt %1193 : vector<1x1xf32>
    %1195 = vector.broadcast %1194 : vector<1x1xf32> to vector<1x16xf32>
    %1196 = arith.mulf %1191, %1195 : vector<1x16xf32>
    %1197 = arith.mulf %1196, %995 : vector<1x16xf32>
    %1198 = arith.addf %1197, %997 : vector<1x16xf32>
    %1199 = arith.addf %998, %1198 : vector<1x16xf32>
    %1200 = vector.extract_strided_slice %0 {offsets = [1, 0], sizes = [1, 16], strides = [1, 1]} : vector<2x16xf32> to vector<1x16xf32>
    %1201 = vector.extract_strided_slice %1 {offsets = [0, 1], sizes = [16, 1], strides = [1, 1]} : vector<16x2xf32> to vector<16x1xf32>
    %1202 = vector.broadcast %1201 : vector<16x1xf32> to vector<16x16xf32>
    %1203 = vector.broadcast %1200 : vector<1x16xf32> to vector<16x16xf32>
    %1204 = arith.mulf %1202, %1203 : vector<16x16xf32>
    %1205 = tpu.concatenate %1204, %1204, %1204, %1204 in 0 : vector<16x16xf32>, vector<16x16xf32>, vector<16x16xf32>, vector<16x16xf32> -> vector<64x16xf32>
    %1206 = vector.broadcast %989 : vector<64x1xf32> to vector<64x16xf32>
    %1207 = arith.mulf %1205, %1206 : vector<64x16xf32>
    %cst_437 = arith.constant dense<0xFF800000> : vector<64xf32>
    %1208 = vector.multi_reduction <maximumf>, %1207, %cst_437 [1] : vector<64x16xf32> to vector<64xf32>
    %1209 = vector.shape_cast %1208 : vector<64xf32> to vector<64x1xf32>
    %1210 = vector.broadcast %1209 : vector<64x1xf32> to vector<64x16xf32>
    %1211 = arith.subf %1207, %1210 : vector<64x16xf32>
    %1212 = math.exp %1211 : vector<64x16xf32>
    %cst_438 = arith.constant dense<0.000000e+00> : vector<64xf32>
    %1213 = vector.multi_reduction <add>, %1212, %cst_438 [1] : vector<64x16xf32> to vector<64xf32>
    %1214 = vector.shape_cast %1213 : vector<64xf32> to vector<64x1xf32>
    %1215 = tpu.reciprocal %1214 {approx = true} : vector<64x1xf32> -> vector<64x1xf32>
    %1216 = vector.broadcast %1215 : vector<64x1xf32> to vector<64x16xf32>
    %1217 = arith.mulf %1212, %1216 : vector<64x16xf32>
    %1218 = vector.extract_strided_slice %1217 {offsets = [0, 0], sizes = [16, 16], strides = [1, 1]} : vector<64x16xf32> to vector<16x16xf32>
    %1219 = vector.extract_strided_slice %1217 {offsets = [16, 0], sizes = [16, 16], strides = [1, 1]} : vector<64x16xf32> to vector<16x16xf32>
    %1220 = vector.extract_strided_slice %1217 {offsets = [32, 0], sizes = [16, 16], strides = [1, 1]} : vector<64x16xf32> to vector<16x16xf32>
    %1221 = vector.extract_strided_slice %1217 {offsets = [48, 0], sizes = [16, 16], strides = [1, 1]} : vector<64x16xf32> to vector<16x16xf32>
    %c2_439 = arith.constant 2 : index
    %c0_440 = arith.constant 0 : index
    %1222 = memref.load %arg2[%c2_439, %c0_440] : memref<3x16xf32, #tpu.memory_space<smem>>
    %1223 = vector.broadcast %1222 : f32 to vector<16x16xf32>
    %1224 = arith.mulf %1218, %1223 : vector<16x16xf32>
    %c2_441 = arith.constant 2 : index
    %c4_442 = arith.constant 4 : index
    %1225 = memref.load %arg2[%c2_441, %c4_442] : memref<3x16xf32, #tpu.memory_space<smem>>
    %1226 = vector.broadcast %1225 : f32 to vector<16x16xf32>
    %1227 = arith.mulf %1219, %1226 : vector<16x16xf32>
    %1228 = arith.addf %1224, %1227 : vector<16x16xf32>
    %c2_443 = arith.constant 2 : index
    %c8_444 = arith.constant 8 : index
    %1229 = memref.load %arg2[%c2_443, %c8_444] : memref<3x16xf32, #tpu.memory_space<smem>>
    %1230 = vector.broadcast %1229 : f32 to vector<16x16xf32>
    %1231 = arith.mulf %1220, %1230 : vector<16x16xf32>
    %1232 = arith.addf %1228, %1231 : vector<16x16xf32>
    %c2_445 = arith.constant 2 : index
    %c12_446 = arith.constant 12 : index
    %1233 = memref.load %arg2[%c2_445, %c12_446] : memref<3x16xf32, #tpu.memory_space<smem>>
    %1234 = vector.broadcast %1233 : f32 to vector<16x16xf32>
    %1235 = arith.mulf %1221, %1234 : vector<16x16xf32>
    %1236 = arith.addf %1232, %1235 : vector<16x16xf32>
    %c2_447 = arith.constant 2 : index
    %c1_448 = arith.constant 1 : index
    %1237 = memref.load %arg2[%c2_447, %c1_448] : memref<3x16xf32, #tpu.memory_space<smem>>
    %1238 = vector.broadcast %1237 : f32 to vector<16x16xf32>
    %1239 = arith.mulf %1218, %1238 : vector<16x16xf32>
    %c2_449 = arith.constant 2 : index
    %c5_450 = arith.constant 5 : index
    %1240 = memref.load %arg2[%c2_449, %c5_450] : memref<3x16xf32, #tpu.memory_space<smem>>
    %1241 = vector.broadcast %1240 : f32 to vector<16x16xf32>
    %1242 = arith.mulf %1219, %1241 : vector<16x16xf32>
    %1243 = arith.addf %1239, %1242 : vector<16x16xf32>
    %c2_451 = arith.constant 2 : index
    %c9_452 = arith.constant 9 : index
    %1244 = memref.load %arg2[%c2_451, %c9_452] : memref<3x16xf32, #tpu.memory_space<smem>>
    %1245 = vector.broadcast %1244 : f32 to vector<16x16xf32>
    %1246 = arith.mulf %1220, %1245 : vector<16x16xf32>
    %1247 = arith.addf %1243, %1246 : vector<16x16xf32>
    %c2_453 = arith.constant 2 : index
    %c13_454 = arith.constant 13 : index
    %1248 = memref.load %arg2[%c2_453, %c13_454] : memref<3x16xf32, #tpu.memory_space<smem>>
    %1249 = vector.broadcast %1248 : f32 to vector<16x16xf32>
    %1250 = arith.mulf %1221, %1249 : vector<16x16xf32>
    %1251 = arith.addf %1247, %1250 : vector<16x16xf32>
    %c2_455 = arith.constant 2 : index
    %c2_456 = arith.constant 2 : index
    %1252 = memref.load %arg2[%c2_455, %c2_456] : memref<3x16xf32, #tpu.memory_space<smem>>
    %1253 = vector.broadcast %1252 : f32 to vector<16x16xf32>
    %1254 = arith.mulf %1218, %1253 : vector<16x16xf32>
    %c2_457 = arith.constant 2 : index
    %c6_458 = arith.constant 6 : index
    %1255 = memref.load %arg2[%c2_457, %c6_458] : memref<3x16xf32, #tpu.memory_space<smem>>
    %1256 = vector.broadcast %1255 : f32 to vector<16x16xf32>
    %1257 = arith.mulf %1219, %1256 : vector<16x16xf32>
    %1258 = arith.addf %1254, %1257 : vector<16x16xf32>
    %c2_459 = arith.constant 2 : index
    %c10_460 = arith.constant 10 : index
    %1259 = memref.load %arg2[%c2_459, %c10_460] : memref<3x16xf32, #tpu.memory_space<smem>>
    %1260 = vector.broadcast %1259 : f32 to vector<16x16xf32>
    %1261 = arith.mulf %1220, %1260 : vector<16x16xf32>
    %1262 = arith.addf %1258, %1261 : vector<16x16xf32>
    %c2_461 = arith.constant 2 : index
    %c14_462 = arith.constant 14 : index
    %1263 = memref.load %arg2[%c2_461, %c14_462] : memref<3x16xf32, #tpu.memory_space<smem>>
    %1264 = vector.broadcast %1263 : f32 to vector<16x16xf32>
    %1265 = arith.mulf %1221, %1264 : vector<16x16xf32>
    %1266 = arith.addf %1262, %1265 : vector<16x16xf32>
    %c2_463 = arith.constant 2 : index
    %c3_464 = arith.constant 3 : index
    %1267 = memref.load %arg2[%c2_463, %c3_464] : memref<3x16xf32, #tpu.memory_space<smem>>
    %1268 = vector.broadcast %1267 : f32 to vector<16x16xf32>
    %1269 = arith.mulf %1218, %1268 : vector<16x16xf32>
    %c2_465 = arith.constant 2 : index
    %c7_466 = arith.constant 7 : index
    %1270 = memref.load %arg2[%c2_465, %c7_466] : memref<3x16xf32, #tpu.memory_space<smem>>
    %1271 = vector.broadcast %1270 : f32 to vector<16x16xf32>
    %1272 = arith.mulf %1219, %1271 : vector<16x16xf32>
    %1273 = arith.addf %1269, %1272 : vector<16x16xf32>
    %c2_467 = arith.constant 2 : index
    %c11_468 = arith.constant 11 : index
    %1274 = memref.load %arg2[%c2_467, %c11_468] : memref<3x16xf32, #tpu.memory_space<smem>>
    %1275 = vector.broadcast %1274 : f32 to vector<16x16xf32>
    %1276 = arith.mulf %1220, %1275 : vector<16x16xf32>
    %1277 = arith.addf %1273, %1276 : vector<16x16xf32>
    %c2_469 = arith.constant 2 : index
    %c15_470 = arith.constant 15 : index
    %1278 = memref.load %arg2[%c2_469, %c15_470] : memref<3x16xf32, #tpu.memory_space<smem>>
    %1279 = vector.broadcast %1278 : f32 to vector<16x16xf32>
    %1280 = arith.mulf %1221, %1279 : vector<16x16xf32>
    %1281 = arith.addf %1277, %1280 : vector<16x16xf32>
    %1282 = arith.addf %1236, %1251 : vector<16x16xf32>
    %1283 = arith.addf %1282, %1266 : vector<16x16xf32>
    %1284 = arith.addf %1283, %1281 : vector<16x16xf32>
    %cst_471 = arith.constant 2.500000e-01 : f32
    %1285 = vector.broadcast %cst_471 : f32 to vector<16x16xf32>
    %1286 = arith.mulf %1284, %1285 : vector<16x16xf32>
    %1287 = arith.subf %1236, %1286 : vector<16x16xf32>
    %1288 = arith.mulf %1287, %1287 : vector<16x16xf32>
    %1289 = arith.subf %1251, %1286 : vector<16x16xf32>
    %1290 = arith.mulf %1289, %1289 : vector<16x16xf32>
    %1291 = arith.addf %1288, %1290 : vector<16x16xf32>
    %1292 = arith.subf %1266, %1286 : vector<16x16xf32>
    %1293 = arith.mulf %1292, %1292 : vector<16x16xf32>
    %1294 = arith.addf %1291, %1293 : vector<16x16xf32>
    %1295 = arith.subf %1281, %1286 : vector<16x16xf32>
    %1296 = arith.mulf %1295, %1295 : vector<16x16xf32>
    %1297 = arith.addf %1294, %1296 : vector<16x16xf32>
    %cst_472 = arith.constant 2.500000e-01 : f32
    %1298 = vector.broadcast %cst_472 : f32 to vector<16x16xf32>
    %1299 = arith.mulf %1297, %1298 : vector<16x16xf32>
    %cst_473 = arith.constant 9.99999974E-6 : f32
    %1300 = vector.broadcast %cst_473 : f32 to vector<16x16xf32>
    %1301 = arith.addf %1299, %1300 : vector<16x16xf32>
    %1302 = math.rsqrt %1301 : vector<16x16xf32>
    %cst_474 = arith.constant 1.600000e+01 : f32
    %1303 = vector.broadcast %cst_474 : f32 to vector<1x16xf32>
    %1304 = arith.mulf %993, %1303 : vector<1x16xf32>
    %1305 = arith.subf %1236, %1286 : vector<16x16xf32>
    %1306 = arith.mulf %1305, %1302 : vector<16x16xf32>
    %c2_475 = arith.constant 2 : index
    %c0_476 = arith.constant 0 : index
    %1307 = memref.load %arg3[%c2_475, %c0_476] : memref<3x4xf32, #tpu.memory_space<smem>>
    %1308 = vector.broadcast %1307 : f32 to vector<16x16xf32>
    %1309 = arith.mulf %1306, %1308 : vector<16x16xf32>
    %c2_477 = arith.constant 2 : index
    %c0_478 = arith.constant 0 : index
    %1310 = memref.load %arg4[%c2_477, %c0_478] : memref<3x4xf32, #tpu.memory_space<smem>>
    %1311 = vector.broadcast %1310 : f32 to vector<16x16xf32>
    %1312 = arith.addf %1309, %1311 : vector<16x16xf32>
    %1313 = vector.broadcast %1200 : vector<1x16xf32> to vector<16x16xf32>
    %1314 = arith.mulf %1312, %1313 : vector<16x16xf32>
    %1315 = vector.shape_cast %1314 : vector<16x16xf32> to vector<1x16x16xf32>
    %cst_479 = arith.constant dense<0.000000e+00> : vector<1xf32>
    %1316 = vector.multi_reduction <add>, %1315, %cst_479 [1, 2] : vector<1x16x16xf32> to vector<1xf32>
    %1317 = vector.shape_cast %1316 : vector<1xf32> to vector<1x1x1xf32>
    %1318 = vector.extract %1317[0, 0, 0] : f32 from vector<1x1x1xf32>
    %1319 = vector.broadcast %1318 : f32 to vector<1x1xf32>
    %1320 = vector.extract_strided_slice %991 {offsets = [0, 0], sizes = [1, 16], strides = [1, 1]} : vector<4x16xf32> to vector<1x16xf32>
    %1321 = vector.broadcast %1319 : vector<1x1xf32> to vector<1x16xf32>
    %1322 = arith.mulf %1321, %1320 : vector<1x16xf32>
    %1323 = arith.addf %1304, %1322 : vector<1x16xf32>
    %1324 = arith.subf %1251, %1286 : vector<16x16xf32>
    %1325 = arith.mulf %1324, %1302 : vector<16x16xf32>
    %c2_480 = arith.constant 2 : index
    %c1_481 = arith.constant 1 : index
    %1326 = memref.load %arg3[%c2_480, %c1_481] : memref<3x4xf32, #tpu.memory_space<smem>>
    %1327 = vector.broadcast %1326 : f32 to vector<16x16xf32>
    %1328 = arith.mulf %1325, %1327 : vector<16x16xf32>
    %c2_482 = arith.constant 2 : index
    %c1_483 = arith.constant 1 : index
    %1329 = memref.load %arg4[%c2_482, %c1_483] : memref<3x4xf32, #tpu.memory_space<smem>>
    %1330 = vector.broadcast %1329 : f32 to vector<16x16xf32>
    %1331 = arith.addf %1328, %1330 : vector<16x16xf32>
    %1332 = vector.broadcast %1200 : vector<1x16xf32> to vector<16x16xf32>
    %1333 = arith.mulf %1331, %1332 : vector<16x16xf32>
    %1334 = vector.shape_cast %1333 : vector<16x16xf32> to vector<1x16x16xf32>
    %cst_484 = arith.constant dense<0.000000e+00> : vector<1xf32>
    %1335 = vector.multi_reduction <add>, %1334, %cst_484 [1, 2] : vector<1x16x16xf32> to vector<1xf32>
    %1336 = vector.shape_cast %1335 : vector<1xf32> to vector<1x1x1xf32>
    %1337 = vector.extract %1336[0, 0, 0] : f32 from vector<1x1x1xf32>
    %1338 = vector.broadcast %1337 : f32 to vector<1x1xf32>
    %1339 = vector.extract_strided_slice %991 {offsets = [1, 0], sizes = [1, 16], strides = [1, 1]} : vector<4x16xf32> to vector<1x16xf32>
    %1340 = vector.broadcast %1338 : vector<1x1xf32> to vector<1x16xf32>
    %1341 = arith.mulf %1340, %1339 : vector<1x16xf32>
    %1342 = arith.addf %1323, %1341 : vector<1x16xf32>
    %1343 = arith.subf %1266, %1286 : vector<16x16xf32>
    %1344 = arith.mulf %1343, %1302 : vector<16x16xf32>
    %c2_485 = arith.constant 2 : index
    %c2_486 = arith.constant 2 : index
    %1345 = memref.load %arg3[%c2_485, %c2_486] : memref<3x4xf32, #tpu.memory_space<smem>>
    %1346 = vector.broadcast %1345 : f32 to vector<16x16xf32>
    %1347 = arith.mulf %1344, %1346 : vector<16x16xf32>
    %c2_487 = arith.constant 2 : index
    %c2_488 = arith.constant 2 : index
    %1348 = memref.load %arg4[%c2_487, %c2_488] : memref<3x4xf32, #tpu.memory_space<smem>>
    %1349 = vector.broadcast %1348 : f32 to vector<16x16xf32>
    %1350 = arith.addf %1347, %1349 : vector<16x16xf32>
    %1351 = vector.broadcast %1200 : vector<1x16xf32> to vector<16x16xf32>
    %1352 = arith.mulf %1350, %1351 : vector<16x16xf32>
    %1353 = vector.shape_cast %1352 : vector<16x16xf32> to vector<1x16x16xf32>
    %cst_489 = arith.constant dense<0.000000e+00> : vector<1xf32>
    %1354 = vector.multi_reduction <add>, %1353, %cst_489 [1, 2] : vector<1x16x16xf32> to vector<1xf32>
    %1355 = vector.shape_cast %1354 : vector<1xf32> to vector<1x1x1xf32>
    %1356 = vector.extract %1355[0, 0, 0] : f32 from vector<1x1x1xf32>
    %1357 = vector.broadcast %1356 : f32 to vector<1x1xf32>
    %1358 = vector.extract_strided_slice %991 {offsets = [2, 0], sizes = [1, 16], strides = [1, 1]} : vector<4x16xf32> to vector<1x16xf32>
    %1359 = vector.broadcast %1357 : vector<1x1xf32> to vector<1x16xf32>
    %1360 = arith.mulf %1359, %1358 : vector<1x16xf32>
    %1361 = arith.addf %1342, %1360 : vector<1x16xf32>
    %1362 = arith.subf %1281, %1286 : vector<16x16xf32>
    %1363 = arith.mulf %1362, %1302 : vector<16x16xf32>
    %c2_490 = arith.constant 2 : index
    %c3_491 = arith.constant 3 : index
    %1364 = memref.load %arg3[%c2_490, %c3_491] : memref<3x4xf32, #tpu.memory_space<smem>>
    %1365 = vector.broadcast %1364 : f32 to vector<16x16xf32>
    %1366 = arith.mulf %1363, %1365 : vector<16x16xf32>
    %c2_492 = arith.constant 2 : index
    %c3_493 = arith.constant 3 : index
    %1367 = memref.load %arg4[%c2_492, %c3_493] : memref<3x4xf32, #tpu.memory_space<smem>>
    %1368 = vector.broadcast %1367 : f32 to vector<16x16xf32>
    %1369 = arith.addf %1366, %1368 : vector<16x16xf32>
    %1370 = vector.broadcast %1200 : vector<1x16xf32> to vector<16x16xf32>
    %1371 = arith.mulf %1369, %1370 : vector<16x16xf32>
    %1372 = vector.shape_cast %1371 : vector<16x16xf32> to vector<1x16x16xf32>
    %cst_494 = arith.constant dense<0.000000e+00> : vector<1xf32>
    %1373 = vector.multi_reduction <add>, %1372, %cst_494 [1, 2] : vector<1x16x16xf32> to vector<1xf32>
    %1374 = vector.shape_cast %1373 : vector<1xf32> to vector<1x1x1xf32>
    %1375 = vector.extract %1374[0, 0, 0] : f32 from vector<1x1x1xf32>
    %1376 = vector.broadcast %1375 : f32 to vector<1x1xf32>
    %1377 = vector.extract_strided_slice %991 {offsets = [3, 0], sizes = [1, 16], strides = [1, 1]} : vector<4x16xf32> to vector<1x16xf32>
    %1378 = vector.broadcast %1376 : vector<1x1xf32> to vector<1x16xf32>
    %1379 = arith.mulf %1378, %1377 : vector<1x16xf32>
    %1380 = arith.addf %1361, %1379 : vector<1x16xf32>
    %cst_495 = arith.constant dense<0.000000e+00> : vector<1xf32>
    %1381 = vector.multi_reduction <add>, %1380, %cst_495 [1] : vector<1x16xf32> to vector<1xf32>
    %1382 = vector.shape_cast %1381 : vector<1xf32> to vector<1x1xf32>
    %cst_496 = arith.constant 1.600000e+01 : f32
    %1383 = vector.broadcast %cst_496 : f32 to vector<1x1xf32>
    %1384 = arith.divf %1382, %1383 : vector<1x1xf32>
    %1385 = vector.broadcast %1384 : vector<1x1xf32> to vector<1x16xf32>
    %1386 = arith.subf %1380, %1385 : vector<1x16xf32>
    %1387 = arith.mulf %1386, %1386 : vector<1x16xf32>
    %cst_497 = arith.constant dense<0.000000e+00> : vector<1xf32>
    %1388 = vector.multi_reduction <add>, %1387, %cst_497 [1] : vector<1x16xf32> to vector<1xf32>
    %1389 = vector.shape_cast %1388 : vector<1xf32> to vector<1x1xf32>
    %cst_498 = arith.constant 1.600000e+01 : f32
    %1390 = vector.broadcast %cst_498 : f32 to vector<1x1xf32>
    %1391 = arith.divf %1389, %1390 : vector<1x1xf32>
    %1392 = vector.broadcast %1384 : vector<1x1xf32> to vector<1x16xf32>
    %1393 = arith.subf %1380, %1392 : vector<1x16xf32>
    %cst_499 = arith.constant 9.99999974E-6 : f32
    %1394 = vector.broadcast %cst_499 : f32 to vector<1x1xf32>
    %1395 = arith.addf %1391, %1394 : vector<1x1xf32>
    %1396 = math.rsqrt %1395 : vector<1x1xf32>
    %1397 = vector.broadcast %1396 : vector<1x1xf32> to vector<1x16xf32>
    %1398 = arith.mulf %1393, %1397 : vector<1x16xf32>
    %1399 = arith.mulf %1398, %995 : vector<1x16xf32>
    %1400 = arith.addf %1399, %997 : vector<1x16xf32>
    %1401 = arith.addf %1200, %1400 : vector<1x16xf32>
    %1402 = tpu.concatenate %1199, %1401 in 0 : vector<1x16xf32>, vector<1x16xf32> -> vector<2x16xf32>
    %c2_500 = arith.constant 2 : index
    %c0_501 = arith.constant 0 : index
    %c0_502 = arith.constant 0 : index
    %1403 = vector.load %arg10[%c2_500, %c0_501, %c0_502] : memref<3x16x32xf32, #tpu.memory_space<vmem>>, vector<1x16x32xf32>
    %1404 = vector.shape_cast %1403 : vector<1x16x32xf32> to vector<16x32xf32>
    %cst_503 = arith.constant dense<0.000000e+00> : vector<2x32xf32>
    %1405 = tpu.matmul %1402, %1404, %cst_503 {dimension_numbers = #tpu.dot_dimension_numbers<[1], [0], [0], [1], [0, 0, 1, 1], [], []>} : vector<2x16xf32>, vector<16x32xf32>, vector<2x32xf32> -> vector<2x32xf32>
    %c2_504 = arith.constant 2 : index
    %c0_505 = arith.constant 0 : index
    %c0_506 = arith.constant 0 : index
    %1406 = vector.load %arg11[%c2_504, %c0_505, %c0_506] : memref<3x1x32xf32, #tpu.memory_space<vmem>>, vector<1x1x32xf32>
    %1407 = vector.shape_cast %1406 : vector<1x1x32xf32> to vector<1x32xf32>
    %1408 = vector.broadcast %1407 : vector<1x32xf32> to vector<2x32xf32>
    %1409 = arith.addf %1405, %1408 : vector<2x32xf32>
    %cst_507 = arith.constant 0.000000e+00 : f32
    %1410 = vector.broadcast %cst_507 : f32 to vector<2x32xf32>
    %1411 = arith.maximumf %1409, %1410 : vector<2x32xf32>
    %c2_508 = arith.constant 2 : index
    %c0_509 = arith.constant 0 : index
    %c0_510 = arith.constant 0 : index
    %1412 = vector.load %arg12[%c2_508, %c0_509, %c0_510] : memref<3x1x32xf32, #tpu.memory_space<vmem>>, vector<1x1x32xf32>
    %1413 = vector.shape_cast %1412 : vector<1x1x32xf32> to vector<1x32xf32>
    %c2_511 = arith.constant 2 : index
    %c0_512 = arith.constant 0 : index
    %c0_513 = arith.constant 0 : index
    %1414 = vector.load %arg13[%c2_511, %c0_512, %c0_513] : memref<3x1x32xf32, #tpu.memory_space<vmem>>, vector<1x1x32xf32>
    %1415 = vector.shape_cast %1414 : vector<1x1x32xf32> to vector<1x32xf32>
    %cst_514 = arith.constant dense<0.000000e+00> : vector<2xf32>
    %1416 = vector.multi_reduction <add>, %1411, %cst_514 [1] : vector<2x32xf32> to vector<2xf32>
    %1417 = vector.shape_cast %1416 : vector<2xf32> to vector<2x1xf32>
    %cst_515 = arith.constant 3.200000e+01 : f32
    %1418 = vector.broadcast %cst_515 : f32 to vector<2x1xf32>
    %1419 = arith.divf %1417, %1418 : vector<2x1xf32>
    %1420 = vector.broadcast %1419 : vector<2x1xf32> to vector<2x32xf32>
    %1421 = arith.subf %1411, %1420 : vector<2x32xf32>
    %1422 = arith.mulf %1421, %1421 : vector<2x32xf32>
    %cst_516 = arith.constant dense<0.000000e+00> : vector<2xf32>
    %1423 = vector.multi_reduction <add>, %1422, %cst_516 [1] : vector<2x32xf32> to vector<2xf32>
    %1424 = vector.shape_cast %1423 : vector<2xf32> to vector<2x1xf32>
    %cst_517 = arith.constant 3.200000e+01 : f32
    %1425 = vector.broadcast %cst_517 : f32 to vector<2x1xf32>
    %1426 = arith.divf %1424, %1425 : vector<2x1xf32>
    %1427 = vector.broadcast %1419 : vector<2x1xf32> to vector<2x32xf32>
    %1428 = arith.subf %1411, %1427 : vector<2x32xf32>
    %cst_518 = arith.constant 9.99999974E-6 : f32
    %1429 = vector.broadcast %cst_518 : f32 to vector<2x1xf32>
    %1430 = arith.addf %1426, %1429 : vector<2x1xf32>
    %1431 = math.rsqrt %1430 : vector<2x1xf32>
    %1432 = vector.broadcast %1431 : vector<2x1xf32> to vector<2x32xf32>
    %1433 = arith.mulf %1428, %1432 : vector<2x32xf32>
    %1434 = vector.broadcast %1413 : vector<1x32xf32> to vector<2x32xf32>
    %1435 = arith.mulf %1433, %1434 : vector<2x32xf32>
    %1436 = vector.broadcast %1415 : vector<1x32xf32> to vector<2x32xf32>
    %1437 = arith.addf %1435, %1436 : vector<2x32xf32>
    %c2_519 = arith.constant 2 : index
    %c0_520 = arith.constant 0 : index
    %c0_521 = arith.constant 0 : index
    %1438 = vector.load %arg14[%c2_519, %c0_520, %c0_521] : memref<3x32x32xf32, #tpu.memory_space<vmem>>, vector<1x32x32xf32>
    %1439 = vector.shape_cast %1438 : vector<1x32x32xf32> to vector<32x32xf32>
    %cst_522 = arith.constant dense<0.000000e+00> : vector<2x32xf32>
    %1440 = tpu.matmul %1437, %1439, %cst_522 {dimension_numbers = #tpu.dot_dimension_numbers<[1], [0], [0], [1], [0, 0, 1, 1], [], []>} : vector<2x32xf32>, vector<32x32xf32>, vector<2x32xf32> -> vector<2x32xf32>
    %c2_523 = arith.constant 2 : index
    %c0_524 = arith.constant 0 : index
    %c0_525 = arith.constant 0 : index
    %1441 = vector.load %arg15[%c2_523, %c0_524, %c0_525] : memref<3x1x32xf32, #tpu.memory_space<vmem>>, vector<1x1x32xf32>
    %1442 = vector.shape_cast %1441 : vector<1x1x32xf32> to vector<1x32xf32>
    %1443 = vector.broadcast %1442 : vector<1x32xf32> to vector<2x32xf32>
    %1444 = arith.addf %1440, %1443 : vector<2x32xf32>
    %cst_526 = arith.constant 0.000000e+00 : f32
    %1445 = vector.broadcast %cst_526 : f32 to vector<2x32xf32>
    %1446 = arith.maximumf %1444, %1445 : vector<2x32xf32>
    %c2_527 = arith.constant 2 : index
    %c0_528 = arith.constant 0 : index
    %c0_529 = arith.constant 0 : index
    %1447 = vector.load %arg16[%c2_527, %c0_528, %c0_529] : memref<3x1x32xf32, #tpu.memory_space<vmem>>, vector<1x1x32xf32>
    %1448 = vector.shape_cast %1447 : vector<1x1x32xf32> to vector<1x32xf32>
    %c2_530 = arith.constant 2 : index
    %c0_531 = arith.constant 0 : index
    %c0_532 = arith.constant 0 : index
    %1449 = vector.load %arg17[%c2_530, %c0_531, %c0_532] : memref<3x1x32xf32, #tpu.memory_space<vmem>>, vector<1x1x32xf32>
    %1450 = vector.shape_cast %1449 : vector<1x1x32xf32> to vector<1x32xf32>
    %cst_533 = arith.constant dense<0.000000e+00> : vector<2xf32>
    %1451 = vector.multi_reduction <add>, %1446, %cst_533 [1] : vector<2x32xf32> to vector<2xf32>
    %1452 = vector.shape_cast %1451 : vector<2xf32> to vector<2x1xf32>
    %cst_534 = arith.constant 3.200000e+01 : f32
    %1453 = vector.broadcast %cst_534 : f32 to vector<2x1xf32>
    %1454 = arith.divf %1452, %1453 : vector<2x1xf32>
    %1455 = vector.broadcast %1454 : vector<2x1xf32> to vector<2x32xf32>
    %1456 = arith.subf %1446, %1455 : vector<2x32xf32>
    %1457 = arith.mulf %1456, %1456 : vector<2x32xf32>
    %cst_535 = arith.constant dense<0.000000e+00> : vector<2xf32>
    %1458 = vector.multi_reduction <add>, %1457, %cst_535 [1] : vector<2x32xf32> to vector<2xf32>
    %1459 = vector.shape_cast %1458 : vector<2xf32> to vector<2x1xf32>
    %cst_536 = arith.constant 3.200000e+01 : f32
    %1460 = vector.broadcast %cst_536 : f32 to vector<2x1xf32>
    %1461 = arith.divf %1459, %1460 : vector<2x1xf32>
    %1462 = vector.broadcast %1454 : vector<2x1xf32> to vector<2x32xf32>
    %1463 = arith.subf %1446, %1462 : vector<2x32xf32>
    %cst_537 = arith.constant 9.99999974E-6 : f32
    %1464 = vector.broadcast %cst_537 : f32 to vector<2x1xf32>
    %1465 = arith.addf %1461, %1464 : vector<2x1xf32>
    %1466 = math.rsqrt %1465 : vector<2x1xf32>
    %1467 = vector.broadcast %1466 : vector<2x1xf32> to vector<2x32xf32>
    %1468 = arith.mulf %1463, %1467 : vector<2x32xf32>
    %1469 = vector.broadcast %1448 : vector<1x32xf32> to vector<2x32xf32>
    %1470 = arith.mulf %1468, %1469 : vector<2x32xf32>
    %1471 = vector.broadcast %1450 : vector<1x32xf32> to vector<2x32xf32>
    %1472 = arith.addf %1470, %1471 : vector<2x32xf32>
    %1473 = arith.addf %1437, %1472 : vector<2x32xf32>
    %c2_538 = arith.constant 2 : index
    %c0_539 = arith.constant 0 : index
    %c0_540 = arith.constant 0 : index
    %1474 = vector.load %arg18[%c2_538, %c0_539, %c0_540] : memref<3x32x8xf32, #tpu.memory_space<vmem>>, vector<1x32x8xf32>
    %1475 = vector.shape_cast %1474 : vector<1x32x8xf32> to vector<32x8xf32>
    %cst_541 = arith.constant dense<0.000000e+00> : vector<2x8xf32>
    %1476 = tpu.matmul %1473, %1475, %cst_541 {dimension_numbers = #tpu.dot_dimension_numbers<[1], [0], [0], [1], [0, 0, 1, 1], [], []>} : vector<2x32xf32>, vector<32x8xf32>, vector<2x8xf32> -> vector<2x8xf32>
    %c2_542 = arith.constant 2 : index
    %c0_543 = arith.constant 0 : index
    %c0_544 = arith.constant 0 : index
    %1477 = vector.load %arg19[%c2_542, %c0_543, %c0_544] : memref<3x1x8xf32, #tpu.memory_space<vmem>>, vector<1x1x8xf32>
    %1478 = vector.shape_cast %1477 : vector<1x1x8xf32> to vector<1x8xf32>
    %1479 = vector.broadcast %1478 : vector<1x8xf32> to vector<2x8xf32>
    %1480 = arith.addf %1476, %1479 : vector<2x8xf32>
    %1481 = arith.addf %494, %987 : vector<2x8xf32>
    %1482 = arith.addf %1481, %1480 : vector<2x8xf32>
    %cst_545 = arith.constant 0.333333343 : f32
    %1483 = vector.broadcast %cst_545 : f32 to vector<2x8xf32>
    %1484 = arith.mulf %1482, %1483 : vector<2x8xf32>
    %1485 = arith.subf %494, %1484 : vector<2x8xf32>
    %1486 = arith.mulf %1485, %1485 : vector<2x8xf32>
    %1487 = arith.subf %987, %1484 : vector<2x8xf32>
    %1488 = arith.mulf %1487, %1487 : vector<2x8xf32>
    %1489 = arith.addf %1486, %1488 : vector<2x8xf32>
    %1490 = arith.subf %1480, %1484 : vector<2x8xf32>
    %1491 = arith.mulf %1490, %1490 : vector<2x8xf32>
    %1492 = arith.addf %1489, %1491 : vector<2x8xf32>
    %cst_546 = arith.constant 5.000000e-01 : f32
    %1493 = vector.broadcast %cst_546 : f32 to vector<2x8xf32>
    %1494 = arith.mulf %1492, %1493 : vector<2x8xf32>
    %c0_547 = arith.constant 0 : index
    %c0_548 = arith.constant 0 : index
    %1495 = vector.load %arg20[%c0_547, %c0_548] : memref<2x8xf32, #tpu.memory_space<vmem>>, vector<2x8xf32>
    tpu.vector_store %arg20[%c0_547, %c0_548], %1484 {strides = array<i32>} : memref<2x8xf32, #tpu.memory_space<vmem>>, vector<2x8xf32>,
    %1496 = math.sqrt %1494 : vector<2x8xf32>
    %c0_549 = arith.constant 0 : index
    %c0_550 = arith.constant 0 : index
    %1497 = vector.load %arg21[%c0_549, %c0_550] : memref<2x8xf32, #tpu.memory_space<vmem>>, vector<2x8xf32>
    tpu.vector_store %arg21[%c0_549, %c0_550], %1496 {strides = array<i32>} : memref<2x8xf32, #tpu.memory_space<vmem>>, vector<2x8xf32>,
    return
  }
}

</mosaic_0001>

<llo_original>
// kernel: tpu_custom_call.1
$region0: #{tpu_custom_call.1}
  #allocation0 [shape = 'u32[]', space=smem, size = 0x4, offset = 0x4, fixed_abs, tag = 'smem constant byte address 0x4 - core index']
  #allocation1 [shape = 'u32[72,128]{1,0:T(1,128)}', space=vmem, size = 0x9000, scoped, tag = 'internal scratch']
  %s0 = inlined_call_operand.vmem [shape: f32[2,16], index: 0, kind: input, shape index: {}]
  %s1 = inlined_call_operand.vmem [shape: f32[16,2], index: 1, kind: input, shape index: {}]
  %s2 = inlined_call_operand.vmem [shape: f32[3,16], index: 2, kind: input, shape index: {}]
  %s3 = inlined_call_operand.vmem [shape: f32[3,4], index: 3, kind: input, shape index: {}]
  %s4 = inlined_call_operand.vmem [shape: f32[3,4], index: 4, kind: input, shape index: {}]
  %s5 = inlined_call_operand.vmem [shape: f32[3,64,1], index: 5, kind: input, shape index: {}]
  %s6 = inlined_call_operand.vmem [shape: f32[3,4,16], index: 6, kind: input, shape index: {}]
  %s7 = inlined_call_operand.vmem [shape: f32[3,1,16], index: 7, kind: input, shape index: {}]
  %s8 = inlined_call_operand.vmem [shape: f32[3,1,16], index: 8, kind: input, shape index: {}]
  %s9 = inlined_call_operand.vmem [shape: f32[3,1,16], index: 9, kind: input, shape index: {}]
  %s10 = inlined_call_operand.vmem [shape: f32[3,16,32], index: 10, kind: input, shape index: {}]
  %s11 = inlined_call_operand.vmem [shape: f32[3,1,32], index: 11, kind: input, shape index: {}]
  %s12 = inlined_call_operand.vmem [shape: f32[3,1,32], index: 12, kind: input, shape index: {}]
  %s13 = inlined_call_operand.vmem [shape: f32[3,1,32], index: 13, kind: input, shape index: {}]
  %s14 = inlined_call_operand.vmem [shape: f32[3,32,32], index: 14, kind: input, shape index: {}]
  %s15 = inlined_call_operand.vmem [shape: f32[3,1,32], index: 15, kind: input, shape index: {}]
  %s16 = inlined_call_operand.vmem [shape: f32[3,1,32], index: 16, kind: input, shape index: {}]
  %s17 = inlined_call_operand.vmem [shape: f32[3,1,32], index: 17, kind: input, shape index: {}]
  %s18 = inlined_call_operand.vmem [shape: f32[3,32,8], index: 18, kind: input, shape index: {}]
  %s19 = inlined_call_operand.vmem [shape: f32[3,1,8], index: 19, kind: input, shape index: {}]
  %s20 = inlined_call_operand.hbm [shape: f32[2,8], index: 20, kind: output, shape index: {0}]
  %s21 = inlined_call_operand.hbm [shape: f32[2,8], index: 21, kind: output, shape index: {1}]
  %22 = xla_tuple %s20, %s21
  %s23 = sld [smem:[#allocation0]]
  $region110: #{tpu_custom_call.1} parent=0
    _
  %s25 = ssub.s32 1, %s23
  %s26 = scalar_select 0, %s25, %s23
  $region1: #{tpu_custom_call.1} parent=0
    #allocation2 [shape = 'u8[2048]{0}', space=smem, size = 0x800, scoped, tag = 'input window, operand 2, single buffered']
    #allocation3 [shape = 's32[1]{0}', space=sflag, size = 0x4, scoped, tag = 'scoped memory for tpu_custom_call.1']
    #allocation4 [shape = 's32[1]{0}', space=sflag, size = 0x4, scoped, tag = 'scoped memory for tpu_custom_call.1']
    #allocation5 [shape = 'u8[2048]{0}', space=smem, size = 0x800, scoped, tag = 'input window, operand 3, single buffered']
    #allocation6 [shape = 's32[1]{0}', space=sflag, size = 0x4, scoped, tag = 'scoped memory for tpu_custom_call.1']
    #allocation7 [shape = 'u8[2048]{0}', space=smem, size = 0x800, scoped, tag = 'input window, operand 4, single buffered']
    #allocation8 [shape = 'u8[1024]{0}', space=vmem, size = 0x400, scoped, tag = 'output window, operand 0, single buffered']
    #allocation9 [shape = 'u8[1024]{0}', space=vmem, size = 0x400, scoped, tag = 'output window, operand 1, single buffered']
    #allocation10 [shape = 's32[1]{0}', space=sflag, size = 0x4, scoped, tag = 'scoped memory for tpu_custom_call.1']
    %27 = vsyncpa [#allocation4], 0
    %28 = vsyncpa [#allocation6], 0
    %29 = vsyncpa [#allocation3], 0
    %30 = vsyncpa [#allocation10], 0
    // Predicated region
    $region2: #{tpu_custom_call.1} parent=1 // pred_check
      _
    $region3: #{tpu_custom_call.1} parent=1 // pred_check_branch
      %32 = sbr.rel (0) target = $region5
    $region4: #{tpu_custom_call.1} parent=1 // pred_region
      _
    $region5: #{tpu_custom_call.1} parent=1 // pred_fallthru
      _
    // Predicated region
    $region6: #{tpu_custom_call.1} parent=1 // pred_check
      _
    $region7: #{tpu_custom_call.1} parent=1 // pred_check_branch
      %34 = sbr.rel (0) target = $region9
    $region8: #{tpu_custom_call.1} parent=1 // pred_region
      _
    $region9: #{tpu_custom_call.1} parent=1 // pred_fallthru
      _
    // Predicated region
    $region10: #{tpu_custom_call.1} parent=1 // pred_check
      _
    $region11: #{tpu_custom_call.1} parent=1 // pred_check_branch
      %36 = sbr.rel (0) target = $region13
    $region12: #{tpu_custom_call.1} parent=1 // pred_region
      %38 = vsyncadd [#allocation4], 0
      %s40 = sshll.u32 %s2, 4
      %s41 = int_to_ptr.vmem [resolvable:$true] %s40
      %43 = dma.vmem_to_smem %s41, 64, [#allocation2], [#allocation4]
    $region13: #{tpu_custom_call.1} parent=1 // pred_fallthru
      _
    // Predicated region
    $region14: #{tpu_custom_call.1} parent=1 // pred_check
      _
    $region15: #{tpu_custom_call.1} parent=1 // pred_check_branch
      %45 = sbr.rel (0) target = $region17
    $region16: #{tpu_custom_call.1} parent=1 // pred_region
      %47 = vsyncadd [#allocation6], 0
      %s49 = sshll.u32 %s3, 4
      %s50 = int_to_ptr.vmem [resolvable:$true] %s49
      %52 = dma.vmem_to_smem %s50, 64, [#allocation5], [#allocation6]
    $region17: #{tpu_custom_call.1} parent=1 // pred_fallthru
      _
    // Predicated region
    $region18: #{tpu_custom_call.1} parent=1 // pred_check
      _
    $region19: #{tpu_custom_call.1} parent=1 // pred_check_branch
      %54 = sbr.rel (0) target = $region21
    $region20: #{tpu_custom_call.1} parent=1 // pred_region
      %56 = vsyncadd [#allocation6], 0
      %s58 = sshll.u32 %s4, 4
      %s59 = int_to_ptr.vmem [resolvable:$true] %s58
      %61 = dma.vmem_to_smem %s59, 64, [#allocation7], [#allocation6]
    $region21: #{tpu_custom_call.1} parent=1 // pred_fallthru
      _
    // Predicated region
    $region22: #{tpu_custom_call.1} parent=1 // pred_check
      _
    $region23: #{tpu_custom_call.1} parent=1 // pred_check_branch
      %63 = sbr.rel (0) target = $region25
    $region24: #{tpu_custom_call.1} parent=1 // pred_region
      _
    $region25: #{tpu_custom_call.1} parent=1 // pred_fallthru
      _
    // Predicated region
    $region26: #{tpu_custom_call.1} parent=1 // pred_check
      _
    $region27: #{tpu_custom_call.1} parent=1 // pred_check_branch
      %65 = sbr.rel (0) target = $region29
    $region28: #{tpu_custom_call.1} parent=1 // pred_region
      _
    $region29: #{tpu_custom_call.1} parent=1 // pred_fallthru
      _
    // Predicated region
    $region30: #{tpu_custom_call.1} parent=1 // pred_check
      _
    $region31: #{tpu_custom_call.1} parent=1 // pred_check_branch
      %67 = sbr.rel (0) target = $region33
    $region32: #{tpu_custom_call.1} parent=1 // pred_region
      _
    $region33: #{tpu_custom_call.1} parent=1 // pred_fallthru
      _
    // Predicated region
    $region34: #{tpu_custom_call.1} parent=1 // pred_check
      _
    $region35: #{tpu_custom_call.1} parent=1 // pred_check_branch
      %69 = sbr.rel (0) target = $region37
    $region36: #{tpu_custom_call.1} parent=1 // pred_region
      _
    $region37: #{tpu_custom_call.1} parent=1 // pred_fallthru
      _
    // Predicated region
    $region38: #{tpu_custom_call.1} parent=1 // pred_check
      _
    $region39: #{tpu_custom_call.1} parent=1 // pred_check_branch
      %71 = sbr.rel (0) target = $region41
    $region40: #{tpu_custom_call.1} parent=1 // pred_region
      _
    $region41: #{tpu_custom_call.1} parent=1 // pred_fallthru
      _
    // Predicated region
    $region42: #{tpu_custom_call.1} parent=1 // pred_check
      _
    $region43: #{tpu_custom_call.1} parent=1 // pred_check_branch
      %73 = sbr.rel (0) target = $region45
    $region44: #{tpu_custom_call.1} parent=1 // pred_region
      _
    $region45: #{tpu_custom_call.1} parent=1 // pred_fallthru
      _
    // Predicated region
    $region46: #{tpu_custom_call.1} parent=1 // pred_check
      _
    $region47: #{tpu_custom_call.1} parent=1 // pred_check_branch
      %75 = sbr.rel (0) target = $region49
    $region48: #{tpu_custom_call.1} parent=1 // pred_region
      _
    $region49: #{tpu_custom_call.1} parent=1 // pred_fallthru
      _
    // Predicated region
    $region50: #{tpu_custom_call.1} parent=1 // pred_check
      _
    $region51: #{tpu_custom_call.1} parent=1 // pred_check_branch
      %77 = sbr.rel (0) target = $region53
    $region52: #{tpu_custom_call.1} parent=1 // pred_region
      _
    $region53: #{tpu_custom_call.1} parent=1 // pred_fallthru
      _
    // Predicated region
    $region54: #{tpu_custom_call.1} parent=1 // pred_check
      _
    $region55: #{tpu_custom_call.1} parent=1 // pred_check_branch
      %79 = sbr.rel (0) target = $region57
    $region56: #{tpu_custom_call.1} parent=1 // pred_region
      _
    $region57: #{tpu_custom_call.1} parent=1 // pred_fallthru
      _
    // Predicated region
    $region58: #{tpu_custom_call.1} parent=1 // pred_check
      _
    $region59: #{tpu_custom_call.1} parent=1 // pred_check_branch
      %81 = sbr.rel (0) target = $region61
    $region60: #{tpu_custom_call.1} parent=1 // pred_region
      _
    $region61: #{tpu_custom_call.1} parent=1 // pred_fallthru
      _
    // Predicated region
    $region62: #{tpu_custom_call.1} parent=1 // pred_check
      _
    $region63: #{tpu_custom_call.1} parent=1 // pred_check_branch
      %83 = sbr.rel (0) target = $region65
    $region64: #{tpu_custom_call.1} parent=1 // pred_region
      _
    $region65: #{tpu_custom_call.1} parent=1 // pred_fallthru
      _
    // Predicated region
    $region66: #{tpu_custom_call.1} parent=1 // pred_check
      _
    $region67: #{tpu_custom_call.1} parent=1 // pred_check_branch
      %85 = sbr.rel (0) target = $region69
    $region68: #{tpu_custom_call.1} parent=1 // pred_region
      _
    $region69: #{tpu_custom_call.1} parent=1 // pred_fallthru
      _
    // Predicated region
    $region70: #{tpu_custom_call.1} parent=1 // pred_check
      _
    $region71: #{tpu_custom_call.1} parent=1 // pred_check_branch
      %87 = sbr.rel (0) target = $region73
    $region72: #{tpu_custom_call.1} parent=1 // pred_region
      _
    $region73: #{tpu_custom_call.1} parent=1 // pred_fallthru
      _
    // Predicated region
    $region74: #{tpu_custom_call.1} parent=1 // pred_check
      _
    $region75: #{tpu_custom_call.1} parent=1 // pred_check_branch
      %89 = sbr.rel (0) target = $region77
    $region76: #{tpu_custom_call.1} parent=1 // pred_region
      _
    $region77: #{tpu_custom_call.1} parent=1 // pred_fallthru
      _
    // Predicated region
    $region78: #{tpu_custom_call.1} parent=1 // pred_check
      _
    $region79: #{tpu_custom_call.1} parent=1 // pred_check_branch
      %91 = sbr.rel (0) target = $region81
    $region80: #{tpu_custom_call.1} parent=1 // pred_region
      _
    $region81: #{tpu_custom_call.1} parent=1 // pred_fallthru
      _
    // Predicated region
    $region82: #{tpu_custom_call.1} parent=1 // pred_check
      _
    $region83: #{tpu_custom_call.1} parent=1 // pred_check_branch
      %93 = sbr.rel (0) target = $region85
    $region84: #{tpu_custom_call.1} parent=1 // pred_region
      %95 = dma.done [#allocation4], 64
    $region85: #{tpu_custom_call.1} parent=1 // pred_fallthru
      _
    // Predicated region
    $region86: #{tpu_custom_call.1} parent=1 // pred_check
      _
    $region87: #{tpu_custom_call.1} parent=1 // pred_check_branch
      %97 = sbr.rel (0) target = $region89
    $region88: #{tpu_custom_call.1} parent=1 // pred_region
      %99 = dma.done [#allocation6], 64
    $region89: #{tpu_custom_call.1} parent=1 // pred_fallthru
      _
    // Predicated region
    $region90: #{tpu_custom_call.1} parent=1 // pred_check
      _
    $region91: #{tpu_custom_call.1} parent=1 // pred_check_branch
      %101 = sbr.rel (0) target = $region93
    $region92: #{tpu_custom_call.1} parent=1 // pred_region
      %103 = dma.done [#allocation6], 64
    $region93: #{tpu_custom_call.1} parent=1 // pred_fallthru
      _
    %104 = sfence
    %v105 = vld [vmem:[%s0] sm:$0x3]
    %v106 = vld [vmem:[%s1] sm:$0xff]
    %v107 = vld [vmem:[%s1 + $0x8] sm:$0xff]
    %v108 = vld [vmem:[%s5] sm:$0xff]
    %v109 = vld [vmem:[%s5 + $0x8] sm:$0xff]
    %v110 = vld [vmem:[%s5 + $0x10] sm:$0xff]
    %v111 = vld [vmem:[%s5 + $0x18] sm:$0xff]
    %v112 = vld [vmem:[%s5 + $0x20] sm:$0xff]
    %v113 = vld [vmem:[%s5 + $0x28] sm:$0xff]
    %v114 = vld [vmem:[%s5 + $0x30] sm:$0xff]
    %v115 = vld [vmem:[%s5 + $0x38] sm:$0xff]
    %v116 = vld [vmem:[%s6] sm:$0xf]
    %v117 = vld [vmem:[%s7] sm:$0x1]
    %v118 = vld [vmem:[%s8] sm:$0x1]
    %v119 = vld [vmem:[%s9] sm:$0x1]
    %121 = vset.pattern.permute.xlu0 0
    %122 = vperm.xlu0 %121, %v106
    %v123 = vpop.permute.xlu0 %122
    %126 = vset.pattern.permute.xlu0 0
    %127 = vperm.xlu0 %126, %v107
    %v128 = vpop.permute.xlu0 %127
    %v130 = vperm.slane %v105, 0
    %v131 = vmul.f32 %v123, %v130
    %v132 = vmul.f32 %v128, %v130
    %134 = vset.pattern.permute.xlu0 0
    %135 = vperm.xlu0 %134, %v108
    %v136 = vpop.permute.xlu0 %135
    %139 = vset.pattern.permute.xlu0 0
    %140 = vperm.xlu0 %139, %v109
    %v141 = vpop.permute.xlu0 %140
    %144 = vset.pattern.permute.xlu0 0
    %145 = vperm.xlu0 %144, %v110
    %v146 = vpop.permute.xlu0 %145
    %149 = vset.pattern.permute.xlu0 0
    %150 = vperm.xlu0 %149, %v111
    %v151 = vpop.permute.xlu0 %150
    %154 = vset.pattern.permute.xlu0 0
    %155 = vperm.xlu0 %154, %v112
    %v156 = vpop.permute.xlu0 %155
    %159 = vset.pattern.permute.xlu0 0
    %160 = vperm.xlu0 %159, %v113
    %v161 = vpop.permute.xlu0 %160
    %164 = vset.pattern.permute.xlu0 0
    %165 = vperm.xlu0 %164, %v114
    %v166 = vpop.permute.xlu0 %165
    %169 = vset.pattern.permute.xlu0 0
    %170 = vperm.xlu0 %169, %v115
    %v171 = vpop.permute.xlu0 %170
    %v173 = vmul.f32 %v131, %v136
    %v174 = vmul.f32 %v132, %v141
    %v175 = vmul.f32 %v131, %v146
    %v176 = vmul.f32 %v132, %v151
    %v177 = vmul.f32 %v131, %v156
    %v178 = vmul.f32 %v132, %v161
    %v179 = vmul.f32 %v131, %v166
    %v180 = vmul.f32 %v132, %v171
    %vm181 = vcmask 130048
    %v182 = vsel %vm181, %v173, -inf
    %183 = vmax.xlane.f32.xlu0 %v182
    %v184 = vpop.xlane.xlu0 %183
    %v185 = vsel %vm181, %v174, -inf
    %186 = vmax.xlane.f32.xlu0 %v185
    %v187 = vpop.xlane.xlu0 %186
    %v188 = vsel %vm181, %v175, -inf
    %189 = vmax.xlane.f32.xlu0 %v188
    %v190 = vpop.xlane.xlu0 %189
    %v191 = vsel %vm181, %v176, -inf
    %192 = vmax.xlane.f32.xlu0 %v191
    %v193 = vpop.xlane.xlu0 %192
    %v194 = vsel %vm181, %v177, -inf
    %195 = vmax.xlane.f32.xlu0 %v194
    %v196 = vpop.xlane.xlu0 %195
    %v197 = vsel %vm181, %v178, -inf
    %198 = vmax.xlane.f32.xlu0 %v197
    %v199 = vpop.xlane.xlu0 %198
    %v200 = vsel %vm181, %v179, -inf
    %201 = vmax.xlane.f32.xlu0 %v200
    %v202 = vpop.xlane.xlu0 %201
    %v203 = vsel %vm181, %v180, -inf
    %204 = vmax.xlane.f32.xlu0 %v203
    %v205 = vpop.xlane.xlu0 %204
    %v206 = vsub.f32 %v173, %v184
    %v207 = vsub.f32 %v174, %v187
    %v208 = vsub.f32 %v175, %v190
    %v209 = vsub.f32 %v176, %v193
    %v210 = vsub.f32 %v177, %v196
    %v211 = vsub.f32 %v178, %v199
    %v212 = vsub.f32 %v179, %v202
    %v213 = vsub.f32 %v180, %v205
    %v214 = vmul.f32 %v206, 1.442695
    %v215 = vpow.pop %v214
    %v216 = vmul.f32 %v207, 1.442695
    %v217 = vpow.pop %v216
    %v218 = vmul.f32 %v208, 1.442695
    %v219 = vpow.pop %v218
    %v220 = vmul.f32 %v209, 1.442695
    %v221 = vpow.pop %v220
    %v222 = vmul.f32 %v210, 1.442695
    %v223 = vpow.pop %v222
    %v224 = vmul.f32 %v211, 1.442695
    %v225 = vpow.pop %v224
    %v226 = vmul.f32 %v212, 1.442695
    %v227 = vpow.pop %v226
    %v228 = vmul.f32 %v213, 1.442695
    %v229 = vpow.pop %v228
    %v230 = vsel %vm181, %v215, 0.0
    %231 = vadd.xlane.f32.xlu0 %v230
    %v232 = vpop.xlane.xlu0 %231
    %v233 = vsel %vm181, %v217, 0.0
    %234 = vadd.xlane.f32.xlu0 %v233
    %v235 = vpop.xlane.xlu0 %234
    %v236 = vsel %vm181, %v219, 0.0
    %237 = vadd.xlane.f32.xlu0 %v236
    %v238 = vpop.xlane.xlu0 %237
    %v239 = vsel %vm181, %v221, 0.0
    %240 = vadd.xlane.f32.xlu0 %v239
    %v241 = vpop.xlane.xlu0 %240
    %v242 = vsel %vm181, %v223, 0.0
    %243 = vadd.xlane.f32.xlu0 %v242
    %v244 = vpop.xlane.xlu0 %243
    %v245 = vsel %vm181, %v225, 0.0
    %246 = vadd.xlane.f32.xlu0 %v245
    %v247 = vpop.xlane.xlu0 %246
    %v248 = vsel %vm181, %v227, 0.0
    %249 = vadd.xlane.f32.xlu0 %v248
    %v250 = vpop.xlane.xlu0 %249
    %v251 = vsel %vm181, %v229, 0.0
    %252 = vadd.xlane.f32.xlu0 %v251
    %v253 = vpop.xlane.xlu0 %252
    %v254 = vrcp.pop %v232
    %v255 = vrcp.pop %v235
    %v256 = vrcp.pop %v238
    %v257 = vrcp.pop %v241
    %v258 = vrcp.pop %v244
    %v259 = vrcp.pop %v247
    %v260 = vrcp.pop %v250
    %v261 = vrcp.pop %v253
    %v262 = vmul.f32 %v215, %v254
    %v263 = vmul.f32 %v217, %v255
    %v264 = vmul.f32 %v219, %v256
    %v265 = vmul.f32 %v221, %v257
    %v266 = vmul.f32 %v223, %v258
    %v267 = vmul.f32 %v225, %v259
    %v268 = vmul.f32 %v227, %v260
    %v269 = vmul.f32 %v229, %v261
    %s270 = sld [smem:[#allocation2]]
    %v271 = vstv %s270
    %v272 = vmul.f32 %v262, %v271
    %v273 = vmul.f32 %v263, %v271
    %s274 = sld [smem:[#allocation2 + $0x4]]
    %v275 = vstv %s274
    %v276 = vmul.f32 %v264, %v275
    %v277 = vmul.f32 %v265, %v275
    %v278 = vadd.f32 %v272, %v276
    %v279 = vadd.f32 %v273, %v277
    %s280 = sld [smem:[#allocation2 + $0x8]]
    %v281 = vstv %s280
    %v282 = vmul.f32 %v266, %v281
    %v283 = vmul.f32 %v267, %v281
    %v284 = vadd.f32 %v278, %v282
    %v285 = vadd.f32 %v279, %v283
    %s286 = sld [smem:[#allocation2 + $0xc]]
    %v287 = vstv %s286
    %v288 = vmul.f32 %v268, %v287
    %v289 = vmul.f32 %v269, %v287
    %v290 = vadd.f32 %v284, %v288
    %v291 = vadd.f32 %v285, %v289
    %s292 = sld [smem:[#allocation2 + $0x1]]
    %v293 = vstv %s292
    %v294 = vmul.f32 %v262, %v293
    %v295 = vmul.f32 %v263, %v293
    %s296 = sld [smem:[#allocation2 + $0x5]]
    %v297 = vstv %s296
    %v298 = vmul.f32 %v264, %v297
    %v299 = vmul.f32 %v265, %v297
    %v300 = vadd.f32 %v294, %v298
    %v301 = vadd.f32 %v295, %v299
    %s302 = sld [smem:[#allocation2 + $0x9]]
    %v303 = vstv %s302
    %v304 = vmul.f32 %v266, %v303
    %v305 = vmul.f32 %v267, %v303
    %v306 = vadd.f32 %v300, %v304
    %v307 = vadd.f32 %v301, %v305
    %s308 = sld [smem:[#allocation2 + $0xd]]
    %v309 = vstv %s308
    %v310 = vmul.f32 %v268, %v309
    %v311 = vmul.f32 %v269, %v309
    %v312 = vadd.f32 %v306, %v310
    %v313 = vadd.f32 %v307, %v311
    %s314 = sld [smem:[#allocation2 + $0x2]]
    %v315 = vstv %s314
    %v316 = vmul.f32 %v262, %v315
    %v317 = vmul.f32 %v263, %v315
    %s318 = sld [smem:[#allocation2 + $0x6]]
    %v319 = vstv %s318
    %v320 = vmul.f32 %v264, %v319
    %v321 = vmul.f32 %v265, %v319
    %v322 = vadd.f32 %v316, %v320
    %v323 = vadd.f32 %v317, %v321
    %s324 = sld [smem:[#allocation2 + $0xa]]
    %v325 = vstv %s324
    %v326 = vmul.f32 %v266, %v325
    %v327 = vmul.f32 %v267, %v325
    %v328 = vadd.f32 %v322, %v326
    %v329 = vadd.f32 %v323, %v327
    %s330 = sld [smem:[#allocation2 + $0xe]]
    %v331 = vstv %s330
    %v332 = vmul.f32 %v268, %v331
    %v333 = vmul.f32 %v269, %v331
    %v334 = vadd.f32 %v328, %v332
    %v335 = vadd.f32 %v329, %v333
    %s336 = sld [smem:[#allocation2 + $0x3]]
    %v337 = vstv %s336
    %v338 = vmul.f32 %v262, %v337
    %v339 = vmul.f32 %v263, %v337
    %s340 = sld [smem:[#allocation2 + $0x7]]
    %v341 = vstv %s340
    %v342 = vmul.f32 %v264, %v341
    %v343 = vmul.f32 %v265, %v341
    %v344 = vadd.f32 %v338, %v342
    %v345 = vadd.f32 %v339, %v343
    %s346 = sld [smem:[#allocation2 + $0xb]]
    %v347 = vstv %s346
    %v348 = vmul.f32 %v266, %v347
    %v349 = vmul.f32 %v267, %v347
    %v350 = vadd.f32 %v344, %v348
    %v351 = vadd.f32 %v345, %v349
    %s352 = sld [smem:[#allocation2 + $0xf]]
    %v353 = vstv %s352
    %v354 = vmul.f32 %v268, %v353
    %v355 = vmul.f32 %v269, %v353
    %v356 = vadd.f32 %v350, %v354
    %v357 = vadd.f32 %v351, %v355
    %v358 = vadd.f32 %v290, %v312
    %v359 = vadd.f32 %v291, %v313
    %v360 = vadd.f32 %v358, %v334
    %v361 = vadd.f32 %v359, %v335
    %v362 = vadd.f32 %v360, %v356
    %v363 = vadd.f32 %v361, %v357
    %v364 = vmul.f32 %v362, 0.25
    %v365 = vmul.f32 %v363, 0.25
    %v366 = vsub.f32 %v290, %v364
    %v367 = vsub.f32 %v291, %v365
    %v368 = vmul.f32 %v366, %v366
    %v369 = vmul.f32 %v367, %v367
    %v370 = vsub.f32 %v312, %v364
    %v371 = vsub.f32 %v313, %v365
    %v372 = vmul.f32 %v370, %v370
    %v373 = vmul.f32 %v371, %v371
    %v374 = vadd.f32 %v368, %v372
    %v375 = vadd.f32 %v369, %v373
    %v376 = vsub.f32 %v334, %v364
    %v377 = vsub.f32 %v335, %v365
    %v378 = vmul.f32 %v376, %v376
    %v379 = vmul.f32 %v377, %v377
    %v380 = vadd.f32 %v374, %v378
    %v381 = vadd.f32 %v375, %v379
    %v382 = vsub.f32 %v356, %v364
    %v383 = vsub.f32 %v357, %v365
    %v384 = vmul.f32 %v382, %v382
    %v385 = vmul.f32 %v383, %v383
    %v386 = vadd.f32 %v380, %v384
    %v387 = vadd.f32 %v381, %v385
    %v388 = vmul.f32 %v386, 0.25
    %v389 = vmul.f32 %v387, 0.25
    %v390 = vadd.f32 %v388, 1e-05
    %v391 = vadd.f32 %v389, 1e-05
    %v392 = vrsqrt.pop %v390
    %v393 = vmul.f32 %v392, %v390
    %v394 = vmul.f32 %v393, %v392
    %v395 = vmul.f32 0.5, %v394
    %v396 = vsub.f32 1.5, %v395
    %v397 = vmul.f32 %v392, %v396
    %vm398 = vweird.f32 %v390
    %vm399 = vweird.f32 %v392
    %vm400 = vmor %vm398, %vm399
    %v401 = vsel %vm400, %v392, %v397
    %v402 = vrsqrt.pop %v391
    %v403 = vmul.f32 %v402, %v391
    %v404 = vmul.f32 %v403, %v402
    %v405 = vmul.f32 0.5, %v404
    %v406 = vsub.f32 1.5, %v405
    %v407 = vmul.f32 %v402, %v406
    %vm408 = vweird.f32 %v391
    %vm409 = vweird.f32 %v402
    %vm410 = vmor %vm408, %vm409
    %v411 = vsel %vm410, %v402, %v407
    %v412 = vmul.f32 %v117, 16.0
    %v413 = vmul.f32 %v366, %v401
    %v414 = vmul.f32 %v367, %v411
    %s415 = sld [smem:[#allocation5]]
    %v416 = vstv %s415
    %v417 = vmul.f32 %v413, %v416
    %v418 = vmul.f32 %v414, %v416
    %s419 = sld [smem:[#allocation7]]
    %v420 = vstv %s419
    %v421 = vadd.f32 %v417, %v420
    %v422 = vadd.f32 %v418, %v420
    %v423 = vmul.f32 %v421, %v130
    %v424 = vmul.f32 %v422, %v130
    %v425 = vsel %vm181, %v423, 0.0
    %v426 = vsel %vm181, %v424, 0.0
    %v427 = vadd.f32 %v425, %v426
    %428 = vadd.xlane.f32.xlu0 %v427
    %v429 = vpop.xlane.xlu0 %428
    %v430 = vrot.slane %v429, 4
    %v431 = vadd.f32 %v429, %v430
    %v432 = vrot.slane %v431, 2
    %v433 = vadd.f32 %v431, %v432
    %v434 = vrot.slane %v433, 1
    %v435 = vadd.f32 %v433, %v434
    %s436 = vtos %v435
    %v437 = vstv %s436
    %v438 = vmul.f32 %v437, %v116
    %v439 = vadd.f32 %v412, %v438
    %v440 = vmul.f32 %v370, %v401
    %v441 = vmul.f32 %v371, %v411
    %s442 = sld [smem:[#allocation5 + $0x1]]
    %v443 = vstv %s442
    %v444 = vmul.f32 %v440, %v443
    %v445 = vmul.f32 %v441, %v443
    %s446 = sld [smem:[#allocation7 + $0x1]]
    %v447 = vstv %s446
    %v448 = vadd.f32 %v444, %v447
    %v449 = vadd.f32 %v445, %v447
    %v450 = vmul.f32 %v448, %v130
    %v451 = vmul.f32 %v449, %v130
    %v452 = vsel %vm181, %v450, 0.0
    %v453 = vsel %vm181, %v451, 0.0
    %v454 = vadd.f32 %v452, %v453
    %455 = vadd.xlane.f32.xlu0 %v454
    %v456 = vpop.xlane.xlu0 %455
    %v457 = vrot.slane %v456, 4
    %v458 = vadd.f32 %v456, %v457
    %v459 = vrot.slane %v458, 2
    %v460 = vadd.f32 %v458, %v459
    %v461 = vrot.slane %v460, 1
    %v462 = vadd.f32 %v460, %v461
    %s463 = vtos %v462
    %v464 = vstv %s463
    %v465 = vmul.f32 %v464, %v116
    %467 = vst [vmem:[#allocation1] sm:$0xff] %v465
    %s468 = scalar_lea.vmem [#allocation1], 1
    %v469 = vld [vmem:[%s468] ss:$9 sm:$0xff]
    %v471 = vadd.f32 %v439, %v469
    %v472 = vmul.f32 %v376, %v401
    %v473 = vmul.f32 %v377, %v411
    %s474 = sld [smem:[#allocation5 + $0x2]]
    %v475 = vstv %s474
    %v476 = vmul.f32 %v472, %v475
    %v477 = vmul.f32 %v473, %v475
    %s478 = sld [smem:[#allocation7 + $0x2]]
    %v479 = vstv %s478
    %v480 = vadd.f32 %v476, %v479
    %v481 = vadd.f32 %v477, %v479
    %v482 = vmul.f32 %v480, %v130
    %v483 = vmul.f32 %v481, %v130
    %v484 = vsel %vm181, %v482, 0.0
    %v485 = vsel %vm181, %v483, 0.0
    %v486 = vadd.f32 %v484, %v485
    %487 = vadd.xlane.f32.xlu0 %v486
    %v488 = vpop.xlane.xlu0 %487
    %v489 = vrot.slane %v488, 4
    %v490 = vadd.f32 %v488, %v489
    %v491 = vrot.slane %v490, 2
    %v492 = vadd.f32 %v490, %v491
    %v493 = vrot.slane %v492, 1
    %v494 = vadd.f32 %v492, %v493
    %s495 = vtos %v494
    %v496 = vstv %s495
    %v497 = vmul.f32 %v496, %v116
    %499 = vst [vmem:[#allocation1] sm:$0xff] %v497
    %s500 = scalar_lea.vmem [#allocation1], 2
    %v501 = vld [vmem:[%s500] ss:$9 sm:$0xff]
    %v503 = vadd.f32 %v471, %v501
    %v504 = vmul.f32 %v382, %v401
    %v505 = vmul.f32 %v383, %v411
    %s506 = sld [smem:[#allocation5 + $0x3]]
    %v507 = vstv %s506
    %v508 = vmul.f32 %v504, %v507
    %v509 = vmul.f32 %v505, %v507
    %s510 = sld [smem:[#allocation7 + $0x3]]
    %v511 = vstv %s510
    %v512 = vadd.f32 %v508, %v511
    %v513 = vadd.f32 %v509, %v511
    %v514 = vmul.f32 %v512, %v130
    %v515 = vmul.f32 %v513, %v130
    %v516 = vsel %vm181, %v514, 0.0
    %v517 = vsel %vm181, %v515, 0.0
    %v518 = vadd.f32 %v516, %v517
    %519 = vadd.xlane.f32.xlu0 %v518
    %v520 = vpop.xlane.xlu0 %519
    %v521 = vrot.slane %v520, 4
    %v522 = vadd.f32 %v520, %v521
    %v523 = vrot.slane %v522, 2
    %v524 = vadd.f32 %v522, %v523
    %v525 = vrot.slane %v524, 1
    %v526 = vadd.f32 %v524, %v525
    %s527 = vtos %v526
    %v528 = vstv %s527
    %v529 = vmul.f32 %v528, %v116
    %531 = vst [vmem:[#allocation1] sm:$0xff] %v529
    %s532 = scalar_lea.vmem [#allocation1], 3
    %v533 = vld [vmem:[%s532] ss:$9 sm:$0xff]
    %v535 = vadd.f32 %v503, %v533
    %vm536 = vcmask 122880
    %v537 = vsel %vm536, %v535, 0.0
    %538 = vadd.xlane.f32.xlu0 %v537
    %v539 = vpop.xlane.xlu0 %538
    %v540 = vrcp.pop 16.0
    %v541 = vmul.f32 16.0, %v540
    %v542 = vsub.f32 1.0, %v541
    %v543 = vmul.f32 %v540, %v542
    %v544 = vadd.f32 %v540, %v543
    %vm545 = vweird.f32 %v540
    %v546 = vsel %vm545, %v540, %v544
    %v547 = vmul.f32 %v539, %v546
    %v548 = vsub.f32 %v535, %v547
    %v549 = vmul.f32 %v548, %v548
    %v550 = vsel %vm536, %v549, 0.0
    %551 = vadd.xlane.f32.xlu0 %v550
    %v552 = vpop.xlane.xlu0 %551
    %v553 = vmul.f32 %v552, %v546
    %v554 = vadd.f32 %v553, 1e-05
    %v555 = vrsqrt.pop %v554
    %v556 = vmul.f32 %v555, %v554
    %v557 = vmul.f32 %v556, %v555
    %v558 = vmul.f32 0.5, %v557
    %v559 = vsub.f32 1.5, %v558
    %v560 = vmul.f32 %v555, %v559
    %vm561 = vweird.f32 %v554
    %vm562 = vweird.f32 %v555
    %vm563 = vmor %vm561, %vm562
    %v564 = vsel %vm563, %v555, %v560
    %v565 = vmul.f32 %v548, %v564
    %v566 = vmul.f32 %v565, %v118
    %v567 = vadd.f32 %v566, %v119
    %v568 = vadd.f32 %v105, %v567
    %569 = vset.pattern.permute.xlu0 1
    %570 = vperm.xlu0 %569, %v106
    %v571 = vpop.permute.xlu0 %570
    %573 = vset.pattern.permute.xlu0 1
    %574 = vperm.xlu0 %573, %v107
    %v575 = vpop.permute.xlu0 %574
    %v577 = vperm.slane %v105, 1
    %v578 = vmul.f32 %v571, %v577
    %v579 = vmul.f32 %v575, %v577
    %v580 = vmul.f32 %v578, %v136
    %v581 = vmul.f32 %v579, %v141
    %v582 = vmul.f32 %v578, %v146
    %v583 = vmul.f32 %v579, %v151
    %v584 = vmul.f32 %v578, %v156
    %v585 = vmul.f32 %v579, %v161
    %v586 = vmul.f32 %v578, %v166
    %v587 = vmul.f32 %v579, %v171
    %v588 = vsel %vm181, %v580, -inf
    %589 = vmax.xlane.f32.xlu0 %v588
    %v590 = vpop.xlane.xlu0 %589
    %v591 = vsel %vm181, %v581, -inf
    %592 = vmax.xlane.f32.xlu0 %v591
    %v593 = vpop.xlane.xlu0 %592
    %v594 = vsel %vm181, %v582, -inf
    %595 = vmax.xlane.f32.xlu0 %v594
    %v596 = vpop.xlane.xlu0 %595
    %v597 = vsel %vm181, %v583, -inf
    %598 = vmax.xlane.f32.xlu0 %v597
    %v599 = vpop.xlane.xlu0 %598
    %v600 = vsel %vm181, %v584, -inf
    %601 = vmax.xlane.f32.xlu0 %v600
    %v602 = vpop.xlane.xlu0 %601
    %v603 = vsel %vm181, %v585, -inf
    %604 = vmax.xlane.f32.xlu0 %v603
    %v605 = vpop.xlane.xlu0 %604
    %v606 = vsel %vm181, %v586, -inf
    %607 = vmax.xlane.f32.xlu0 %v606
    %v608 = vpop.xlane.xlu0 %607
    %v609 = vsel %vm181, %v587, -inf
    %610 = vmax.xlane.f32.xlu0 %v609
    %v611 = vpop.xlane.xlu0 %610
    %v612 = vsub.f32 %v580, %v590
    %v613 = vsub.f32 %v581, %v593
    %v614 = vsub.f32 %v582, %v596
    %v615 = vsub.f32 %v583, %v599
    %v616 = vsub.f32 %v584, %v602
    %v617 = vsub.f32 %v585, %v605
    %v618 = vsub.f32 %v586, %v608
    %v619 = vsub.f32 %v587, %v611
    %v620 = vmul.f32 %v612, 1.442695
    %v621 = vpow.pop %v620
    %v622 = vmul.f32 %v613, 1.442695
    %v623 = vpow.pop %v622
    %v624 = vmul.f32 %v614, 1.442695
    %v625 = vpow.pop %v624
    %v626 = vmul.f32 %v615, 1.442695
    %v627 = vpow.pop %v626
    %v628 = vmul.f32 %v616, 1.442695
    %v629 = vpow.pop %v628
    %v630 = vmul.f32 %v617, 1.442695
    %v631 = vpow.pop %v630
    %v632 = vmul.f32 %v618, 1.442695
    %v633 = vpow.pop %v632
    %v634 = vmul.f32 %v619, 1.442695
    %v635 = vpow.pop %v634
    %v636 = vsel %vm181, %v621, 0.0
    %637 = vadd.xlane.f32.xlu0 %v636
    %v638 = vpop.xlane.xlu0 %637
    %v639 = vsel %vm181, %v623, 0.0
    %640 = vadd.xlane.f32.xlu0 %v639
    %v641 = vpop.xlane.xlu0 %640
    %v642 = vsel %vm181, %v625, 0.0
    %643 = vadd.xlane.f32.xlu0 %v642
    %v644 = vpop.xlane.xlu0 %643
    %v645 = vsel %vm181, %v627, 0.0
    %646 = vadd.xlane.f32.xlu0 %v645
    %v647 = vpop.xlane.xlu0 %646
    %v648 = vsel %vm181, %v629, 0.0
    %649 = vadd.xlane.f32.xlu0 %v648
    %v650 = vpop.xlane.xlu0 %649
    %v651 = vsel %vm181, %v631, 0.0
    %652 = vadd.xlane.f32.xlu0 %v651
    %v653 = vpop.xlane.xlu0 %652
    %v654 = vsel %vm181, %v633, 0.0
    %655 = vadd.xlane.f32.xlu0 %v654
    %v656 = vpop.xlane.xlu0 %655
    %v657 = vsel %vm181, %v635, 0.0
    %658 = vadd.xlane.f32.xlu0 %v657
    %v659 = vpop.xlane.xlu0 %658
    %v660 = vrcp.pop %v638
    %v661 = vrcp.pop %v641
    %v662 = vrcp.pop %v644
    %v663 = vrcp.pop %v647
    %v664 = vrcp.pop %v650
    %v665 = vrcp.pop %v653
    %v666 = vrcp.pop %v656
    %v667 = vrcp.pop %v659
    %v668 = vmul.f32 %v621, %v660
    %v669 = vmul.f32 %v623, %v661
    %v670 = vmul.f32 %v625, %v662
    %v671 = vmul.f32 %v627, %v663
    %v672 = vmul.f32 %v629, %v664
    %v673 = vmul.f32 %v631, %v665
    %v674 = vmul.f32 %v633, %v666
    %v675 = vmul.f32 %v635, %v667
    %v676 = vmul.f32 %v668, %v271
    %v677 = vmul.f32 %v669, %v271
    %v678 = vmul.f32 %v670, %v275
    %v679 = vmul.f32 %v671, %v275
    %v680 = vadd.f32 %v676, %v678
    %v681 = vadd.f32 %v677, %v679
    %v682 = vmul.f32 %v672, %v281
    %v683 = vmul.f32 %v673, %v281
    %v684 = vadd.f32 %v680, %v682
    %v685 = vadd.f32 %v681, %v683
    %v686 = vmul.f32 %v674, %v287
    %v687 = vmul.f32 %v675, %v287
    %v688 = vadd.f32 %v684, %v686
    %v689 = vadd.f32 %v685, %v687
    %v690 = vmul.f32 %v668, %v293
    %v691 = vmul.f32 %v669, %v293
    %v692 = vmul.f32 %v670, %v297
    %v693 = vmul.f32 %v671, %v297
    %v694 = vadd.f32 %v690, %v692
    %v695 = vadd.f32 %v691, %v693
    %v696 = vmul.f32 %v672, %v303
    %v697 = vmul.f32 %v673, %v303
    %v698 = vadd.f32 %v694, %v696
    %v699 = vadd.f32 %v695, %v697
    %v700 = vmul.f32 %v674, %v309
    %v701 = vmul.f32 %v675, %v309
    %v702 = vadd.f32 %v698, %v700
    %v703 = vadd.f32 %v699, %v701
    %v704 = vmul.f32 %v668, %v315
    %v705 = vmul.f32 %v669, %v315
    %v706 = vmul.f32 %v670, %v319
    %v707 = vmul.f32 %v671, %v319
    %v708 = vadd.f32 %v704, %v706
    %v709 = vadd.f32 %v705, %v707
    %v710 = vmul.f32 %v672, %v325
    %v711 = vmul.f32 %v673, %v325
    %v712 = vadd.f32 %v708, %v710
    %v713 = vadd.f32 %v709, %v711
    %v714 = vmul.f32 %v674, %v331
    %v715 = vmul.f32 %v675, %v331
    %v716 = vadd.f32 %v712, %v714
    %v717 = vadd.f32 %v713, %v715
    %v718 = vmul.f32 %v668, %v337
    %v719 = vmul.f32 %v669, %v337
    %v720 = vmul.f32 %v670, %v341
    %v721 = vmul.f32 %v671, %v341
    %v722 = vadd.f32 %v718, %v720
    %v723 = vadd.f32 %v719, %v721
    %v724 = vmul.f32 %v672, %v347
    %v725 = vmul.f32 %v673, %v347
    %v726 = vadd.f32 %v722, %v724
    %v727 = vadd.f32 %v723, %v725
    %v728 = vmul.f32 %v674, %v353
    %v729 = vmul.f32 %v675, %v353
    %v730 = vadd.f32 %v726, %v728
    %v731 = vadd.f32 %v727, %v729
    %v732 = vadd.f32 %v688, %v702
    %v733 = vadd.f32 %v689, %v703
    %v734 = vadd.f32 %v732, %v716
    %v735 = vadd.f32 %v733, %v717
    %v736 = vadd.f32 %v734, %v730
    %v737 = vadd.f32 %v735, %v731
    %v738 = vmul.f32 %v736, 0.25
    %v739 = vmul.f32 %v737, 0.25
    %v740 = vsub.f32 %v688, %v738
    %v741 = vsub.f32 %v689, %v739
    %v742 = vmul.f32 %v740, %v740
    %v743 = vmul.f32 %v741, %v741
    %v744 = vsub.f32 %v702, %v738
    %v745 = vsub.f32 %v703, %v739
    %v746 = vmul.f32 %v744, %v744
    %v747 = vmul.f32 %v745, %v745
    %v748 = vadd.f32 %v742, %v746
    %v749 = vadd.f32 %v743, %v747
    %v750 = vsub.f32 %v716, %v738
    %v751 = vsub.f32 %v717, %v739
    %v752 = vmul.f32 %v750, %v750
    %v753 = vmul.f32 %v751, %v751
    %v754 = vadd.f32 %v748, %v752
    %v755 = vadd.f32 %v749, %v753
    %v756 = vsub.f32 %v730, %v738
    %v757 = vsub.f32 %v731, %v739
    %v758 = vmul.f32 %v756, %v756
    %v759 = vmul.f32 %v757, %v757
    %v760 = vadd.f32 %v754, %v758
    %v761 = vadd.f32 %v755, %v759
    %v762 = vmul.f32 %v760, 0.25
    %v763 = vmul.f32 %v761, 0.25
    %v764 = vadd.f32 %v762, 1e-05
    %v765 = vadd.f32 %v763, 1e-05
    %v766 = vrsqrt.pop %v764
    %v767 = vmul.f32 %v766, %v764
    %v768 = vmul.f32 %v767, %v766
    %v769 = vmul.f32 0.5, %v768
    %v770 = vsub.f32 1.5, %v769
    %v771 = vmul.f32 %v766, %v770
    %vm772 = vweird.f32 %v764
    %vm773 = vweird.f32 %v766
    %vm774 = vmor %vm772, %vm773
    %v775 = vsel %vm774, %v766, %v771
    %v776 = vrsqrt.pop %v765
    %v777 = vmul.f32 %v776, %v765
    %v778 = vmul.f32 %v777, %v776
    %v779 = vmul.f32 0.5, %v778
    %v780 = vsub.f32 1.5, %v779
    %v781 = vmul.f32 %v776, %v780
    %vm782 = vweird.f32 %v765
    %vm783 = vweird.f32 %v776
    %vm784 = vmor %vm782, %vm783
    %v785 = vsel %vm784, %v776, %v781
    %v786 = vmul.f32 %v740, %v775
    %v787 = vmul.f32 %v741, %v785
    %v788 = vmul.f32 %v786, %v416
    %v789 = vmul.f32 %v787, %v416
    %v790 = vadd.f32 %v788, %v420
    %v791 = vadd.f32 %v789, %v420
    %v792 = vmul.f32 %v790, %v577
    %v793 = vmul.f32 %v791, %v577
    %v794 = vsel %vm181, %v792, 0.0
    %v795 = vsel %vm181, %v793, 0.0
    %v796 = vadd.f32 %v794, %v795
    %797 = vadd.xlane.f32.xlu0 %v796
    %v798 = vpop.xlane.xlu0 %797
    %v799 = vrot.slane %v798, 4
    %v800 = vadd.f32 %v798, %v799
    %v801 = vrot.slane %v800, 2
    %v802 = vadd.f32 %v800, %v801
    %v803 = vrot.slane %v802, 1
    %v804 = vadd.f32 %v802, %v803
    %s805 = vtos %v804
    %v806 = vstv %s805
    %v807 = vmul.f32 %v806, %v116
    %v808 = vadd.f32 %v412, %v807
    %v809 = vmul.f32 %v744, %v775
    %v810 = vmul.f32 %v745, %v785
    %v811 = vmul.f32 %v809, %v443
    %v812 = vmul.f32 %v810, %v443
    %v813 = vadd.f32 %v811, %v447
    %v814 = vadd.f32 %v812, %v447
    %v815 = vmul.f32 %v813, %v577
    %v816 = vmul.f32 %v814, %v577
    %v817 = vsel %vm181, %v815, 0.0
    %v818 = vsel %vm181, %v816, 0.0
    %v819 = vadd.f32 %v817, %v818
    %820 = vadd.xlane.f32.xlu0 %v819
    %v821 = vpop.xlane.xlu0 %820
    %v822 = vrot.slane %v821, 4
    %v823 = vadd.f32 %v821, %v822
    %v824 = vrot.slane %v823, 2
    %v825 = vadd.f32 %v823, %v824
    %v826 = vrot.slane %v825, 1
    %v827 = vadd.f32 %v825, %v826
    %s828 = vtos %v827
    %v829 = vstv %s828
    %v830 = vmul.f32 %v829, %v116
    %832 = vst [vmem:[#allocation1] sm:$0xff] %v830
    %s833 = scalar_lea.vmem [#allocation1], 1
    %v834 = vld [vmem:[%s833] ss:$9 sm:$0xff]
    %v836 = vadd.f32 %v808, %v834
    %v837 = vmul.f32 %v750, %v775
    %v838 = vmul.f32 %v751, %v785
    %v839 = vmul.f32 %v837, %v475
    %v840 = vmul.f32 %v838, %v475
    %v841 = vadd.f32 %v839, %v479
    %v842 = vadd.f32 %v840, %v479
    %v843 = vmul.f32 %v841, %v577
    %v844 = vmul.f32 %v842, %v577
    %v845 = vsel %vm181, %v843, 0.0
    %v846 = vsel %vm181, %v844, 0.0
    %v847 = vadd.f32 %v845, %v846
    %848 = vadd.xlane.f32.xlu0 %v847
    %v849 = vpop.xlane.xlu0 %848
    %v850 = vrot.slane %v849, 4
    %v851 = vadd.f32 %v849, %v850
    %v852 = vrot.slane %v851, 2
    %v853 = vadd.f32 %v851, %v852
    %v854 = vrot.slane %v853, 1
    %v855 = vadd.f32 %v853, %v854
    %s856 = vtos %v855
    %v857 = vstv %s856
    %v858 = vmul.f32 %v857, %v116
    %860 = vst [vmem:[#allocation1] sm:$0xff] %v858
    %s861 = scalar_lea.vmem [#allocation1], 2
    %v862 = vld [vmem:[%s861] ss:$9 sm:$0xff]
    %v864 = vadd.f32 %v836, %v862
    %v865 = vmul.f32 %v756, %v775
    %v866 = vmul.f32 %v757, %v785
    %v867 = vmul.f32 %v865, %v507
    %v868 = vmul.f32 %v866, %v507
    %v869 = vadd.f32 %v867, %v511
    %v870 = vadd.f32 %v868, %v511
    %v871 = vmul.f32 %v869, %v577
    %v872 = vmul.f32 %v870, %v577
    %v873 = vsel %vm181, %v871, 0.0
    %v874 = vsel %vm181, %v872, 0.0
    %v875 = vadd.f32 %v873, %v874
    %876 = vadd.xlane.f32.xlu0 %v875
    %v877 = vpop.xlane.xlu0 %876
    %v878 = vrot.slane %v877, 4
    %v879 = vadd.f32 %v877, %v878
    %v880 = vrot.slane %v879, 2
    %v881 = vadd.f32 %v879, %v880
    %v882 = vrot.slane %v881, 1
    %v883 = vadd.f32 %v881, %v882
    %s884 = vtos %v883
    %v885 = vstv %s884
    %v886 = vmul.f32 %v885, %v116
    %888 = vst [vmem:[#allocation1] sm:$0xff] %v886
    %s889 = scalar_lea.vmem [#allocation1], 3
    %v890 = vld [vmem:[%s889] ss:$9 sm:$0xff]
    %v892 = vadd.f32 %v864, %v890
    %v893 = vsel %vm536, %v892, 0.0
    %894 = vadd.xlane.f32.xlu0 %v893
    %v895 = vpop.xlane.xlu0 %894
    %v896 = vmul.f32 %v895, %v546
    %v897 = vsub.f32 %v892, %v896
    %v898 = vmul.f32 %v897, %v897
    %v899 = vsel %vm536, %v898, 0.0
    %900 = vadd.xlane.f32.xlu0 %v899
    %v901 = vpop.xlane.xlu0 %900
    %v902 = vmul.f32 %v901, %v546
    %v903 = vadd.f32 %v902, 1e-05
    %v904 = vrsqrt.pop %v903
    %v905 = vmul.f32 %v904, %v903
    %v906 = vmul.f32 %v905, %v904
    %v907 = vmul.f32 0.5, %v906
    %v908 = vsub.f32 1.5, %v907
    %v909 = vmul.f32 %v904, %v908
    %vm910 = vweird.f32 %v903
    %vm911 = vweird.f32 %v904
    %vm912 = vmor %vm910, %vm911
    %v913 = vsel %vm912, %v904, %v909
    %v914 = vmul.f32 %v897, %v913
    %v915 = vmul.f32 %v914, %v118
    %v916 = vadd.f32 %v915, %v119
    %v918 = vperm.slane %v916, 0
    %v920 = vadd.f32 %v105, %v918
    %vm921 = vcmask 1040384
    %v922 = vsel %vm921, %v568, %v920
    %v923 = vld [vmem:[%s10] sm:$0xff]
    %v924 = vld [vmem:[%s10 + $0x8] sm:$0xff]
    %v925 = vld [vmem:[%s11] sm:$0x1]
    %v927 = vperm.slane %v925, 0
    %v930 = vsel %vm181, %v922, 0
    %932 = vmatpush.msra.mxu0 0.0
    %933 = vmatpush.msra.mxu0 0.0
    %934 = vmatpush.msra.mxu0 0.0
    %935 = vmatpush.msra.mxu0 0.0
    %936 = vmatpush.msra.mxu0 0.0
    %937 = vmatpush.msra.mxu0 0.0
    %938 = vmatpush.msra.mxu0 0.0
    %939 = vmatpush.msra.mxu0 0.0
    %940 = vmatpush.msra.mxu0 0.0
    %941 = vmatpush.msra.mxu0 0.0
    %942 = vmatpush.msra.mxu0 0.0
    %943 = vmatpush.msra.mxu0 0.0
    %944 = vmatpush.msra.mxu0 0.0
    %945 = vmatpush.msra.mxu0 0.0
    %946 = vmatpush.msra.mxu0 %v924
    %947 = vmatpush.msra.mxu0 %v923
    %948 = vmatmul.f32.gmra.mxu0 %v930
    %v949 = vpop.f32.mrf.mxu0
    %v950 = vadd.f32 %v927, %v949
    %951 = vdwg.mxu0
    %v952 = vmax.f32 %v950, 0.0
    %v953 = vld [vmem:[%s12] sm:$0x1]
    %v954 = vld [vmem:[%s13] sm:$0x1]
    %vm955 = vcmask 254976
    %v956 = vsel %vm955, %v952, 0.0
    %957 = vadd.xlane.f32.xlu0 %v956
    %v958 = vpop.xlane.xlu0 %957
    %v959 = vrcp.pop 32.0
    %v960 = vmul.f32 32.0, %v959
    %v961 = vsub.f32 1.0, %v960
    %v962 = vmul.f32 %v959, %v961
    %v963 = vadd.f32 %v959, %v962
    %vm964 = vweird.f32 %v959
    %v965 = vsel %vm964, %v959, %v963
    %v966 = vmul.f32 %v958, %v965
    %v967 = vsub.f32 %v952, %v966
    %v968 = vmul.f32 %v967, %v967
    %v969 = vsel %vm955, %v968, 0.0
    %970 = vadd.xlane.f32.xlu0 %v969
    %v971 = vpop.xlane.xlu0 %970
    %v972 = vmul.f32 %v971, %v965
    %v973 = vadd.f32 %v972, 1e-05
    %v974 = vrsqrt.pop %v973
    %v975 = vmul.f32 %v974, %v973
    %v976 = vmul.f32 %v975, %v974
    %v977 = vmul.f32 0.5, %v976
    %v978 = vsub.f32 1.5, %v977
    %v979 = vmul.f32 %v974, %v978
    %vm980 = vweird.f32 %v973
    %vm981 = vweird.f32 %v974
    %vm982 = vmor %vm980, %vm981
    %v983 = vsel %vm982, %v974, %v979
    %v984 = vmul.f32 %v967, %v983
    %v986 = vperm.slane %v953, 0
    %v988 = vmul.f32 %v984, %v986
    %v990 = vperm.slane %v954, 0
    %v992 = vadd.f32 %v988, %v990
    %v993 = vld [vmem:[%s14] sm:$0xff]
    %v994 = vld [vmem:[%s14 + $0x8] sm:$0xff]
    %v995 = vld [vmem:[%s14 + $0x10] sm:$0xff]
    %v996 = vld [vmem:[%s14 + $0x18] sm:$0xff]
    %v997 = vld [vmem:[%s15] sm:$0x1]
    %v999 = vperm.slane %v997, 0
    %vm1001 = vcmask 261120
    %v1003 = vsel %vm1001, %v992, 0
    %1005 = vmatpush.msra.mxu0 0.0
    %1006 = vmatpush.msra.mxu0 0.0
    %1007 = vmatpush.msra.mxu0 0.0
    %1008 = vmatpush.msra.mxu0 0.0
    %1009 = vmatpush.msra.mxu0 0.0
    %1010 = vmatpush.msra.mxu0 0.0
    %1011 = vmatpush.msra.mxu0 0.0
    %1012 = vmatpush.msra.mxu0 0.0
    %1013 = vmatpush.msra.mxu0 0.0
    %1014 = vmatpush.msra.mxu0 0.0
    %1015 = vmatpush.msra.mxu0 0.0
    %1016 = vmatpush.msra.mxu0 0.0
    %1017 = vmatpush.msra.mxu0 %v996
    %1018 = vmatpush.msra.mxu0 %v995
    %1019 = vmatpush.msra.mxu0 %v994
    %1020 = vmatpush.msra.mxu0 %v993
    %1021 = vmatmul.f32.gmra.mxu0 %v1003
    %v1022 = vpop.f32.mrf.mxu0
    %v1023 = vadd.f32 %v999, %v1022
    %1024 = vdwg.mxu0
    %v1025 = vmax.f32 %v1023, 0.0
    %v1026 = vld [vmem:[%s16] sm:$0x1]
    %v1027 = vld [vmem:[%s17] sm:$0x1]
    %v1028 = vsel %vm955, %v1025, 0.0
    %1029 = vadd.xlane.f32.xlu0 %v1028
    %v1030 = vpop.xlane.xlu0 %1029
    %v1031 = vmul.f32 %v1030, %v965
    %v1032 = vsub.f32 %v1025, %v1031
    %v1033 = vmul.f32 %v1032, %v1032
    %v1034 = vsel %vm955, %v1033, 0.0
    %1035 = vadd.xlane.f32.xlu0 %v1034
    %v1036 = vpop.xlane.xlu0 %1035
    %v1037 = vmul.f32 %v1036, %v965
    %v1038 = vadd.f32 %v1037, 1e-05
    %v1039 = vrsqrt.pop %v1038
    %v1040 = vmul.f32 %v1039, %v1038
    %v1041 = vmul.f32 %v1040, %v1039
    %v1042 = vmul.f32 0.5, %v1041
    %v1043 = vsub.f32 1.5, %v1042
    %v1044 = vmul.f32 %v1039, %v1043
    %vm1045 = vweird.f32 %v1038
    %vm1046 = vweird.f32 %v1039
    %vm1047 = vmor %vm1045, %vm1046
    %v1048 = vsel %vm1047, %v1039, %v1044
    %v1049 = vmul.f32 %v1032, %v1048
    %v1051 = vperm.slane %v1026, 0
    %v1053 = vmul.f32 %v1049, %v1051
    %v1055 = vperm.slane %v1027, 0
    %v1057 = vadd.f32 %v1053, %v1055
    %v1058 = vadd.f32 %v992, %v1057
    %v1059 = vld [vmem:[%s18] sm:$0xff]
    %v1060 = vld [vmem:[%s18 + $0x8] sm:$0xff]
    %v1061 = vld [vmem:[%s18 + $0x10] sm:$0xff]
    %v1062 = vld [vmem:[%s18 + $0x18] sm:$0xff]
    %v1063 = vld [vmem:[%s19] sm:$0x1]
    %v1065 = vperm.slane %v1063, 0
    %v1068 = vsel %vm1001, %v1058, 0
    %1070 = vmatpush.msra.mxu0 0.0
    %1071 = vmatpush.msra.mxu0 0.0
    %1072 = vmatpush.msra.mxu0 0.0
    %1073 = vmatpush.msra.mxu0 0.0
    %1074 = vmatpush.msra.mxu0 0.0
    %1075 = vmatpush.msra.mxu0 0.0
    %1076 = vmatpush.msra.mxu0 0.0
    %1077 = vmatpush.msra.mxu0 0.0
    %1078 = vmatpush.msra.mxu0 0.0
    %1079 = vmatpush.msra.mxu0 0.0
    %1080 = vmatpush.msra.mxu0 0.0
    %1081 = vmatpush.msra.mxu0 0.0
    %1082 = vmatpush.msra.mxu0 %v1062
    %1083 = vmatpush.msra.mxu0 %v1061
    %1084 = vmatpush.msra.mxu0 %v1060
    %1085 = vmatpush.msra.mxu0 %v1059
    %1086 = vmatmul.f32.gmra.mxu0 %v1068
    %v1087 = vpop.f32.mrf.mxu0
    %v1088 = vadd.f32 %v1065, %v1087
    %1089 = vdwg.mxu0
    %s1090 = scalar_lea.vmem %s5, 64
    %v1091 = vld [vmem:[%s1090] sm:$0xff]
    %v1092 = vld [vmem:[%s1090 + $0x8] sm:$0xff]
    %v1093 = vld [vmem:[%s1090 + $0x10] sm:$0xff]
    %v1094 = vld [vmem:[%s1090 + $0x18] sm:$0xff]
    %v1095 = vld [vmem:[%s1090 + $0x20] sm:$0xff]
    %v1096 = vld [vmem:[%s1090 + $0x28] sm:$0xff]
    %v1097 = vld [vmem:[%s1090 + $0x30] sm:$0xff]
    %v1098 = vld [vmem:[%s1090 + $0x38] sm:$0xff]
    %s1099 = scalar_lea.vmem %s6, 4
    %v1100 = vld [vmem:[%s1099] sm:$0xf]
    %s1101 = scalar_lea.vmem %s7, 1
    %v1102 = vld [vmem:[%s1101] sm:$0x1]
    %s1103 = scalar_lea.vmem %s8, 1
    %v1104 = vld [vmem:[%s1103] sm:$0x1]
    %s1105 = scalar_lea.vmem %s9, 1
    %v1106 = vld [vmem:[%s1105] sm:$0x1]
    %1108 = vset.pattern.permute.xlu0 0
    %1109 = vperm.xlu0 %1108, %v1091
    %v1110 = vpop.permute.xlu0 %1109
    %1113 = vset.pattern.permute.xlu0 0
    %1114 = vperm.xlu0 %1113, %v1092
    %v1115 = vpop.permute.xlu0 %1114
    %1118 = vset.pattern.permute.xlu0 0
    %1119 = vperm.xlu0 %1118, %v1093
    %v1120 = vpop.permute.xlu0 %1119
    %1123 = vset.pattern.permute.xlu0 0
    %1124 = vperm.xlu0 %1123, %v1094
    %v1125 = vpop.permute.xlu0 %1124
    %1128 = vset.pattern.permute.xlu0 0
    %1129 = vperm.xlu0 %1128, %v1095
    %v1130 = vpop.permute.xlu0 %1129
    %1133 = vset.pattern.permute.xlu0 0
    %1134 = vperm.xlu0 %1133, %v1096
    %v1135 = vpop.permute.xlu0 %1134
    %1138 = vset.pattern.permute.xlu0 0
    %1139 = vperm.xlu0 %1138, %v1097
    %v1140 = vpop.permute.xlu0 %1139
    %1143 = vset.pattern.permute.xlu0 0
    %1144 = vperm.xlu0 %1143, %v1098
    %v1145 = vpop.permute.xlu0 %1144
    %v1147 = vmul.f32 %v131, %v1110
    %v1148 = vmul.f32 %v132, %v1115
    %v1149 = vmul.f32 %v131, %v1120
    %v1150 = vmul.f32 %v132, %v1125
    %v1151 = vmul.f32 %v131, %v1130
    %v1152 = vmul.f32 %v132, %v1135
    %v1153 = vmul.f32 %v131, %v1140
    %v1154 = vmul.f32 %v132, %v1145
    %v1155 = vsel %vm181, %v1147, -inf
    %1156 = vmax.xlane.f32.xlu0 %v1155
    %v1157 = vpop.xlane.xlu0 %1156
    %v1158 = vsel %vm181, %v1148, -inf
    %1159 = vmax.xlane.f32.xlu0 %v1158
    %v1160 = vpop.xlane.xlu0 %1159
    %v1161 = vsel %vm181, %v1149, -inf
    %1162 = vmax.xlane.f32.xlu0 %v1161
    %v1163 = vpop.xlane.xlu0 %1162
    %v1164 = vsel %vm181, %v1150, -inf
    %1165 = vmax.xlane.f32.xlu0 %v1164
    %v1166 = vpop.xlane.xlu0 %1165
    %v1167 = vsel %vm181, %v1151, -inf
    %1168 = vmax.xlane.f32.xlu0 %v1167
    %v1169 = vpop.xlane.xlu0 %1168
    %v1170 = vsel %vm181, %v1152, -inf
    %1171 = vmax.xlane.f32.xlu0 %v1170
    %v1172 = vpop.xlane.xlu0 %1171
    %v1173 = vsel %vm181, %v1153, -inf
    %1174 = vmax.xlane.f32.xlu0 %v1173
    %v1175 = vpop.xlane.xlu0 %1174
    %v1176 = vsel %vm181, %v1154, -inf
    %1177 = vmax.xlane.f32.xlu0 %v1176
    %v1178 = vpop.xlane.xlu0 %1177
    %v1179 = vsub.f32 %v1147, %v1157
    %v1180 = vsub.f32 %v1148, %v1160
    %v1181 = vsub.f32 %v1149, %v1163
    %v1182 = vsub.f32 %v1150, %v1166
    %v1183 = vsub.f32 %v1151, %v1169
    %v1184 = vsub.f32 %v1152, %v1172
    %v1185 = vsub.f32 %v1153, %v1175
    %v1186 = vsub.f32 %v1154, %v1178
    %v1187 = vmul.f32 %v1179, 1.442695
    %v1188 = vpow.pop %v1187
    %v1189 = vmul.f32 %v1180, 1.442695
    %v1190 = vpow.pop %v1189
    %v1191 = vmul.f32 %v1181, 1.442695
    %v1192 = vpow.pop %v1191
    %v1193 = vmul.f32 %v1182, 1.442695
    %v1194 = vpow.pop %v1193
    %v1195 = vmul.f32 %v1183, 1.442695
    %v1196 = vpow.pop %v1195
    %v1197 = vmul.f32 %v1184, 1.442695
    %v1198 = vpow.pop %v1197
    %v1199 = vmul.f32 %v1185, 1.442695
    %v1200 = vpow.pop %v1199
    %v1201 = vmul.f32 %v1186, 1.442695
    %v1202 = vpow.pop %v1201
    %v1203 = vsel %vm181, %v1188, 0.0
    %1204 = vadd.xlane.f32.xlu0 %v1203
    %v1205 = vpop.xlane.xlu0 %1204
    %v1206 = vsel %vm181, %v1190, 0.0
    %1207 = vadd.xlane.f32.xlu0 %v1206
    %v1208 = vpop.xlane.xlu0 %1207
    %v1209 = vsel %vm181, %v1192, 0.0
    %1210 = vadd.xlane.f32.xlu0 %v1209
    %v1211 = vpop.xlane.xlu0 %1210
    %v1212 = vsel %vm181, %v1194, 0.0
    %1213 = vadd.xlane.f32.xlu0 %v1212
    %v1214 = vpop.xlane.xlu0 %1213
    %v1215 = vsel %vm181, %v1196, 0.0
    %1216 = vadd.xlane.f32.xlu0 %v1215
    %v1217 = vpop.xlane.xlu0 %1216
    %v1218 = vsel %vm181, %v1198, 0.0
    %1219 = vadd.xlane.f32.xlu0 %v1218
    %v1220 = vpop.xlane.xlu0 %1219
    %v1221 = vsel %vm181, %v1200, 0.0
    %1222 = vadd.xlane.f32.xlu0 %v1221
    %v1223 = vpop.xlane.xlu0 %1222
    %v1224 = vsel %vm181, %v1202, 0.0
    %1225 = vadd.xlane.f32.xlu0 %v1224
    %v1226 = vpop.xlane.xlu0 %1225
    %v1227 = vrcp.pop %v1205
    %v1228 = vrcp.pop %v1208
    %v1229 = vrcp.pop %v1211
    %v1230 = vrcp.pop %v1214
    %v1231 = vrcp.pop %v1217
    %v1232 = vrcp.pop %v1220
    %v1233 = vrcp.pop %v1223
    %v1234 = vrcp.pop %v1226
    %v1235 = vmul.f32 %v1188, %v1227
    %v1236 = vmul.f32 %v1190, %v1228
    %v1237 = vmul.f32 %v1192, %v1229
    %v1238 = vmul.f32 %v1194, %v1230
    %v1239 = vmul.f32 %v1196, %v1231
    %v1240 = vmul.f32 %v1198, %v1232
    %v1241 = vmul.f32 %v1200, %v1233
    %v1242 = vmul.f32 %v1202, %v1234
    %s1243 = sld [smem:[#allocation2 + $0x80]]
    %v1244 = vstv %s1243
    %v1245 = vmul.f32 %v1235, %v1244
    %v1246 = vmul.f32 %v1236, %v1244
    %s1247 = sld [smem:[#allocation2 + $0x84]]
    %v1248 = vstv %s1247
    %v1249 = vmul.f32 %v1237, %v1248
    %v1250 = vmul.f32 %v1238, %v1248
    %v1251 = vadd.f32 %v1245, %v1249
    %v1252 = vadd.f32 %v1246, %v1250
    %s1253 = sld [smem:[#allocation2 + $0x88]]
    %v1254 = vstv %s1253
    %v1255 = vmul.f32 %v1239, %v1254
    %v1256 = vmul.f32 %v1240, %v1254
    %v1257 = vadd.f32 %v1251, %v1255
    %v1258 = vadd.f32 %v1252, %v1256
    %s1259 = sld [smem:[#allocation2 + $0x8c]]
    %v1260 = vstv %s1259
    %v1261 = vmul.f32 %v1241, %v1260
    %v1262 = vmul.f32 %v1242, %v1260
    %v1263 = vadd.f32 %v1257, %v1261
    %v1264 = vadd.f32 %v1258, %v1262
    %s1265 = sld [smem:[#allocation2 + $0x81]]
    %v1266 = vstv %s1265
    %v1267 = vmul.f32 %v1235, %v1266
    %v1268 = vmul.f32 %v1236, %v1266
    %s1269 = sld [smem:[#allocation2 + $0x85]]
    %v1270 = vstv %s1269
    %v1271 = vmul.f32 %v1237, %v1270
    %v1272 = vmul.f32 %v1238, %v1270
    %v1273 = vadd.f32 %v1267, %v1271
    %v1274 = vadd.f32 %v1268, %v1272
    %s1275 = sld [smem:[#allocation2 + $0x89]]
    %v1276 = vstv %s1275
    %v1277 = vmul.f32 %v1239, %v1276
    %v1278 = vmul.f32 %v1240, %v1276
    %v1279 = vadd.f32 %v1273, %v1277
    %v1280 = vadd.f32 %v1274, %v1278
    %s1281 = sld [smem:[#allocation2 + $0x8d]]
    %v1282 = vstv %s1281
    %v1283 = vmul.f32 %v1241, %v1282
    %v1284 = vmul.f32 %v1242, %v1282
    %v1285 = vadd.f32 %v1279, %v1283
    %v1286 = vadd.f32 %v1280, %v1284
    %s1287 = sld [smem:[#allocation2 + $0x82]]
    %v1288 = vstv %s1287
    %v1289 = vmul.f32 %v1235, %v1288
    %v1290 = vmul.f32 %v1236, %v1288
    %s1291 = sld [smem:[#allocation2 + $0x86]]
    %v1292 = vstv %s1291
    %v1293 = vmul.f32 %v1237, %v1292
    %v1294 = vmul.f32 %v1238, %v1292
    %v1295 = vadd.f32 %v1289, %v1293
    %v1296 = vadd.f32 %v1290, %v1294
    %s1297 = sld [smem:[#allocation2 + $0x8a]]
    %v1298 = vstv %s1297
    %v1299 = vmul.f32 %v1239, %v1298
    %v1300 = vmul.f32 %v1240, %v1298
    %v1301 = vadd.f32 %v1295, %v1299
    %v1302 = vadd.f32 %v1296, %v1300
    %s1303 = sld [smem:[#allocation2 + $0x8e]]
    %v1304 = vstv %s1303
    %v1305 = vmul.f32 %v1241, %v1304
    %v1306 = vmul.f32 %v1242, %v1304
    %v1307 = vadd.f32 %v1301, %v1305
    %v1308 = vadd.f32 %v1302, %v1306
    %s1309 = sld [smem:[#allocation2 + $0x83]]
    %v1310 = vstv %s1309
    %v1311 = vmul.f32 %v1235, %v1310
    %v1312 = vmul.f32 %v1236, %v1310
    %s1313 = sld [smem:[#allocation2 + $0x87]]
    %v1314 = vstv %s1313
    %v1315 = vmul.f32 %v1237, %v1314
    %v1316 = vmul.f32 %v1238, %v1314
    %v1317 = vadd.f32 %v1311, %v1315
    %v1318 = vadd.f32 %v1312, %v1316
    %s1319 = sld [smem:[#allocation2 + $0x8b]]
    %v1320 = vstv %s1319
    %v1321 = vmul.f32 %v1239, %v1320
    %v1322 = vmul.f32 %v1240, %v1320
    %v1323 = vadd.f32 %v1317, %v1321
    %v1324 = vadd.f32 %v1318, %v1322
    %s1325 = sld [smem:[#allocation2 + $0x8f]]
    %v1326 = vstv %s1325
    %v1327 = vmul.f32 %v1241, %v1326
    %v1328 = vmul.f32 %v1242, %v1326
    %v1329 = vadd.f32 %v1323, %v1327
    %v1330 = vadd.f32 %v1324, %v1328
    %v1331 = vadd.f32 %v1263, %v1285
    %v1332 = vadd.f32 %v1264, %v1286
    %v1333 = vadd.f32 %v1331, %v1307
    %v1334 = vadd.f32 %v1332, %v1308
    %v1335 = vadd.f32 %v1333, %v1329
    %v1336 = vadd.f32 %v1334, %v1330
    %v1337 = vmul.f32 %v1335, 0.25
    %v1338 = vmul.f32 %v1336, 0.25
    %v1339 = vsub.f32 %v1263, %v1337
    %v1340 = vsub.f32 %v1264, %v1338
    %v1341 = vmul.f32 %v1339, %v1339
    %v1342 = vmul.f32 %v1340, %v1340
    %v1343 = vsub.f32 %v1285, %v1337
    %v1344 = vsub.f32 %v1286, %v1338
    %v1345 = vmul.f32 %v1343, %v1343
    %v1346 = vmul.f32 %v1344, %v1344
    %v1347 = vadd.f32 %v1341, %v1345
    %v1348 = vadd.f32 %v1342, %v1346
    %v1349 = vsub.f32 %v1307, %v1337
    %v1350 = vsub.f32 %v1308, %v1338
    %v1351 = vmul.f32 %v1349, %v1349
    %v1352 = vmul.f32 %v1350, %v1350
    %v1353 = vadd.f32 %v1347, %v1351
    %v1354 = vadd.f32 %v1348, %v1352
    %v1355 = vsub.f32 %v1329, %v1337
    %v1356 = vsub.f32 %v1330, %v1338
    %v1357 = vmul.f32 %v1355, %v1355
    %v1358 = vmul.f32 %v1356, %v1356
    %v1359 = vadd.f32 %v1353, %v1357
    %v1360 = vadd.f32 %v1354, %v1358
    %v1361 = vmul.f32 %v1359, 0.25
    %v1362 = vmul.f32 %v1360, 0.25
    %v1363 = vadd.f32 %v1361, 1e-05
    %v1364 = vadd.f32 %v1362, 1e-05
    %v1365 = vrsqrt.pop %v1363
    %v1366 = vmul.f32 %v1365, %v1363
    %v1367 = vmul.f32 %v1366, %v1365
    %v1368 = vmul.f32 0.5, %v1367
    %v1369 = vsub.f32 1.5, %v1368
    %v1370 = vmul.f32 %v1365, %v1369
    %vm1371 = vweird.f32 %v1363
    %vm1372 = vweird.f32 %v1365
    %vm1373 = vmor %vm1371, %vm1372
    %v1374 = vsel %vm1373, %v1365, %v1370
    %v1375 = vrsqrt.pop %v1364
    %v1376 = vmul.f32 %v1375, %v1364
    %v1377 = vmul.f32 %v1376, %v1375
    %v1378 = vmul.f32 0.5, %v1377
    %v1379 = vsub.f32 1.5, %v1378
    %v1380 = vmul.f32 %v1375, %v1379
    %vm1381 = vweird.f32 %v1364
    %vm1382 = vweird.f32 %v1375
    %vm1383 = vmor %vm1381, %vm1382
    %v1384 = vsel %vm1383, %v1375, %v1380
    %v1385 = vmul.f32 %v1102, 16.0
    %v1386 = vmul.f32 %v1339, %v1374
    %v1387 = vmul.f32 %v1340, %v1384
    %s1388 = sld [smem:[#allocation5 + $0x80]]
    %v1389 = vstv %s1388
    %v1390 = vmul.f32 %v1386, %v1389
    %v1391 = vmul.f32 %v1387, %v1389
    %s1392 = sld [smem:[#allocation7 + $0x80]]
    %v1393 = vstv %s1392
    %v1394 = vadd.f32 %v1390, %v1393
    %v1395 = vadd.f32 %v1391, %v1393
    %v1396 = vmul.f32 %v1394, %v130
    %v1397 = vmul.f32 %v1395, %v130
    %v1398 = vsel %vm181, %v1396, 0.0
    %v1399 = vsel %vm181, %v1397, 0.0
    %v1400 = vadd.f32 %v1398, %v1399
    %1401 = vadd.xlane.f32.xlu0 %v1400
    %v1402 = vpop.xlane.xlu0 %1401
    %v1403 = vrot.slane %v1402, 4
    %v1404 = vadd.f32 %v1402, %v1403
    %v1405 = vrot.slane %v1404, 2
    %v1406 = vadd.f32 %v1404, %v1405
    %v1407 = vrot.slane %v1406, 1
    %v1408 = vadd.f32 %v1406, %v1407
    %s1409 = vtos %v1408
    %v1410 = vstv %s1409
    %v1411 = vmul.f32 %v1410, %v1100
    %v1412 = vadd.f32 %v1385, %v1411
    %v1413 = vmul.f32 %v1343, %v1374
    %v1414 = vmul.f32 %v1344, %v1384
    %s1415 = sld [smem:[#allocation5 + $0x81]]
    %v1416 = vstv %s1415
    %v1417 = vmul.f32 %v1413, %v1416
    %v1418 = vmul.f32 %v1414, %v1416
    %s1419 = sld [smem:[#allocation7 + $0x81]]
    %v1420 = vstv %s1419
    %v1421 = vadd.f32 %v1417, %v1420
    %v1422 = vadd.f32 %v1418, %v1420
    %v1423 = vmul.f32 %v1421, %v130
    %v1424 = vmul.f32 %v1422, %v130
    %v1425 = vsel %vm181, %v1423, 0.0
    %v1426 = vsel %vm181, %v1424, 0.0
    %v1427 = vadd.f32 %v1425, %v1426
    %1428 = vadd.xlane.f32.xlu0 %v1427
    %v1429 = vpop.xlane.xlu0 %1428
    %v1430 = vrot.slane %v1429, 4
    %v1431 = vadd.f32 %v1429, %v1430
    %v1432 = vrot.slane %v1431, 2
    %v1433 = vadd.f32 %v1431, %v1432
    %v1434 = vrot.slane %v1433, 1
    %v1435 = vadd.f32 %v1433, %v1434
    %s1436 = vtos %v1435
    %v1437 = vstv %s1436
    %v1438 = vmul.f32 %v1437, %v1100
    %1440 = vst [vmem:[#allocation1] sm:$0xff] %v1438
    %s1441 = scalar_lea.vmem [#allocation1], 1
    %v1442 = vld [vmem:[%s1441] ss:$9 sm:$0xff]
    %v1444 = vadd.f32 %v1412, %v1442
    %v1445 = vmul.f32 %v1349, %v1374
    %v1446 = vmul.f32 %v1350, %v1384
    %s1447 = sld [smem:[#allocation5 + $0x82]]
    %v1448 = vstv %s1447
    %v1449 = vmul.f32 %v1445, %v1448
    %v1450 = vmul.f32 %v1446, %v1448
    %s1451 = sld [smem:[#allocation7 + $0x82]]
    %v1452 = vstv %s1451
    %v1453 = vadd.f32 %v1449, %v1452
    %v1454 = vadd.f32 %v1450, %v1452
    %v1455 = vmul.f32 %v1453, %v130
    %v1456 = vmul.f32 %v1454, %v130
    %v1457 = vsel %vm181, %v1455, 0.0
    %v1458 = vsel %vm181, %v1456, 0.0
    %v1459 = vadd.f32 %v1457, %v1458
    %1460 = vadd.xlane.f32.xlu0 %v1459
    %v1461 = vpop.xlane.xlu0 %1460
    %v1462 = vrot.slane %v1461, 4
    %v1463 = vadd.f32 %v1461, %v1462
    %v1464 = vrot.slane %v1463, 2
    %v1465 = vadd.f32 %v1463, %v1464
    %v1466 = vrot.slane %v1465, 1
    %v1467 = vadd.f32 %v1465, %v1466
    %s1468 = vtos %v1467
    %v1469 = vstv %s1468
    %v1470 = vmul.f32 %v1469, %v1100
    %1472 = vst [vmem:[#allocation1] sm:$0xff] %v1470
    %s1473 = scalar_lea.vmem [#allocation1], 2
    %v1474 = vld [vmem:[%s1473] ss:$9 sm:$0xff]
    %v1476 = vadd.f32 %v1444, %v1474
    %v1477 = vmul.f32 %v1355, %v1374
    %v1478 = vmul.f32 %v1356, %v1384
    %s1479 = sld [smem:[#allocation5 + $0x83]]
    %v1480 = vstv %s1479
    %v1481 = vmul.f32 %v1477, %v1480
    %v1482 = vmul.f32 %v1478, %v1480
    %s1483 = sld [smem:[#allocation7 + $0x83]]
    %v1484 = vstv %s1483
    %v1485 = vadd.f32 %v1481, %v1484
    %v1486 = vadd.f32 %v1482, %v1484
    %v1487 = vmul.f32 %v1485, %v130
    %v1488 = vmul.f32 %v1486, %v130
    %v1489 = vsel %vm181, %v1487, 0.0
    %v1490 = vsel %vm181, %v1488, 0.0
    %v1491 = vadd.f32 %v1489, %v1490
    %1492 = vadd.xlane.f32.xlu0 %v1491
    %v1493 = vpop.xlane.xlu0 %1492
    %v1494 = vrot.slane %v1493, 4
    %v1495 = vadd.f32 %v1493, %v1494
    %v1496 = vrot.slane %v1495, 2
    %v1497 = vadd.f32 %v1495, %v1496
    %v1498 = vrot.slane %v1497, 1
    %v1499 = vadd.f32 %v1497, %v1498
    %s1500 = vtos %v1499
    %v1501 = vstv %s1500
    %v1502 = vmul.f32 %v1501, %v1100
    %1504 = vst [vmem:[#allocation1] sm:$0xff] %v1502
    %s1505 = scalar_lea.vmem [#allocation1], 3
    %v1506 = vld [vmem:[%s1505] ss:$9 sm:$0xff]
    %v1508 = vadd.f32 %v1476, %v1506
    %v1509 = vsel %vm536, %v1508, 0.0
    %1510 = vadd.xlane.f32.xlu0 %v1509
    %v1511 = vpop.xlane.xlu0 %1510
    %v1512 = vmul.f32 %v1511, %v546
    %v1513 = vsub.f32 %v1508, %v1512
    %v1514 = vmul.f32 %v1513, %v1513
    %v1515 = vsel %vm536, %v1514, 0.0
    %1516 = vadd.xlane.f32.xlu0 %v1515
    %v1517 = vpop.xlane.xlu0 %1516
    %v1518 = vmul.f32 %v1517, %v546
    %v1519 = vadd.f32 %v1518, 1e-05
    %v1520 = vrsqrt.pop %v1519
    %v1521 = vmul.f32 %v1520, %v1519
    %v1522 = vmul.f32 %v1521, %v1520
    %v1523 = vmul.f32 0.5, %v1522
    %v1524 = vsub.f32 1.5, %v1523
    %v1525 = vmul.f32 %v1520, %v1524
    %vm1526 = vweird.f32 %v1519
    %vm1527 = vweird.f32 %v1520
    %vm1528 = vmor %vm1526, %vm1527
    %v1529 = vsel %vm1528, %v1520, %v1525
    %v1530 = vmul.f32 %v1513, %v1529
    %v1531 = vmul.f32 %v1530, %v1104
    %v1532 = vadd.f32 %v1531, %v1106
    %v1533 = vadd.f32 %v105, %v1532
    %v1534 = vmul.f32 %v578, %v1110
    %v1535 = vmul.f32 %v579, %v1115
    %v1536 = vmul.f32 %v578, %v1120
    %v1537 = vmul.f32 %v579, %v1125
    %v1538 = vmul.f32 %v578, %v1130
    %v1539 = vmul.f32 %v579, %v1135
    %v1540 = vmul.f32 %v578, %v1140
    %v1541 = vmul.f32 %v579, %v1145
    %v1542 = vsel %vm181, %v1534, -inf
    %1543 = vmax.xlane.f32.xlu0 %v1542
    %v1544 = vpop.xlane.xlu0 %1543
    %v1545 = vsel %vm181, %v1535, -inf
    %1546 = vmax.xlane.f32.xlu0 %v1545
    %v1547 = vpop.xlane.xlu0 %1546
    %v1548 = vsel %vm181, %v1536, -inf
    %1549 = vmax.xlane.f32.xlu0 %v1548
    %v1550 = vpop.xlane.xlu0 %1549
    %v1551 = vsel %vm181, %v1537, -inf
    %1552 = vmax.xlane.f32.xlu0 %v1551
    %v1553 = vpop.xlane.xlu0 %1552
    %v1554 = vsel %vm181, %v1538, -inf
    %1555 = vmax.xlane.f32.xlu0 %v1554
    %v1556 = vpop.xlane.xlu0 %1555
    %v1557 = vsel %vm181, %v1539, -inf
    %1558 = vmax.xlane.f32.xlu0 %v1557
    %v1559 = vpop.xlane.xlu0 %1558
    %v1560 = vsel %vm181, %v1540, -inf
    %1561 = vmax.xlane.f32.xlu0 %v1560
    %v1562 = vpop.xlane.xlu0 %1561
    %v1563 = vsel %vm181, %v1541, -inf
    %1564 = vmax.xlane.f32.xlu0 %v1563
    %v1565 = vpop.xlane.xlu0 %1564
    %v1566 = vsub.f32 %v1534, %v1544
    %v1567 = vsub.f32 %v1535, %v1547
    %v1568 = vsub.f32 %v1536, %v1550
    %v1569 = vsub.f32 %v1537, %v1553
    %v1570 = vsub.f32 %v1538, %v1556
    %v1571 = vsub.f32 %v1539, %v1559
    %v1572 = vsub.f32 %v1540, %v1562
    %v1573 = vsub.f32 %v1541, %v1565
    %v1574 = vmul.f32 %v1566, 1.442695
    %v1575 = vpow.pop %v1574
    %v1576 = vmul.f32 %v1567, 1.442695
    %v1577 = vpow.pop %v1576
    %v1578 = vmul.f32 %v1568, 1.442695
    %v1579 = vpow.pop %v1578
    %v1580 = vmul.f32 %v1569, 1.442695
    %v1581 = vpow.pop %v1580
    %v1582 = vmul.f32 %v1570, 1.442695
    %v1583 = vpow.pop %v1582
    %v1584 = vmul.f32 %v1571, 1.442695
    %v1585 = vpow.pop %v1584
    %v1586 = vmul.f32 %v1572, 1.442695
    %v1587 = vpow.pop %v1586
    %v1588 = vmul.f32 %v1573, 1.442695
    %v1589 = vpow.pop %v1588
    %v1590 = vsel %vm181, %v1575, 0.0
    %1591 = vadd.xlane.f32.xlu0 %v1590
    %v1592 = vpop.xlane.xlu0 %1591
    %v1593 = vsel %vm181, %v1577, 0.0
    %1594 = vadd.xlane.f32.xlu0 %v1593
    %v1595 = vpop.xlane.xlu0 %1594
    %v1596 = vsel %vm181, %v1579, 0.0
    %1597 = vadd.xlane.f32.xlu0 %v1596
    %v1598 = vpop.xlane.xlu0 %1597
    %v1599 = vsel %vm181, %v1581, 0.0
    %1600 = vadd.xlane.f32.xlu0 %v1599
    %v1601 = vpop.xlane.xlu0 %1600
    %v1602 = vsel %vm181, %v1583, 0.0
    %1603 = vadd.xlane.f32.xlu0 %v1602
    %v1604 = vpop.xlane.xlu0 %1603
    %v1605 = vsel %vm181, %v1585, 0.0
    %1606 = vadd.xlane.f32.xlu0 %v1605
    %v1607 = vpop.xlane.xlu0 %1606
    %v1608 = vsel %vm181, %v1587, 0.0
    %1609 = vadd.xlane.f32.xlu0 %v1608
    %v1610 = vpop.xlane.xlu0 %1609
    %v1611 = vsel %vm181, %v1589, 0.0
    %1612 = vadd.xlane.f32.xlu0 %v1611
    %v1613 = vpop.xlane.xlu0 %1612
    %v1614 = vrcp.pop %v1592
    %v1615 = vrcp.pop %v1595
    %v1616 = vrcp.pop %v1598
    %v1617 = vrcp.pop %v1601
    %v1618 = vrcp.pop %v1604
    %v1619 = vrcp.pop %v1607
    %v1620 = vrcp.pop %v1610
    %v1621 = vrcp.pop %v1613
    %v1622 = vmul.f32 %v1575, %v1614
    %v1623 = vmul.f32 %v1577, %v1615
    %v1624 = vmul.f32 %v1579, %v1616
    %v1625 = vmul.f32 %v1581, %v1617
    %v1626 = vmul.f32 %v1583, %v1618
    %v1627 = vmul.f32 %v1585, %v1619
    %v1628 = vmul.f32 %v1587, %v1620
    %v1629 = vmul.f32 %v1589, %v1621
    %v1630 = vmul.f32 %v1622, %v1244
    %v1631 = vmul.f32 %v1623, %v1244
    %v1632 = vmul.f32 %v1624, %v1248
    %v1633 = vmul.f32 %v1625, %v1248
    %v1634 = vadd.f32 %v1630, %v1632
    %v1635 = vadd.f32 %v1631, %v1633
    %v1636 = vmul.f32 %v1626, %v1254
    %v1637 = vmul.f32 %v1627, %v1254
    %v1638 = vadd.f32 %v1634, %v1636
    %v1639 = vadd.f32 %v1635, %v1637
    %v1640 = vmul.f32 %v1628, %v1260
    %v1641 = vmul.f32 %v1629, %v1260
    %v1642 = vadd.f32 %v1638, %v1640
    %v1643 = vadd.f32 %v1639, %v1641
    %v1644 = vmul.f32 %v1622, %v1266
    %v1645 = vmul.f32 %v1623, %v1266
    %v1646 = vmul.f32 %v1624, %v1270
    %v1647 = vmul.f32 %v1625, %v1270
    %v1648 = vadd.f32 %v1644, %v1646
    %v1649 = vadd.f32 %v1645, %v1647
    %v1650 = vmul.f32 %v1626, %v1276
    %v1651 = vmul.f32 %v1627, %v1276
    %v1652 = vadd.f32 %v1648, %v1650
    %v1653 = vadd.f32 %v1649, %v1651
    %v1654 = vmul.f32 %v1628, %v1282
    %v1655 = vmul.f32 %v1629, %v1282
    %v1656 = vadd.f32 %v1652, %v1654
    %v1657 = vadd.f32 %v1653, %v1655
    %v1658 = vmul.f32 %v1622, %v1288
    %v1659 = vmul.f32 %v1623, %v1288
    %v1660 = vmul.f32 %v1624, %v1292
    %v1661 = vmul.f32 %v1625, %v1292
    %v1662 = vadd.f32 %v1658, %v1660
    %v1663 = vadd.f32 %v1659, %v1661
    %v1664 = vmul.f32 %v1626, %v1298
    %v1665 = vmul.f32 %v1627, %v1298
    %v1666 = vadd.f32 %v1662, %v1664
    %v1667 = vadd.f32 %v1663, %v1665
    %v1668 = vmul.f32 %v1628, %v1304
    %v1669 = vmul.f32 %v1629, %v1304
    %v1670 = vadd.f32 %v1666, %v1668
    %v1671 = vadd.f32 %v1667, %v1669
    %v1672 = vmul.f32 %v1622, %v1310
    %v1673 = vmul.f32 %v1623, %v1310
    %v1674 = vmul.f32 %v1624, %v1314
    %v1675 = vmul.f32 %v1625, %v1314
    %v1676 = vadd.f32 %v1672, %v1674
    %v1677 = vadd.f32 %v1673, %v1675
    %v1678 = vmul.f32 %v1626, %v1320
    %v1679 = vmul.f32 %v1627, %v1320
    %v1680 = vadd.f32 %v1676, %v1678
    %v1681 = vadd.f32 %v1677, %v1679
    %v1682 = vmul.f32 %v1628, %v1326
    %v1683 = vmul.f32 %v1629, %v1326
    %v1684 = vadd.f32 %v1680, %v1682
    %v1685 = vadd.f32 %v1681, %v1683
    %v1686 = vadd.f32 %v1642, %v1656
    %v1687 = vadd.f32 %v1643, %v1657
    %v1688 = vadd.f32 %v1686, %v1670
    %v1689 = vadd.f32 %v1687, %v1671
    %v1690 = vadd.f32 %v1688, %v1684
    %v1691 = vadd.f32 %v1689, %v1685
    %v1692 = vmul.f32 %v1690, 0.25
    %v1693 = vmul.f32 %v1691, 0.25
    %v1694 = vsub.f32 %v1642, %v1692
    %v1695 = vsub.f32 %v1643, %v1693
    %v1696 = vmul.f32 %v1694, %v1694
    %v1697 = vmul.f32 %v1695, %v1695
    %v1698 = vsub.f32 %v1656, %v1692
    %v1699 = vsub.f32 %v1657, %v1693
    %v1700 = vmul.f32 %v1698, %v1698
    %v1701 = vmul.f32 %v1699, %v1699
    %v1702 = vadd.f32 %v1696, %v1700
    %v1703 = vadd.f32 %v1697, %v1701
    %v1704 = vsub.f32 %v1670, %v1692
    %v1705 = vsub.f32 %v1671, %v1693
    %v1706 = vmul.f32 %v1704, %v1704
    %v1707 = vmul.f32 %v1705, %v1705
    %v1708 = vadd.f32 %v1702, %v1706
    %v1709 = vadd.f32 %v1703, %v1707
    %v1710 = vsub.f32 %v1684, %v1692
    %v1711 = vsub.f32 %v1685, %v1693
    %v1712 = vmul.f32 %v1710, %v1710
    %v1713 = vmul.f32 %v1711, %v1711
    %v1714 = vadd.f32 %v1708, %v1712
    %v1715 = vadd.f32 %v1709, %v1713
    %v1716 = vmul.f32 %v1714, 0.25
    %v1717 = vmul.f32 %v1715, 0.25
    %v1718 = vadd.f32 %v1716, 1e-05
    %v1719 = vadd.f32 %v1717, 1e-05
    %v1720 = vrsqrt.pop %v1718
    %v1721 = vmul.f32 %v1720, %v1718
    %v1722 = vmul.f32 %v1721, %v1720
    %v1723 = vmul.f32 0.5, %v1722
    %v1724 = vsub.f32 1.5, %v1723
    %v1725 = vmul.f32 %v1720, %v1724
    %vm1726 = vweird.f32 %v1718
    %vm1727 = vweird.f32 %v1720
    %vm1728 = vmor %vm1726, %vm1727
    %v1729 = vsel %vm1728, %v1720, %v1725
    %v1730 = vrsqrt.pop %v1719
    %v1731 = vmul.f32 %v1730, %v1719
    %v1732 = vmul.f32 %v1731, %v1730
    %v1733 = vmul.f32 0.5, %v1732
    %v1734 = vsub.f32 1.5, %v1733
    %v1735 = vmul.f32 %v1730, %v1734
    %vm1736 = vweird.f32 %v1719
    %vm1737 = vweird.f32 %v1730
    %vm1738 = vmor %vm1736, %vm1737
    %v1739 = vsel %vm1738, %v1730, %v1735
    %v1740 = vmul.f32 %v1694, %v1729
    %v1741 = vmul.f32 %v1695, %v1739
    %v1742 = vmul.f32 %v1740, %v1389
    %v1743 = vmul.f32 %v1741, %v1389
    %v1744 = vadd.f32 %v1742, %v1393
    %v1745 = vadd.f32 %v1743, %v1393
    %v1746 = vmul.f32 %v1744, %v577
    %v1747 = vmul.f32 %v1745, %v577
    %v1748 = vsel %vm181, %v1746, 0.0
    %v1749 = vsel %vm181, %v1747, 0.0
    %v1750 = vadd.f32 %v1748, %v1749
    %1751 = vadd.xlane.f32.xlu0 %v1750
    %v1752 = vpop.xlane.xlu0 %1751
    %v1753 = vrot.slane %v1752, 4
    %v1754 = vadd.f32 %v1752, %v1753
    %v1755 = vrot.slane %v1754, 2
    %v1756 = vadd.f32 %v1754, %v1755
    %v1757 = vrot.slane %v1756, 1
    %v1758 = vadd.f32 %v1756, %v1757
    %s1759 = vtos %v1758
    %v1760 = vstv %s1759
    %v1761 = vmul.f32 %v1760, %v1100
    %v1762 = vadd.f32 %v1385, %v1761
    %v1763 = vmul.f32 %v1698, %v1729
    %v1764 = vmul.f32 %v1699, %v1739
    %v1765 = vmul.f32 %v1763, %v1416
    %v1766 = vmul.f32 %v1764, %v1416
    %v1767 = vadd.f32 %v1765, %v1420
    %v1768 = vadd.f32 %v1766, %v1420
    %v1769 = vmul.f32 %v1767, %v577
    %v1770 = vmul.f32 %v1768, %v577
    %v1771 = vsel %vm181, %v1769, 0.0
    %v1772 = vsel %vm181, %v1770, 0.0
    %v1773 = vadd.f32 %v1771, %v1772
    %1774 = vadd.xlane.f32.xlu0 %v1773
    %v1775 = vpop.xlane.xlu0 %1774
    %v1776 = vrot.slane %v1775, 4
    %v1777 = vadd.f32 %v1775, %v1776
    %v1778 = vrot.slane %v1777, 2
    %v1779 = vadd.f32 %v1777, %v1778
    %v1780 = vrot.slane %v1779, 1
    %v1781 = vadd.f32 %v1779, %v1780
    %s1782 = vtos %v1781
    %v1783 = vstv %s1782
    %v1784 = vmul.f32 %v1783, %v1100
    %1786 = vst [vmem:[#allocation1] sm:$0xff] %v1784
    %s1787 = scalar_lea.vmem [#allocation1], 1
    %v1788 = vld [vmem:[%s1787] ss:$9 sm:$0xff]
    %v1790 = vadd.f32 %v1762, %v1788
    %v1791 = vmul.f32 %v1704, %v1729
    %v1792 = vmul.f32 %v1705, %v1739
    %v1793 = vmul.f32 %v1791, %v1448
    %v1794 = vmul.f32 %v1792, %v1448
    %v1795 = vadd.f32 %v1793, %v1452
    %v1796 = vadd.f32 %v1794, %v1452
    %v1797 = vmul.f32 %v1795, %v577
    %v1798 = vmul.f32 %v1796, %v577
    %v1799 = vsel %vm181, %v1797, 0.0
    %v1800 = vsel %vm181, %v1798, 0.0
    %v1801 = vadd.f32 %v1799, %v1800
    %1802 = vadd.xlane.f32.xlu0 %v1801
    %v1803 = vpop.xlane.xlu0 %1802
    %v1804 = vrot.slane %v1803, 4
    %v1805 = vadd.f32 %v1803, %v1804
    %v1806 = vrot.slane %v1805, 2
    %v1807 = vadd.f32 %v1805, %v1806
    %v1808 = vrot.slane %v1807, 1
    %v1809 = vadd.f32 %v1807, %v1808
    %s1810 = vtos %v1809
    %v1811 = vstv %s1810
    %v1812 = vmul.f32 %v1811, %v1100
    %1814 = vst [vmem:[#allocation1] sm:$0xff] %v1812
    %s1815 = scalar_lea.vmem [#allocation1], 2
    %v1816 = vld [vmem:[%s1815] ss:$9 sm:$0xff]
    %v1818 = vadd.f32 %v1790, %v1816
    %v1819 = vmul.f32 %v1710, %v1729
    %v1820 = vmul.f32 %v1711, %v1739
    %v1821 = vmul.f32 %v1819, %v1480
    %v1822 = vmul.f32 %v1820, %v1480
    %v1823 = vadd.f32 %v1821, %v1484
    %v1824 = vadd.f32 %v1822, %v1484
    %v1825 = vmul.f32 %v1823, %v577
    %v1826 = vmul.f32 %v1824, %v577
    %v1827 = vsel %vm181, %v1825, 0.0
    %v1828 = vsel %vm181, %v1826, 0.0
    %v1829 = vadd.f32 %v1827, %v1828
    %1830 = vadd.xlane.f32.xlu0 %v1829
    %v1831 = vpop.xlane.xlu0 %1830
    %v1832 = vrot.slane %v1831, 4
    %v1833 = vadd.f32 %v1831, %v1832
    %v1834 = vrot.slane %v1833, 2
    %v1835 = vadd.f32 %v1833, %v1834
    %v1836 = vrot.slane %v1835, 1
    %v1837 = vadd.f32 %v1835, %v1836
    %s1838 = vtos %v1837
    %v1839 = vstv %s1838
    %v1840 = vmul.f32 %v1839, %v1100
    %1842 = vst [vmem:[#allocation1] sm:$0xff] %v1840
    %s1843 = scalar_lea.vmem [#allocation1], 3
    %v1844 = vld [vmem:[%s1843] ss:$9 sm:$0xff]
    %v1846 = vadd.f32 %v1818, %v1844
    %v1847 = vsel %vm536, %v1846, 0.0
    %1848 = vadd.xlane.f32.xlu0 %v1847
    %v1849 = vpop.xlane.xlu0 %1848
    %v1850 = vmul.f32 %v1849, %v546
    %v1851 = vsub.f32 %v1846, %v1850
    %v1852 = vmul.f32 %v1851, %v1851
    %v1853 = vsel %vm536, %v1852, 0.0
    %1854 = vadd.xlane.f32.xlu0 %v1853
    %v1855 = vpop.xlane.xlu0 %1854
    %v1856 = vmul.f32 %v1855, %v546
    %v1857 = vadd.f32 %v1856, 1e-05
    %v1858 = vrsqrt.pop %v1857
    %v1859 = vmul.f32 %v1858, %v1857
    %v1860 = vmul.f32 %v1859, %v1858
    %v1861 = vmul.f32 0.5, %v1860
    %v1862 = vsub.f32 1.5, %v1861
    %v1863 = vmul.f32 %v1858, %v1862
    %vm1864 = vweird.f32 %v1857
    %vm1865 = vweird.f32 %v1858
    %vm1866 = vmor %vm1864, %vm1865
    %v1867 = vsel %vm1866, %v1858, %v1863
    %v1868 = vmul.f32 %v1851, %v1867
    %v1869 = vmul.f32 %v1868, %v1104
    %v1870 = vadd.f32 %v1869, %v1106
    %v1872 = vperm.slane %v1870, 0
    %v1874 = vadd.f32 %v105, %v1872
    %v1875 = vsel %vm921, %v1533, %v1874
    %s1876 = scalar_lea.vmem %s10, 16
    %v1877 = vld [vmem:[%s1876] sm:$0xff]
    %v1878 = vld [vmem:[%s1876 + $0x8] sm:$0xff]
    %s1879 = scalar_lea.vmem %s11, 1
    %v1880 = vld [vmem:[%s1879] sm:$0x1]
    %v1882 = vperm.slane %v1880, 0
    %v1885 = vsel %vm181, %v1875, 0
    %1887 = vmatpush.msra.mxu0 0.0
    %1888 = vmatpush.msra.mxu0 0.0
    %1889 = vmatpush.msra.mxu0 0.0
    %1890 = vmatpush.msra.mxu0 0.0
    %1891 = vmatpush.msra.mxu0 0.0
    %1892 = vmatpush.msra.mxu0 0.0
    %1893 = vmatpush.msra.mxu0 0.0
    %1894 = vmatpush.msra.mxu0 0.0
    %1895 = vmatpush.msra.mxu0 0.0
    %1896 = vmatpush.msra.mxu0 0.0
    %1897 = vmatpush.msra.mxu0 0.0
    %1898 = vmatpush.msra.mxu0 0.0
    %1899 = vmatpush.msra.mxu0 0.0
    %1900 = vmatpush.msra.mxu0 0.0
    %1901 = vmatpush.msra.mxu0 %v1878
    %1902 = vmatpush.msra.mxu0 %v1877
    %1903 = vmatmul.f32.gmra.mxu0 %v1885
    %v1904 = vpop.f32.mrf.mxu0
    %v1905 = vadd.f32 %v1882, %v1904
    %1906 = vdwg.mxu0
    %v1907 = vmax.f32 %v1905, 0.0
    %s1908 = scalar_lea.vmem %s12, 1
    %v1909 = vld [vmem:[%s1908] sm:$0x1]
    %s1910 = scalar_lea.vmem %s13, 1
    %v1911 = vld [vmem:[%s1910] sm:$0x1]
    %v1912 = vsel %vm955, %v1907, 0.0
    %1913 = vadd.xlane.f32.xlu0 %v1912
    %v1914 = vpop.xlane.xlu0 %1913
    %v1915 = vmul.f32 %v1914, %v965
    %v1916 = vsub.f32 %v1907, %v1915
    %v1917 = vmul.f32 %v1916, %v1916
    %v1918 = vsel %vm955, %v1917, 0.0
    %1919 = vadd.xlane.f32.xlu0 %v1918
    %v1920 = vpop.xlane.xlu0 %1919
    %v1921 = vmul.f32 %v1920, %v965
    %v1922 = vadd.f32 %v1921, 1e-05
    %v1923 = vrsqrt.pop %v1922
    %v1924 = vmul.f32 %v1923, %v1922
    %v1925 = vmul.f32 %v1924, %v1923
    %v1926 = vmul.f32 0.5, %v1925
    %v1927 = vsub.f32 1.5, %v1926
    %v1928 = vmul.f32 %v1923, %v1927
    %vm1929 = vweird.f32 %v1922
    %vm1930 = vweird.f32 %v1923
    %vm1931 = vmor %vm1929, %vm1930
    %v1932 = vsel %vm1931, %v1923, %v1928
    %v1933 = vmul.f32 %v1916, %v1932
    %v1935 = vperm.slane %v1909, 0
    %v1937 = vmul.f32 %v1933, %v1935
    %v1939 = vperm.slane %v1911, 0
    %v1941 = vadd.f32 %v1937, %v1939
    %s1942 = scalar_lea.vmem %s14, 32
    %v1943 = vld [vmem:[%s1942] sm:$0xff]
    %v1944 = vld [vmem:[%s1942 + $0x8] sm:$0xff]
    %v1945 = vld [vmem:[%s1942 + $0x10] sm:$0xff]
    %v1946 = vld [vmem:[%s1942 + $0x18] sm:$0xff]
    %s1947 = scalar_lea.vmem %s15, 1
    %v1948 = vld [vmem:[%s1947] sm:$0x1]
    %v1950 = vperm.slane %v1948, 0
    %v1953 = vsel %vm1001, %v1941, 0
    %1955 = vmatpush.msra.mxu0 0.0
    %1956 = vmatpush.msra.mxu0 0.0
    %1957 = vmatpush.msra.mxu0 0.0
    %1958 = vmatpush.msra.mxu0 0.0
    %1959 = vmatpush.msra.mxu0 0.0
    %1960 = vmatpush.msra.mxu0 0.0
    %1961 = vmatpush.msra.mxu0 0.0
    %1962 = vmatpush.msra.mxu0 0.0
    %1963 = vmatpush.msra.mxu0 0.0
    %1964 = vmatpush.msra.mxu0 0.0
    %1965 = vmatpush.msra.mxu0 0.0
    %1966 = vmatpush.msra.mxu0 0.0
    %1967 = vmatpush.msra.mxu0 %v1946
    %1968 = vmatpush.msra.mxu0 %v1945
    %1969 = vmatpush.msra.mxu0 %v1944
    %1970 = vmatpush.msra.mxu0 %v1943
    %1971 = vmatmul.f32.gmra.mxu0 %v1953
    %v1972 = vpop.f32.mrf.mxu0
    %v1973 = vadd.f32 %v1950, %v1972
    %1974 = vdwg.mxu0
    %v1975 = vmax.f32 %v1973, 0.0
    %s1976 = scalar_lea.vmem %s16, 1
    %v1977 = vld [vmem:[%s1976] sm:$0x1]
    %s1978 = scalar_lea.vmem %s17, 1
    %v1979 = vld [vmem:[%s1978] sm:$0x1]
    %v1980 = vsel %vm955, %v1975, 0.0
    %1981 = vadd.xlane.f32.xlu0 %v1980
    %v1982 = vpop.xlane.xlu0 %1981
    %v1983 = vmul.f32 %v1982, %v965
    %v1984 = vsub.f32 %v1975, %v1983
    %v1985 = vmul.f32 %v1984, %v1984
    %v1986 = vsel %vm955, %v1985, 0.0
    %1987 = vadd.xlane.f32.xlu0 %v1986
    %v1988 = vpop.xlane.xlu0 %1987
    %v1989 = vmul.f32 %v1988, %v965
    %v1990 = vadd.f32 %v1989, 1e-05
    %v1991 = vrsqrt.pop %v1990
    %v1992 = vmul.f32 %v1991, %v1990
    %v1993 = vmul.f32 %v1992, %v1991
    %v1994 = vmul.f32 0.5, %v1993
    %v1995 = vsub.f32 1.5, %v1994
    %v1996 = vmul.f32 %v1991, %v1995
    %vm1997 = vweird.f32 %v1990
    %vm1998 = vweird.f32 %v1991
    %vm1999 = vmor %vm1997, %vm1998
    %v2000 = vsel %vm1999, %v1991, %v1996
    %v2001 = vmul.f32 %v1984, %v2000
    %v2003 = vperm.slane %v1977, 0
    %v2005 = vmul.f32 %v2001, %v2003
    %v2007 = vperm.slane %v1979, 0
    %v2009 = vadd.f32 %v2005, %v2007
    %v2010 = vadd.f32 %v1941, %v2009
    %s2011 = scalar_lea.vmem %s18, 32
    %v2012 = vld [vmem:[%s2011] sm:$0xff]
    %v2013 = vld [vmem:[%s2011 + $0x8] sm:$0xff]
    %v2014 = vld [vmem:[%s2011 + $0x10] sm:$0xff]
    %v2015 = vld [vmem:[%s2011 + $0x18] sm:$0xff]
    %s2016 = scalar_lea.vmem %s19, 1
    %v2017 = vld [vmem:[%s2016] sm:$0x1]
    %v2019 = vperm.slane %v2017, 0
    %v2022 = vsel %vm1001, %v2010, 0
    %2024 = vmatpush.msra.mxu0 0.0
    %2025 = vmatpush.msra.mxu0 0.0
    %2026 = vmatpush.msra.mxu0 0.0
    %2027 = vmatpush.msra.mxu0 0.0
    %2028 = vmatpush.msra.mxu0 0.0
    %2029 = vmatpush.msra.mxu0 0.0
    %2030 = vmatpush.msra.mxu0 0.0
    %2031 = vmatpush.msra.mxu0 0.0
    %2032 = vmatpush.msra.mxu0 0.0
    %2033 = vmatpush.msra.mxu0 0.0
    %2034 = vmatpush.msra.mxu0 0.0
    %2035 = vmatpush.msra.mxu0 0.0
    %2036 = vmatpush.msra.mxu0 %v2015
    %2037 = vmatpush.msra.mxu0 %v2014
    %2038 = vmatpush.msra.mxu0 %v2013
    %2039 = vmatpush.msra.mxu0 %v2012
    %2040 = vmatmul.f32.gmra.mxu0 %v2022
    %v2041 = vpop.f32.mrf.mxu0
    %v2042 = vadd.f32 %v2019, %v2041
    %2043 = vdwg.mxu0
    %s2044 = scalar_lea.vmem %s5, 128
    %v2045 = vld [vmem:[%s2044] sm:$0xff]
    %v2046 = vld [vmem:[%s2044 + $0x8] sm:$0xff]
    %v2047 = vld [vmem:[%s2044 + $0x10] sm:$0xff]
    %v2048 = vld [vmem:[%s2044 + $0x18] sm:$0xff]
    %v2049 = vld [vmem:[%s2044 + $0x20] sm:$0xff]
    %v2050 = vld [vmem:[%s2044 + $0x28] sm:$0xff]
    %v2051 = vld [vmem:[%s2044 + $0x30] sm:$0xff]
    %v2052 = vld [vmem:[%s2044 + $0x38] sm:$0xff]
    %s2053 = scalar_lea.vmem %s6, 8
    %v2054 = vld [vmem:[%s2053] sm:$0xf]
    %s2055 = scalar_lea.vmem %s7, 2
    %v2056 = vld [vmem:[%s2055] sm:$0x1]
    %s2057 = scalar_lea.vmem %s8, 2
    %v2058 = vld [vmem:[%s2057] sm:$0x1]
    %s2059 = scalar_lea.vmem %s9, 2
    %v2060 = vld [vmem:[%s2059] sm:$0x1]
    %2062 = vset.pattern.permute.xlu0 0
    %2063 = vperm.xlu0 %2062, %v2045
    %v2064 = vpop.permute.xlu0 %2063
    %2067 = vset.pattern.permute.xlu0 0
    %2068 = vperm.xlu0 %2067, %v2046
    %v2069 = vpop.permute.xlu0 %2068
    %2072 = vset.pattern.permute.xlu0 0
    %2073 = vperm.xlu0 %2072, %v2047
    %v2074 = vpop.permute.xlu0 %2073
    %2077 = vset.pattern.permute.xlu0 0
    %2078 = vperm.xlu0 %2077, %v2048
    %v2079 = vpop.permute.xlu0 %2078
    %2082 = vset.pattern.permute.xlu0 0
    %2083 = vperm.xlu0 %2082, %v2049
    %v2084 = vpop.permute.xlu0 %2083
    %2087 = vset.pattern.permute.xlu0 0
    %2088 = vperm.xlu0 %2087, %v2050
    %v2089 = vpop.permute.xlu0 %2088
    %2092 = vset.pattern.permute.xlu0 0
    %2093 = vperm.xlu0 %2092, %v2051
    %v2094 = vpop.permute.xlu0 %2093
    %2097 = vset.pattern.permute.xlu0 0
    %2098 = vperm.xlu0 %2097, %v2052
    %v2099 = vpop.permute.xlu0 %2098
    %v2101 = vmul.f32 %v131, %v2064
    %v2102 = vmul.f32 %v132, %v2069
    %v2103 = vmul.f32 %v131, %v2074
    %v2104 = vmul.f32 %v132, %v2079
    %v2105 = vmul.f32 %v131, %v2084
    %v2106 = vmul.f32 %v132, %v2089
    %v2107 = vmul.f32 %v131, %v2094
    %v2108 = vmul.f32 %v132, %v2099
    %v2109 = vsel %vm181, %v2101, -inf
    %2110 = vmax.xlane.f32.xlu0 %v2109
    %v2111 = vpop.xlane.xlu0 %2110
    %v2112 = vsel %vm181, %v2102, -inf
    %2113 = vmax.xlane.f32.xlu0 %v2112
    %v2114 = vpop.xlane.xlu0 %2113
    %v2115 = vsel %vm181, %v2103, -inf
    %2116 = vmax.xlane.f32.xlu0 %v2115
    %v2117 = vpop.xlane.xlu0 %2116
    %v2118 = vsel %vm181, %v2104, -inf
    %2119 = vmax.xlane.f32.xlu0 %v2118
    %v2120 = vpop.xlane.xlu0 %2119
    %v2121 = vsel %vm181, %v2105, -inf
    %2122 = vmax.xlane.f32.xlu0 %v2121
    %v2123 = vpop.xlane.xlu0 %2122
    %v2124 = vsel %vm181, %v2106, -inf
    %2125 = vmax.xlane.f32.xlu0 %v2124
    %v2126 = vpop.xlane.xlu0 %2125
    %v2127 = vsel %vm181, %v2107, -inf
    %2128 = vmax.xlane.f32.xlu0 %v2127
    %v2129 = vpop.xlane.xlu0 %2128
    %v2130 = vsel %vm181, %v2108, -inf
    %2131 = vmax.xlane.f32.xlu0 %v2130
    %v2132 = vpop.xlane.xlu0 %2131
    %v2133 = vsub.f32 %v2101, %v2111
    %v2134 = vsub.f32 %v2102, %v2114
    %v2135 = vsub.f32 %v2103, %v2117
    %v2136 = vsub.f32 %v2104, %v2120
    %v2137 = vsub.f32 %v2105, %v2123
    %v2138 = vsub.f32 %v2106, %v2126
    %v2139 = vsub.f32 %v2107, %v2129
    %v2140 = vsub.f32 %v2108, %v2132
    %v2141 = vmul.f32 %v2133, 1.442695
    %v2142 = vpow.pop %v2141
    %v2143 = vmul.f32 %v2134, 1.442695
    %v2144 = vpow.pop %v2143
    %v2145 = vmul.f32 %v2135, 1.442695
    %v2146 = vpow.pop %v2145
    %v2147 = vmul.f32 %v2136, 1.442695
    %v2148 = vpow.pop %v2147
    %v2149 = vmul.f32 %v2137, 1.442695
    %v2150 = vpow.pop %v2149
    %v2151 = vmul.f32 %v2138, 1.442695
    %v2152 = vpow.pop %v2151
    %v2153 = vmul.f32 %v2139, 1.442695
    %v2154 = vpow.pop %v2153
    %v2155 = vmul.f32 %v2140, 1.442695
    %v2156 = vpow.pop %v2155
    %v2157 = vsel %vm181, %v2142, 0.0
    %2158 = vadd.xlane.f32.xlu0 %v2157
    %v2159 = vpop.xlane.xlu0 %2158
    %v2160 = vsel %vm181, %v2144, 0.0
    %2161 = vadd.xlane.f32.xlu0 %v2160
    %v2162 = vpop.xlane.xlu0 %2161
    %v2163 = vsel %vm181, %v2146, 0.0
    %2164 = vadd.xlane.f32.xlu0 %v2163
    %v2165 = vpop.xlane.xlu0 %2164
    %v2166 = vsel %vm181, %v2148, 0.0
    %2167 = vadd.xlane.f32.xlu0 %v2166
    %v2168 = vpop.xlane.xlu0 %2167
    %v2169 = vsel %vm181, %v2150, 0.0
    %2170 = vadd.xlane.f32.xlu0 %v2169
    %v2171 = vpop.xlane.xlu0 %2170
    %v2172 = vsel %vm181, %v2152, 0.0
    %2173 = vadd.xlane.f32.xlu0 %v2172
    %v2174 = vpop.xlane.xlu0 %2173
    %v2175 = vsel %vm181, %v2154, 0.0
    %2176 = vadd.xlane.f32.xlu0 %v2175
    %v2177 = vpop.xlane.xlu0 %2176
    %v2178 = vsel %vm181, %v2156, 0.0
    %2179 = vadd.xlane.f32.xlu0 %v2178
    %v2180 = vpop.xlane.xlu0 %2179
    %v2181 = vrcp.pop %v2159
    %v2182 = vrcp.pop %v2162
    %v2183 = vrcp.pop %v2165
    %v2184 = vrcp.pop %v2168
    %v2185 = vrcp.pop %v2171
    %v2186 = vrcp.pop %v2174
    %v2187 = vrcp.pop %v2177
    %v2188 = vrcp.pop %v2180
    %v2189 = vmul.f32 %v2142, %v2181
    %v2190 = vmul.f32 %v2144, %v2182
    %v2191 = vmul.f32 %v2146, %v2183
    %v2192 = vmul.f32 %v2148, %v2184
    %v2193 = vmul.f32 %v2150, %v2185
    %v2194 = vmul.f32 %v2152, %v2186
    %v2195 = vmul.f32 %v2154, %v2187
    %v2196 = vmul.f32 %v2156, %v2188
    %s2197 = sld [smem:[#allocation2 + $0x100]]
    %v2198 = vstv %s2197
    %v2199 = vmul.f32 %v2189, %v2198
    %v2200 = vmul.f32 %v2190, %v2198
    %s2201 = sld [smem:[#allocation2 + $0x104]]
    %v2202 = vstv %s2201
    %v2203 = vmul.f32 %v2191, %v2202
    %v2204 = vmul.f32 %v2192, %v2202
    %v2205 = vadd.f32 %v2199, %v2203
    %v2206 = vadd.f32 %v2200, %v2204
    %s2207 = sld [smem:[#allocation2 + $0x108]]
    %v2208 = vstv %s2207
    %v2209 = vmul.f32 %v2193, %v2208
    %v2210 = vmul.f32 %v2194, %v2208
    %v2211 = vadd.f32 %v2205, %v2209
    %v2212 = vadd.f32 %v2206, %v2210
    %s2213 = sld [smem:[#allocation2 + $0x10c]]
    %v2214 = vstv %s2213
    %v2215 = vmul.f32 %v2195, %v2214
    %v2216 = vmul.f32 %v2196, %v2214
    %v2217 = vadd.f32 %v2211, %v2215
    %v2218 = vadd.f32 %v2212, %v2216
    %s2219 = sld [smem:[#allocation2 + $0x101]]
    %v2220 = vstv %s2219
    %v2221 = vmul.f32 %v2189, %v2220
    %v2222 = vmul.f32 %v2190, %v2220
    %s2223 = sld [smem:[#allocation2 + $0x105]]
    %v2224 = vstv %s2223
    %v2225 = vmul.f32 %v2191, %v2224
    %v2226 = vmul.f32 %v2192, %v2224
    %v2227 = vadd.f32 %v2221, %v2225
    %v2228 = vadd.f32 %v2222, %v2226
    %s2229 = sld [smem:[#allocation2 + $0x109]]
    %v2230 = vstv %s2229
    %v2231 = vmul.f32 %v2193, %v2230
    %v2232 = vmul.f32 %v2194, %v2230
    %v2233 = vadd.f32 %v2227, %v2231
    %v2234 = vadd.f32 %v2228, %v2232
    %s2235 = sld [smem:[#allocation2 + $0x10d]]
    %v2236 = vstv %s2235
    %v2237 = vmul.f32 %v2195, %v2236
    %v2238 = vmul.f32 %v2196, %v2236
    %v2239 = vadd.f32 %v2233, %v2237
    %v2240 = vadd.f32 %v2234, %v2238
    %s2241 = sld [smem:[#allocation2 + $0x102]]
    %v2242 = vstv %s2241
    %v2243 = vmul.f32 %v2189, %v2242
    %v2244 = vmul.f32 %v2190, %v2242
    %s2245 = sld [smem:[#allocation2 + $0x106]]
    %v2246 = vstv %s2245
    %v2247 = vmul.f32 %v2191, %v2246
    %v2248 = vmul.f32 %v2192, %v2246
    %v2249 = vadd.f32 %v2243, %v2247
    %v2250 = vadd.f32 %v2244, %v2248
    %s2251 = sld [smem:[#allocation2 + $0x10a]]
    %v2252 = vstv %s2251
    %v2253 = vmul.f32 %v2193, %v2252
    %v2254 = vmul.f32 %v2194, %v2252
    %v2255 = vadd.f32 %v2249, %v2253
    %v2256 = vadd.f32 %v2250, %v2254
    %s2257 = sld [smem:[#allocation2 + $0x10e]]
    %v2258 = vstv %s2257
    %v2259 = vmul.f32 %v2195, %v2258
    %v2260 = vmul.f32 %v2196, %v2258
    %v2261 = vadd.f32 %v2255, %v2259
    %v2262 = vadd.f32 %v2256, %v2260
    %s2263 = sld [smem:[#allocation2 + $0x103]]
    %v2264 = vstv %s2263
    %v2265 = vmul.f32 %v2189, %v2264
    %v2266 = vmul.f32 %v2190, %v2264
    %s2267 = sld [smem:[#allocation2 + $0x107]]
    %v2268 = vstv %s2267
    %v2269 = vmul.f32 %v2191, %v2268
    %v2270 = vmul.f32 %v2192, %v2268
    %v2271 = vadd.f32 %v2265, %v2269
    %v2272 = vadd.f32 %v2266, %v2270
    %s2273 = sld [smem:[#allocation2 + $0x10b]]
    %v2274 = vstv %s2273
    %v2275 = vmul.f32 %v2193, %v2274
    %v2276 = vmul.f32 %v2194, %v2274
    %v2277 = vadd.f32 %v2271, %v2275
    %v2278 = vadd.f32 %v2272, %v2276
    %s2279 = sld [smem:[#allocation2 + $0x10f]]
    %v2280 = vstv %s2279
    %v2281 = vmul.f32 %v2195, %v2280
    %v2282 = vmul.f32 %v2196, %v2280
    %v2283 = vadd.f32 %v2277, %v2281
    %v2284 = vadd.f32 %v2278, %v2282
    %v2285 = vadd.f32 %v2217, %v2239
    %v2286 = vadd.f32 %v2218, %v2240
    %v2287 = vadd.f32 %v2285, %v2261
    %v2288 = vadd.f32 %v2286, %v2262
    %v2289 = vadd.f32 %v2287, %v2283
    %v2290 = vadd.f32 %v2288, %v2284
    %v2291 = vmul.f32 %v2289, 0.25
    %v2292 = vmul.f32 %v2290, 0.25
    %v2293 = vsub.f32 %v2217, %v2291
    %v2294 = vsub.f32 %v2218, %v2292
    %v2295 = vmul.f32 %v2293, %v2293
    %v2296 = vmul.f32 %v2294, %v2294
    %v2297 = vsub.f32 %v2239, %v2291
    %v2298 = vsub.f32 %v2240, %v2292
    %v2299 = vmul.f32 %v2297, %v2297
    %v2300 = vmul.f32 %v2298, %v2298
    %v2301 = vadd.f32 %v2295, %v2299
    %v2302 = vadd.f32 %v2296, %v2300
    %v2303 = vsub.f32 %v2261, %v2291
    %v2304 = vsub.f32 %v2262, %v2292
    %v2305 = vmul.f32 %v2303, %v2303
    %v2306 = vmul.f32 %v2304, %v2304
    %v2307 = vadd.f32 %v2301, %v2305
    %v2308 = vadd.f32 %v2302, %v2306
    %v2309 = vsub.f32 %v2283, %v2291
    %v2310 = vsub.f32 %v2284, %v2292
    %v2311 = vmul.f32 %v2309, %v2309
    %v2312 = vmul.f32 %v2310, %v2310
    %v2313 = vadd.f32 %v2307, %v2311
    %v2314 = vadd.f32 %v2308, %v2312
    %v2315 = vmul.f32 %v2313, 0.25
    %v2316 = vmul.f32 %v2314, 0.25
    %v2317 = vadd.f32 %v2315, 1e-05
    %v2318 = vadd.f32 %v2316, 1e-05
    %v2319 = vrsqrt.pop %v2317
    %v2320 = vmul.f32 %v2319, %v2317
    %v2321 = vmul.f32 %v2320, %v2319
    %v2322 = vmul.f32 0.5, %v2321
    %v2323 = vsub.f32 1.5, %v2322
    %v2324 = vmul.f32 %v2319, %v2323
    %vm2325 = vweird.f32 %v2317
    %vm2326 = vweird.f32 %v2319
    %vm2327 = vmor %vm2325, %vm2326
    %v2328 = vsel %vm2327, %v2319, %v2324
    %v2329 = vrsqrt.pop %v2318
    %v2330 = vmul.f32 %v2329, %v2318
    %v2331 = vmul.f32 %v2330, %v2329
    %v2332 = vmul.f32 0.5, %v2331
    %v2333 = vsub.f32 1.5, %v2332
    %v2334 = vmul.f32 %v2329, %v2333
    %vm2335 = vweird.f32 %v2318
    %vm2336 = vweird.f32 %v2329
    %vm2337 = vmor %vm2335, %vm2336
    %v2338 = vsel %vm2337, %v2329, %v2334
    %v2339 = vmul.f32 %v2056, 16.0
    %v2340 = vmul.f32 %v2293, %v2328
    %v2341 = vmul.f32 %v2294, %v2338
    %s2342 = sld [smem:[#allocation5 + $0x100]]
    %v2343 = vstv %s2342
    %v2344 = vmul.f32 %v2340, %v2343
    %v2345 = vmul.f32 %v2341, %v2343
    %s2346 = sld [smem:[#allocation7 + $0x100]]
    %v2347 = vstv %s2346
    %v2348 = vadd.f32 %v2344, %v2347
    %v2349 = vadd.f32 %v2345, %v2347
    %v2350 = vmul.f32 %v2348, %v130
    %v2351 = vmul.f32 %v2349, %v130
    %v2352 = vsel %vm181, %v2350, 0.0
    %v2353 = vsel %vm181, %v2351, 0.0
    %v2354 = vadd.f32 %v2352, %v2353
    %2355 = vadd.xlane.f32.xlu0 %v2354
    %v2356 = vpop.xlane.xlu0 %2355
    %v2357 = vrot.slane %v2356, 4
    %v2358 = vadd.f32 %v2356, %v2357
    %v2359 = vrot.slane %v2358, 2
    %v2360 = vadd.f32 %v2358, %v2359
    %v2361 = vrot.slane %v2360, 1
    %v2362 = vadd.f32 %v2360, %v2361
    %s2363 = vtos %v2362
    %v2364 = vstv %s2363
    %v2365 = vmul.f32 %v2364, %v2054
    %v2366 = vadd.f32 %v2339, %v2365
    %v2367 = vmul.f32 %v2297, %v2328
    %v2368 = vmul.f32 %v2298, %v2338
    %s2369 = sld [smem:[#allocation5 + $0x101]]
    %v2370 = vstv %s2369
    %v2371 = vmul.f32 %v2367, %v2370
    %v2372 = vmul.f32 %v2368, %v2370
    %s2373 = sld [smem:[#allocation7 + $0x101]]
    %v2374 = vstv %s2373
    %v2375 = vadd.f32 %v2371, %v2374
    %v2376 = vadd.f32 %v2372, %v2374
    %v2377 = vmul.f32 %v2375, %v130
    %v2378 = vmul.f32 %v2376, %v130
    %v2379 = vsel %vm181, %v2377, 0.0
    %v2380 = vsel %vm181, %v2378, 0.0
    %v2381 = vadd.f32 %v2379, %v2380
    %2382 = vadd.xlane.f32.xlu0 %v2381
    %v2383 = vpop.xlane.xlu0 %2382
    %v2384 = vrot.slane %v2383, 4
    %v2385 = vadd.f32 %v2383, %v2384
    %v2386 = vrot.slane %v2385, 2
    %v2387 = vadd.f32 %v2385, %v2386
    %v2388 = vrot.slane %v2387, 1
    %v2389 = vadd.f32 %v2387, %v2388
    %s2390 = vtos %v2389
    %v2391 = vstv %s2390
    %v2392 = vmul.f32 %v2391, %v2054
    %2394 = vst [vmem:[#allocation1] sm:$0xff] %v2392
    %s2395 = scalar_lea.vmem [#allocation1], 1
    %v2396 = vld [vmem:[%s2395] ss:$9 sm:$0xff]
    %v2398 = vadd.f32 %v2366, %v2396
    %v2399 = vmul.f32 %v2303, %v2328
    %v2400 = vmul.f32 %v2304, %v2338
    %s2401 = sld [smem:[#allocation5 + $0x102]]
    %v2402 = vstv %s2401
    %v2403 = vmul.f32 %v2399, %v2402
    %v2404 = vmul.f32 %v2400, %v2402
    %s2405 = sld [smem:[#allocation7 + $0x102]]
    %v2406 = vstv %s2405
    %v2407 = vadd.f32 %v2403, %v2406
    %v2408 = vadd.f32 %v2404, %v2406
    %v2409 = vmul.f32 %v2407, %v130
    %v2410 = vmul.f32 %v2408, %v130
    %v2411 = vsel %vm181, %v2409, 0.0
    %v2412 = vsel %vm181, %v2410, 0.0
    %v2413 = vadd.f32 %v2411, %v2412
    %2414 = vadd.xlane.f32.xlu0 %v2413
    %v2415 = vpop.xlane.xlu0 %2414
    %v2416 = vrot.slane %v2415, 4
    %v2417 = vadd.f32 %v2415, %v2416
    %v2418 = vrot.slane %v2417, 2
    %v2419 = vadd.f32 %v2417, %v2418
    %v2420 = vrot.slane %v2419, 1
    %v2421 = vadd.f32 %v2419, %v2420
    %s2422 = vtos %v2421
    %v2423 = vstv %s2422
    %v2424 = vmul.f32 %v2423, %v2054
    %2426 = vst [vmem:[#allocation1] sm:$0xff] %v2424
    %s2427 = scalar_lea.vmem [#allocation1], 2
    %v2428 = vld [vmem:[%s2427] ss:$9 sm:$0xff]
    %v2430 = vadd.f32 %v2398, %v2428
    %v2431 = vmul.f32 %v2309, %v2328
    %v2432 = vmul.f32 %v2310, %v2338
    %s2433 = sld [smem:[#allocation5 + $0x103]]
    %v2434 = vstv %s2433
    %v2435 = vmul.f32 %v2431, %v2434
    %v2436 = vmul.f32 %v2432, %v2434
    %s2437 = sld [smem:[#allocation7 + $0x103]]
    %v2438 = vstv %s2437
    %v2439 = vadd.f32 %v2435, %v2438
    %v2440 = vadd.f32 %v2436, %v2438
    %v2441 = vmul.f32 %v2439, %v130
    %v2442 = vmul.f32 %v2440, %v130
    %v2443 = vsel %vm181, %v2441, 0.0
    %v2444 = vsel %vm181, %v2442, 0.0
    %v2445 = vadd.f32 %v2443, %v2444
    %2446 = vadd.xlane.f32.xlu0 %v2445
    %v2447 = vpop.xlane.xlu0 %2446
    %v2448 = vrot.slane %v2447, 4
    %v2449 = vadd.f32 %v2447, %v2448
    %v2450 = vrot.slane %v2449, 2
    %v2451 = vadd.f32 %v2449, %v2450
    %v2452 = vrot.slane %v2451, 1
    %v2453 = vadd.f32 %v2451, %v2452
    %s2454 = vtos %v2453
    %v2455 = vstv %s2454
    %v2456 = vmul.f32 %v2455, %v2054
    %2458 = vst [vmem:[#allocation1] sm:$0xff] %v2456
    %s2459 = scalar_lea.vmem [#allocation1], 3
    %v2460 = vld [vmem:[%s2459] ss:$9 sm:$0xff]
    %v2462 = vadd.f32 %v2430, %v2460
    %v2463 = vsel %vm536, %v2462, 0.0
    %2464 = vadd.xlane.f32.xlu0 %v2463
    %v2465 = vpop.xlane.xlu0 %2464
    %v2466 = vmul.f32 %v2465, %v546
    %v2467 = vsub.f32 %v2462, %v2466
    %v2468 = vmul.f32 %v2467, %v2467
    %v2469 = vsel %vm536, %v2468, 0.0
    %2470 = vadd.xlane.f32.xlu0 %v2469
    %v2471 = vpop.xlane.xlu0 %2470
    %v2472 = vmul.f32 %v2471, %v546
    %v2473 = vadd.f32 %v2472, 1e-05
    %v2474 = vrsqrt.pop %v2473
    %v2475 = vmul.f32 %v2474, %v2473
    %v2476 = vmul.f32 %v2475, %v2474
    %v2477 = vmul.f32 0.5, %v2476
    %v2478 = vsub.f32 1.5, %v2477
    %v2479 = vmul.f32 %v2474, %v2478
    %vm2480 = vweird.f32 %v2473
    %vm2481 = vweird.f32 %v2474
    %vm2482 = vmor %vm2480, %vm2481
    %v2483 = vsel %vm2482, %v2474, %v2479
    %v2484 = vmul.f32 %v2467, %v2483
    %v2485 = vmul.f32 %v2484, %v2058
    %v2486 = vadd.f32 %v2485, %v2060
    %v2487 = vadd.f32 %v105, %v2486
    %v2488 = vmul.f32 %v578, %v2064
    %v2489 = vmul.f32 %v579, %v2069
    %v2490 = vmul.f32 %v578, %v2074
    %v2491 = vmul.f32 %v579, %v2079
    %v2492 = vmul.f32 %v578, %v2084
    %v2493 = vmul.f32 %v579, %v2089
    %v2494 = vmul.f32 %v578, %v2094
    %v2495 = vmul.f32 %v579, %v2099
    %v2496 = vsel %vm181, %v2488, -inf
    %2497 = vmax.xlane.f32.xlu0 %v2496
    %v2498 = vpop.xlane.xlu0 %2497
    %v2499 = vsel %vm181, %v2489, -inf
    %2500 = vmax.xlane.f32.xlu0 %v2499
    %v2501 = vpop.xlane.xlu0 %2500
    %v2502 = vsel %vm181, %v2490, -inf
    %2503 = vmax.xlane.f32.xlu0 %v2502
    %v2504 = vpop.xlane.xlu0 %2503
    %v2505 = vsel %vm181, %v2491, -inf
    %2506 = vmax.xlane.f32.xlu0 %v2505
    %v2507 = vpop.xlane.xlu0 %2506
    %v2508 = vsel %vm181, %v2492, -inf
    %2509 = vmax.xlane.f32.xlu0 %v2508
    %v2510 = vpop.xlane.xlu0 %2509
    %v2511 = vsel %vm181, %v2493, -inf
    %2512 = vmax.xlane.f32.xlu0 %v2511
    %v2513 = vpop.xlane.xlu0 %2512
    %v2514 = vsel %vm181, %v2494, -inf
    %2515 = vmax.xlane.f32.xlu0 %v2514
    %v2516 = vpop.xlane.xlu0 %2515
    %v2517 = vsel %vm181, %v2495, -inf
    %2518 = vmax.xlane.f32.xlu0 %v2517
    %v2519 = vpop.xlane.xlu0 %2518
    %v2520 = vsub.f32 %v2488, %v2498
    %v2521 = vsub.f32 %v2489, %v2501
    %v2522 = vsub.f32 %v2490, %v2504
    %v2523 = vsub.f32 %v2491, %v2507
    %v2524 = vsub.f32 %v2492, %v2510
    %v2525 = vsub.f32 %v2493, %v2513
    %v2526 = vsub.f32 %v2494, %v2516
    %v2527 = vsub.f32 %v2495, %v2519
    %v2528 = vmul.f32 %v2520, 1.442695
    %v2529 = vpow.pop %v2528
    %v2530 = vmul.f32 %v2521, 1.442695
    %v2531 = vpow.pop %v2530
    %v2532 = vmul.f32 %v2522, 1.442695
    %v2533 = vpow.pop %v2532
    %v2534 = vmul.f32 %v2523, 1.442695
    %v2535 = vpow.pop %v2534
    %v2536 = vmul.f32 %v2524, 1.442695
    %v2537 = vpow.pop %v2536
    %v2538 = vmul.f32 %v2525, 1.442695
    %v2539 = vpow.pop %v2538
    %v2540 = vmul.f32 %v2526, 1.442695
    %v2541 = vpow.pop %v2540
    %v2542 = vmul.f32 %v2527, 1.442695
    %v2543 = vpow.pop %v2542
    %v2544 = vsel %vm181, %v2529, 0.0
    %2545 = vadd.xlane.f32.xlu0 %v2544
    %v2546 = vpop.xlane.xlu0 %2545
    %v2547 = vsel %vm181, %v2531, 0.0
    %2548 = vadd.xlane.f32.xlu0 %v2547
    %v2549 = vpop.xlane.xlu0 %2548
    %v2550 = vsel %vm181, %v2533, 0.0
    %2551 = vadd.xlane.f32.xlu0 %v2550
    %v2552 = vpop.xlane.xlu0 %2551
    %v2553 = vsel %vm181, %v2535, 0.0
    %2554 = vadd.xlane.f32.xlu0 %v2553
    %v2555 = vpop.xlane.xlu0 %2554
    %v2556 = vsel %vm181, %v2537, 0.0
    %2557 = vadd.xlane.f32.xlu0 %v2556
    %v2558 = vpop.xlane.xlu0 %2557
    %v2559 = vsel %vm181, %v2539, 0.0
    %2560 = vadd.xlane.f32.xlu0 %v2559
    %v2561 = vpop.xlane.xlu0 %2560
    %v2562 = vsel %vm181, %v2541, 0.0
    %2563 = vadd.xlane.f32.xlu0 %v2562
    %v2564 = vpop.xlane.xlu0 %2563
    %v2565 = vsel %vm181, %v2543, 0.0
    %2566 = vadd.xlane.f32.xlu0 %v2565
    %v2567 = vpop.xlane.xlu0 %2566
    %v2568 = vrcp.pop %v2546
    %v2569 = vrcp.pop %v2549
    %v2570 = vrcp.pop %v2552
    %v2571 = vrcp.pop %v2555
    %v2572 = vrcp.pop %v2558
    %v2573 = vrcp.pop %v2561
    %v2574 = vrcp.pop %v2564
    %v2575 = vrcp.pop %v2567
    %v2576 = vmul.f32 %v2529, %v2568
    %v2577 = vmul.f32 %v2531, %v2569
    %v2578 = vmul.f32 %v2533, %v2570
    %v2579 = vmul.f32 %v2535, %v2571
    %v2580 = vmul.f32 %v2537, %v2572
    %v2581 = vmul.f32 %v2539, %v2573
    %v2582 = vmul.f32 %v2541, %v2574
    %v2583 = vmul.f32 %v2543, %v2575
    %v2584 = vmul.f32 %v2576, %v2198
    %v2585 = vmul.f32 %v2577, %v2198
    %v2586 = vmul.f32 %v2578, %v2202
    %v2587 = vmul.f32 %v2579, %v2202
    %v2588 = vadd.f32 %v2584, %v2586
    %v2589 = vadd.f32 %v2585, %v2587
    %v2590 = vmul.f32 %v2580, %v2208
    %v2591 = vmul.f32 %v2581, %v2208
    %v2592 = vadd.f32 %v2588, %v2590
    %v2593 = vadd.f32 %v2589, %v2591
    %v2594 = vmul.f32 %v2582, %v2214
    %v2595 = vmul.f32 %v2583, %v2214
    %v2596 = vadd.f32 %v2592, %v2594
    %v2597 = vadd.f32 %v2593, %v2595
    %v2598 = vmul.f32 %v2576, %v2220
    %v2599 = vmul.f32 %v2577, %v2220
    %v2600 = vmul.f32 %v2578, %v2224
    %v2601 = vmul.f32 %v2579, %v2224
    %v2602 = vadd.f32 %v2598, %v2600
    %v2603 = vadd.f32 %v2599, %v2601
    %v2604 = vmul.f32 %v2580, %v2230
    %v2605 = vmul.f32 %v2581, %v2230
    %v2606 = vadd.f32 %v2602, %v2604
    %v2607 = vadd.f32 %v2603, %v2605
    %v2608 = vmul.f32 %v2582, %v2236
    %v2609 = vmul.f32 %v2583, %v2236
    %v2610 = vadd.f32 %v2606, %v2608
    %v2611 = vadd.f32 %v2607, %v2609
    %v2612 = vmul.f32 %v2576, %v2242
    %v2613 = vmul.f32 %v2577, %v2242
    %v2614 = vmul.f32 %v2578, %v2246
    %v2615 = vmul.f32 %v2579, %v2246
    %v2616 = vadd.f32 %v2612, %v2614
    %v2617 = vadd.f32 %v2613, %v2615
    %v2618 = vmul.f32 %v2580, %v2252
    %v2619 = vmul.f32 %v2581, %v2252
    %v2620 = vadd.f32 %v2616, %v2618
    %v2621 = vadd.f32 %v2617, %v2619
    %v2622 = vmul.f32 %v2582, %v2258
    %v2623 = vmul.f32 %v2583, %v2258
    %v2624 = vadd.f32 %v2620, %v2622
    %v2625 = vadd.f32 %v2621, %v2623
    %v2626 = vmul.f32 %v2576, %v2264
    %v2627 = vmul.f32 %v2577, %v2264
    %v2628 = vmul.f32 %v2578, %v2268
    %v2629 = vmul.f32 %v2579, %v2268
    %v2630 = vadd.f32 %v2626, %v2628
    %v2631 = vadd.f32 %v2627, %v2629
    %v2632 = vmul.f32 %v2580, %v2274
    %v2633 = vmul.f32 %v2581, %v2274
    %v2634 = vadd.f32 %v2630, %v2632
    %v2635 = vadd.f32 %v2631, %v2633
    %v2636 = vmul.f32 %v2582, %v2280
    %v2637 = vmul.f32 %v2583, %v2280
    %v2638 = vadd.f32 %v2634, %v2636
    %v2639 = vadd.f32 %v2635, %v2637
    %v2640 = vadd.f32 %v2596, %v2610
    %v2641 = vadd.f32 %v2597, %v2611
    %v2642 = vadd.f32 %v2640, %v2624
    %v2643 = vadd.f32 %v2641, %v2625
    %v2644 = vadd.f32 %v2642, %v2638
    %v2645 = vadd.f32 %v2643, %v2639
    %v2646 = vmul.f32 %v2644, 0.25
    %v2647 = vmul.f32 %v2645, 0.25
    %v2648 = vsub.f32 %v2596, %v2646
    %v2649 = vsub.f32 %v2597, %v2647
    %v2650 = vmul.f32 %v2648, %v2648
    %v2651 = vmul.f32 %v2649, %v2649
    %v2652 = vsub.f32 %v2610, %v2646
    %v2653 = vsub.f32 %v2611, %v2647
    %v2654 = vmul.f32 %v2652, %v2652
    %v2655 = vmul.f32 %v2653, %v2653
    %v2656 = vadd.f32 %v2650, %v2654
    %v2657 = vadd.f32 %v2651, %v2655
    %v2658 = vsub.f32 %v2624, %v2646
    %v2659 = vsub.f32 %v2625, %v2647
    %v2660 = vmul.f32 %v2658, %v2658
    %v2661 = vmul.f32 %v2659, %v2659
    %v2662 = vadd.f32 %v2656, %v2660
    %v2663 = vadd.f32 %v2657, %v2661
    %v2664 = vsub.f32 %v2638, %v2646
    %v2665 = vsub.f32 %v2639, %v2647
    %v2666 = vmul.f32 %v2664, %v2664
    %v2667 = vmul.f32 %v2665, %v2665
    %v2668 = vadd.f32 %v2662, %v2666
    %v2669 = vadd.f32 %v2663, %v2667
    %v2670 = vmul.f32 %v2668, 0.25
    %v2671 = vmul.f32 %v2669, 0.25
    %v2672 = vadd.f32 %v2670, 1e-05
    %v2673 = vadd.f32 %v2671, 1e-05
    %v2674 = vrsqrt.pop %v2672
    %v2675 = vmul.f32 %v2674, %v2672
    %v2676 = vmul.f32 %v2675, %v2674
    %v2677 = vmul.f32 0.5, %v2676
    %v2678 = vsub.f32 1.5, %v2677
    %v2679 = vmul.f32 %v2674, %v2678
    %vm2680 = vweird.f32 %v2672
    %vm2681 = vweird.f32 %v2674
    %vm2682 = vmor %vm2680, %vm2681
    %v2683 = vsel %vm2682, %v2674, %v2679
    %v2684 = vrsqrt.pop %v2673
    %v2685 = vmul.f32 %v2684, %v2673
    %v2686 = vmul.f32 %v2685, %v2684
    %v2687 = vmul.f32 0.5, %v2686
    %v2688 = vsub.f32 1.5, %v2687
    %v2689 = vmul.f32 %v2684, %v2688
    %vm2690 = vweird.f32 %v2673
    %vm2691 = vweird.f32 %v2684
    %vm2692 = vmor %vm2690, %vm2691
    %v2693 = vsel %vm2692, %v2684, %v2689
    %v2694 = vmul.f32 %v2648, %v2683
    %v2695 = vmul.f32 %v2649, %v2693
    %v2696 = vmul.f32 %v2694, %v2343
    %v2697 = vmul.f32 %v2695, %v2343
    %v2698 = vadd.f32 %v2696, %v2347
    %v2699 = vadd.f32 %v2697, %v2347
    %v2700 = vmul.f32 %v2698, %v577
    %v2701 = vmul.f32 %v2699, %v577
    %v2702 = vsel %vm181, %v2700, 0.0
    %v2703 = vsel %vm181, %v2701, 0.0
    %v2704 = vadd.f32 %v2702, %v2703
    %2705 = vadd.xlane.f32.xlu0 %v2704
    %v2706 = vpop.xlane.xlu0 %2705
    %v2707 = vrot.slane %v2706, 4
    %v2708 = vadd.f32 %v2706, %v2707
    %v2709 = vrot.slane %v2708, 2
    %v2710 = vadd.f32 %v2708, %v2709
    %v2711 = vrot.slane %v2710, 1
    %v2712 = vadd.f32 %v2710, %v2711
    %s2713 = vtos %v2712
    %v2714 = vstv %s2713
    %v2715 = vmul.f32 %v2714, %v2054
    %v2716 = vadd.f32 %v2339, %v2715
    %v2717 = vmul.f32 %v2652, %v2683
    %v2718 = vmul.f32 %v2653, %v2693
    %v2719 = vmul.f32 %v2717, %v2370
    %v2720 = vmul.f32 %v2718, %v2370
    %v2721 = vadd.f32 %v2719, %v2374
    %v2722 = vadd.f32 %v2720, %v2374
    %v2723 = vmul.f32 %v2721, %v577
    %v2724 = vmul.f32 %v2722, %v577
    %v2725 = vsel %vm181, %v2723, 0.0
    %v2726 = vsel %vm181, %v2724, 0.0
    %v2727 = vadd.f32 %v2725, %v2726
    %2728 = vadd.xlane.f32.xlu0 %v2727
    %v2729 = vpop.xlane.xlu0 %2728
    %v2730 = vrot.slane %v2729, 4
    %v2731 = vadd.f32 %v2729, %v2730
    %v2732 = vrot.slane %v2731, 2
    %v2733 = vadd.f32 %v2731, %v2732
    %v2734 = vrot.slane %v2733, 1
    %v2735 = vadd.f32 %v2733, %v2734
    %s2736 = vtos %v2735
    %v2737 = vstv %s2736
    %v2738 = vmul.f32 %v2737, %v2054
    %2740 = vst [vmem:[#allocation1] sm:$0xff] %v2738
    %s2741 = scalar_lea.vmem [#allocation1], 1
    %v2742 = vld [vmem:[%s2741] ss:$9 sm:$0xff]
    %v2744 = vadd.f32 %v2716, %v2742
    %v2745 = vmul.f32 %v2658, %v2683
    %v2746 = vmul.f32 %v2659, %v2693
    %v2747 = vmul.f32 %v2745, %v2402
    %v2748 = vmul.f32 %v2746, %v2402
    %v2749 = vadd.f32 %v2747, %v2406
    %v2750 = vadd.f32 %v2748, %v2406
    %v2751 = vmul.f32 %v2749, %v577
    %v2752 = vmul.f32 %v2750, %v577
    %v2753 = vsel %vm181, %v2751, 0.0
    %v2754 = vsel %vm181, %v2752, 0.0
    %v2755 = vadd.f32 %v2753, %v2754
    %2756 = vadd.xlane.f32.xlu0 %v2755
    %v2757 = vpop.xlane.xlu0 %2756
    %v2758 = vrot.slane %v2757, 4
    %v2759 = vadd.f32 %v2757, %v2758
    %v2760 = vrot.slane %v2759, 2
    %v2761 = vadd.f32 %v2759, %v2760
    %v2762 = vrot.slane %v2761, 1
    %v2763 = vadd.f32 %v2761, %v2762
    %s2764 = vtos %v2763
    %v2765 = vstv %s2764
    %v2766 = vmul.f32 %v2765, %v2054
    %2768 = vst [vmem:[#allocation1] sm:$0xff] %v2766
    %s2769 = scalar_lea.vmem [#allocation1], 2
    %v2770 = vld [vmem:[%s2769] ss:$9 sm:$0xff]
    %v2772 = vadd.f32 %v2744, %v2770
    %v2773 = vmul.f32 %v2664, %v2683
    %v2774 = vmul.f32 %v2665, %v2693
    %v2775 = vmul.f32 %v2773, %v2434
    %v2776 = vmul.f32 %v2774, %v2434
    %v2777 = vadd.f32 %v2775, %v2438
    %v2778 = vadd.f32 %v2776, %v2438
    %v2779 = vmul.f32 %v2777, %v577
    %v2780 = vmul.f32 %v2778, %v577
    %v2781 = vsel %vm181, %v2779, 0.0
    %v2782 = vsel %vm181, %v2780, 0.0
    %v2783 = vadd.f32 %v2781, %v2782
    %2784 = vadd.xlane.f32.xlu0 %v2783
    %v2785 = vpop.xlane.xlu0 %2784
    %v2786 = vrot.slane %v2785, 4
    %v2787 = vadd.f32 %v2785, %v2786
    %v2788 = vrot.slane %v2787, 2
    %v2789 = vadd.f32 %v2787, %v2788
    %v2790 = vrot.slane %v2789, 1
    %v2791 = vadd.f32 %v2789, %v2790
    %s2792 = vtos %v2791
    %v2793 = vstv %s2792
    %v2794 = vmul.f32 %v2793, %v2054
    %2796 = vst [vmem:[#allocation1] sm:$0xff] %v2794
    %s2797 = scalar_lea.vmem [#allocation1], 3
    %v2798 = vld [vmem:[%s2797] ss:$9 sm:$0xff]
    %v2800 = vadd.f32 %v2772, %v2798
    %v2801 = vsel %vm536, %v2800, 0.0
    %2802 = vadd.xlane.f32.xlu0 %v2801
    %v2803 = vpop.xlane.xlu0 %2802
    %v2804 = vmul.f32 %v2803, %v546
    %v2805 = vsub.f32 %v2800, %v2804
    %v2806 = vmul.f32 %v2805, %v2805
    %v2807 = vsel %vm536, %v2806, 0.0
    %2808 = vadd.xlane.f32.xlu0 %v2807
    %v2809 = vpop.xlane.xlu0 %2808
    %v2810 = vmul.f32 %v2809, %v546
    %v2811 = vadd.f32 %v2810, 1e-05
    %v2812 = vrsqrt.pop %v2811
    %v2813 = vmul.f32 %v2812, %v2811
    %v2814 = vmul.f32 %v2813, %v2812
    %v2815 = vmul.f32 0.5, %v2814
    %v2816 = vsub.f32 1.5, %v2815
    %v2817 = vmul.f32 %v2812, %v2816
    %vm2818 = vweird.f32 %v2811
    %vm2819 = vweird.f32 %v2812
    %vm2820 = vmor %vm2818, %vm2819
    %v2821 = vsel %vm2820, %v2812, %v2817
    %v2822 = vmul.f32 %v2805, %v2821
    %v2823 = vmul.f32 %v2822, %v2058
    %v2824 = vadd.f32 %v2823, %v2060
    %v2826 = vperm.slane %v2824, 0
    %v2828 = vadd.f32 %v105, %v2826
    %v2829 = vsel %vm921, %v2487, %v2828
    %s2830 = scalar_lea.vmem %s10, 32
    %v2831 = vld [vmem:[%s2830] sm:$0xff]
    %v2832 = vld [vmem:[%s2830 + $0x8] sm:$0xff]
    %s2833 = scalar_lea.vmem %s11, 2
    %v2834 = vld [vmem:[%s2833] sm:$0x1]
    %v2836 = vperm.slane %v2834, 0
    %v2839 = vsel %vm181, %v2829, 0
    %2841 = vmatpush.msra.mxu0 0.0
    %2842 = vmatpush.msra.mxu0 0.0
    %2843 = vmatpush.msra.mxu0 0.0
    %2844 = vmatpush.msra.mxu0 0.0
    %2845 = vmatpush.msra.mxu0 0.0
    %2846 = vmatpush.msra.mxu0 0.0
    %2847 = vmatpush.msra.mxu0 0.0
    %2848 = vmatpush.msra.mxu0 0.0
    %2849 = vmatpush.msra.mxu0 0.0
    %2850 = vmatpush.msra.mxu0 0.0
    %2851 = vmatpush.msra.mxu0 0.0
    %2852 = vmatpush.msra.mxu0 0.0
    %2853 = vmatpush.msra.mxu0 0.0
    %2854 = vmatpush.msra.mxu0 0.0
    %2855 = vmatpush.msra.mxu0 %v2832
    %2856 = vmatpush.msra.mxu0 %v2831
    %2857 = vmatmul.f32.gmra.mxu0 %v2839
    %v2858 = vpop.f32.mrf.mxu0
    %v2859 = vadd.f32 %v2836, %v2858
    %2860 = vdwg.mxu0
    %v2861 = vmax.f32 %v2859, 0.0
    %s2862 = scalar_lea.vmem %s12, 2
    %v2863 = vld [vmem:[%s2862] sm:$0x1]
    %s2864 = scalar_lea.vmem %s13, 2
    %v2865 = vld [vmem:[%s2864] sm:$0x1]
    %v2866 = vsel %vm955, %v2861, 0.0
    %2867 = vadd.xlane.f32.xlu0 %v2866
    %v2868 = vpop.xlane.xlu0 %2867
    %v2869 = vmul.f32 %v2868, %v965
    %v2870 = vsub.f32 %v2861, %v2869
    %v2871 = vmul.f32 %v2870, %v2870
    %v2872 = vsel %vm955, %v2871, 0.0
    %2873 = vadd.xlane.f32.xlu0 %v2872
    %v2874 = vpop.xlane.xlu0 %2873
    %v2875 = vmul.f32 %v2874, %v965
    %v2876 = vadd.f32 %v2875, 1e-05
    %v2877 = vrsqrt.pop %v2876
    %v2878 = vmul.f32 %v2877, %v2876
    %v2879 = vmul.f32 %v2878, %v2877
    %v2880 = vmul.f32 0.5, %v2879
    %v2881 = vsub.f32 1.5, %v2880
    %v2882 = vmul.f32 %v2877, %v2881
    %vm2883 = vweird.f32 %v2876
    %vm2884 = vweird.f32 %v2877
    %vm2885 = vmor %vm2883, %vm2884
    %v2886 = vsel %vm2885, %v2877, %v2882
    %v2887 = vmul.f32 %v2870, %v2886
    %v2889 = vperm.slane %v2863, 0
    %v2891 = vmul.f32 %v2887, %v2889
    %v2893 = vperm.slane %v2865, 0
    %v2895 = vadd.f32 %v2891, %v2893
    %s2896 = scalar_lea.vmem %s14, 64
    %v2897 = vld [vmem:[%s2896] sm:$0xff]
    %v2898 = vld [vmem:[%s2896 + $0x8] sm:$0xff]
    %v2899 = vld [vmem:[%s2896 + $0x10] sm:$0xff]
    %v2900 = vld [vmem:[%s2896 + $0x18] sm:$0xff]
    %s2901 = scalar_lea.vmem %s15, 2
    %v2902 = vld [vmem:[%s2901] sm:$0x1]
    %v2904 = vperm.slane %v2902, 0
    %v2907 = vsel %vm1001, %v2895, 0
    %2909 = vmatpush.msra.mxu0 0.0
    %2910 = vmatpush.msra.mxu0 0.0
    %2911 = vmatpush.msra.mxu0 0.0
    %2912 = vmatpush.msra.mxu0 0.0
    %2913 = vmatpush.msra.mxu0 0.0
    %2914 = vmatpush.msra.mxu0 0.0
    %2915 = vmatpush.msra.mxu0 0.0
    %2916 = vmatpush.msra.mxu0 0.0
    %2917 = vmatpush.msra.mxu0 0.0
    %2918 = vmatpush.msra.mxu0 0.0
    %2919 = vmatpush.msra.mxu0 0.0
    %2920 = vmatpush.msra.mxu0 0.0
    %2921 = vmatpush.msra.mxu0 %v2900
    %2922 = vmatpush.msra.mxu0 %v2899
    %2923 = vmatpush.msra.mxu0 %v2898
    %2924 = vmatpush.msra.mxu0 %v2897
    %2925 = vmatmul.f32.gmra.mxu0 %v2907
    %v2926 = vpop.f32.mrf.mxu0
    %v2927 = vadd.f32 %v2904, %v2926
    %2928 = vdwg.mxu0
    %v2929 = vmax.f32 %v2927, 0.0
    %s2930 = scalar_lea.vmem %s16, 2
    %v2931 = vld [vmem:[%s2930] sm:$0x1]
    %s2932 = scalar_lea.vmem %s17, 2
    %v2933 = vld [vmem:[%s2932] sm:$0x1]
    %v2934 = vsel %vm955, %v2929, 0.0
    %2935 = vadd.xlane.f32.xlu0 %v2934
    %v2936 = vpop.xlane.xlu0 %2935
    %v2937 = vmul.f32 %v2936, %v965
    %v2938 = vsub.f32 %v2929, %v2937
    %v2939 = vmul.f32 %v2938, %v2938
    %v2940 = vsel %vm955, %v2939, 0.0
    %2941 = vadd.xlane.f32.xlu0 %v2940
    %v2942 = vpop.xlane.xlu0 %2941
    %v2943 = vmul.f32 %v2942, %v965
    %v2944 = vadd.f32 %v2943, 1e-05
    %v2945 = vrsqrt.pop %v2944
    %v2946 = vmul.f32 %v2945, %v2944
    %v2947 = vmul.f32 %v2946, %v2945
    %v2948 = vmul.f32 0.5, %v2947
    %v2949 = vsub.f32 1.5, %v2948
    %v2950 = vmul.f32 %v2945, %v2949
    %vm2951 = vweird.f32 %v2944
    %vm2952 = vweird.f32 %v2945
    %vm2953 = vmor %vm2951, %vm2952
    %v2954 = vsel %vm2953, %v2945, %v2950
    %v2955 = vmul.f32 %v2938, %v2954
    %v2957 = vperm.slane %v2931, 0
    %v2959 = vmul.f32 %v2955, %v2957
    %v2961 = vperm.slane %v2933, 0
    %v2963 = vadd.f32 %v2959, %v2961
    %v2964 = vadd.f32 %v2895, %v2963
    %s2965 = scalar_lea.vmem %s18, 64
    %v2966 = vld [vmem:[%s2965] sm:$0xff]
    %v2967 = vld [vmem:[%s2965 + $0x8] sm:$0xff]
    %v2968 = vld [vmem:[%s2965 + $0x10] sm:$0xff]
    %v2969 = vld [vmem:[%s2965 + $0x18] sm:$0xff]
    %s2970 = scalar_lea.vmem %s19, 2
    %v2971 = vld [vmem:[%s2970] sm:$0x1]
    %v2973 = vperm.slane %v2971, 0
    %v2976 = vsel %vm1001, %v2964, 0
    %2978 = vmatpush.msra.mxu0 0.0
    %2979 = vmatpush.msra.mxu0 0.0
    %2980 = vmatpush.msra.mxu0 0.0
    %2981 = vmatpush.msra.mxu0 0.0
    %2982 = vmatpush.msra.mxu0 0.0
    %2983 = vmatpush.msra.mxu0 0.0
    %2984 = vmatpush.msra.mxu0 0.0
    %2985 = vmatpush.msra.mxu0 0.0
    %2986 = vmatpush.msra.mxu0 0.0
    %2987 = vmatpush.msra.mxu0 0.0
    %2988 = vmatpush.msra.mxu0 0.0
    %2989 = vmatpush.msra.mxu0 0.0
    %2990 = vmatpush.msra.mxu0 %v2969
    %2991 = vmatpush.msra.mxu0 %v2968
    %2992 = vmatpush.msra.mxu0 %v2967
    %2993 = vmatpush.msra.mxu0 %v2966
    %2994 = vmatmul.f32.gmra.mxu0 %v2976
    %v2995 = vpop.f32.mrf.mxu0
    %v2996 = vadd.f32 %v2973, %v2995
    %2997 = vdwg.mxu0
    %v2998 = vadd.f32 %v1088, %v2042
    %v2999 = vadd.f32 %v2998, %v2996
    %v3000 = vmul.f32 %v2999, 0.33333334
    %v3001 = vsub.f32 %v1088, %v3000
    %v3002 = vmul.f32 %v3001, %v3001
    %v3003 = vsub.f32 %v2042, %v3000
    %v3004 = vmul.f32 %v3003, %v3003
    %v3005 = vadd.f32 %v3002, %v3004
    %v3006 = vsub.f32 %v2996, %v3000
    %v3007 = vmul.f32 %v3006, %v3006
    %v3008 = vadd.f32 %v3005, %v3007
    %v3009 = vmul.f32 %v3008, 0.5
    %vm3010 = vcmask 58368
    %3011 = vst.msk [vmem:[#allocation8] sm:$0x3] %vm3010, %v3000
    %v3012 = vrsqrt.pop %v3009
    %v3013 = vmul.f32 %v3012, %v3009
    %v3014 = vmul.f32 %v3013, %v3012
    %v3015 = vmul.f32 0.5, %v3014
    %v3016 = vsub.f32 1.5, %v3015
    %v3017 = vmul.f32 %v3012, %v3016
    %v3018 = vmul.f32 %v3009, %v3017
    %vm3019 = vcmp.eq.f32.partialorder %v3009, inf
    %v3020 = vsel %vm3019, %v3009, %v3018
    %vm3021 = vcmp.eq.f32.partialorder %v3009, 0.0
    %v3022 = vand.u32 %v3009, 2147483648
    %v3023 = vsel %vm3021, %v3022, %v3020
    %3024 = vst.msk [vmem:[#allocation9] sm:$0x3] %vm3010, %v3023
    // Predicated region
    $region94: #{tpu_custom_call.1} parent=1 // pred_check
      _
    $region95: #{tpu_custom_call.1} parent=1 // pred_check_branch
      %3026 = sbr.rel (0) target = $region97
    $region96: #{tpu_custom_call.1} parent=1 // pred_region
      %3028 = vsyncadd [#allocation3], 0
      %s3030 = sshll.u32 [#allocation8], 4
      %s3031 = int_to_ptr.vmem [resolvable:$true] %s3030
      %s3032 = sshll.u32 %s20, 4
      %s3033 = int_to_ptr.hbm [resolvable:$true] %s3032
      %3035 = dma.vmem_to_hbm [thread:$0]  %s3031, 32, %s3033, [#allocation3]
    $region97: #{tpu_custom_call.1} parent=1 // pred_fallthru
      _
    // Predicated region
    $region98: #{tpu_custom_call.1} parent=1 // pred_check
      _
    $region99: #{tpu_custom_call.1} parent=1 // pred_check_branch
      %3037 = sbr.rel (0) target = $region101
    $region100: #{tpu_custom_call.1} parent=1 // pred_region
      %3039 = vsyncadd [#allocation10], 0
      %s3041 = sshll.u32 [#allocation9], 4
      %s3042 = int_to_ptr.vmem [resolvable:$true] %s3041
      %s3043 = sshll.u32 %s21, 4
      %s3044 = int_to_ptr.hbm [resolvable:$true] %s3043
      %3046 = dma.vmem_to_hbm [thread:$0]  %s3042, 32, %s3044, [#allocation10]
    $region101: #{tpu_custom_call.1} parent=1 // pred_fallthru
      _
    // Predicated region
    $region102: #{tpu_custom_call.1} parent=1 // pred_check
      _
    $region103: #{tpu_custom_call.1} parent=1 // pred_check_branch
      %3048 = sbr.rel (0) target = $region105
    $region104: #{tpu_custom_call.1} parent=1 // pred_region
      %3050 = dma.done [#allocation3], 32
    $region105: #{tpu_custom_call.1} parent=1 // pred_fallthru
      _
    // Predicated region
    $region106: #{tpu_custom_call.1} parent=1 // pred_check
      _
    $region107: #{tpu_custom_call.1} parent=1 // pred_check_branch
      %3052 = sbr.rel (0) target = $region109
    $region108: #{tpu_custom_call.1} parent=1 // pred_region
      %3054 = dma.done [#allocation10], 32
    $region109: #{tpu_custom_call.1} parent=1 // pred_fallthru
      _
    %3055 = vsyncpa [#allocation3], 1
    %3056 = vsyncpa [#allocation10], 1
    %3057 = vsyncpa [#allocation4], 1
    %3058 = vsyncpa [#allocation6], 1

</llo_original>
